<compile_context>
chip_gen: v5e
topology: v5e:2x2
jax: 0.10.0
libtpu: 0.0.40
codegen_flags: <defaults>
</compile_context>

<pallas_src>
import functools

import jax
import jax.numpy as jnp
from jax import lax
from jax.experimental import pallas as pl
from jax.experimental.pallas import tpu as pltpu

# ---------------- module configuration (MSCB defaults) ----------------
IN_CH = 4
OUT_CH = 6
STRIDE = 1                  # only stride=1 (skip-connection path) is implemented
KERNEL_SIZES = (1, 3, 5)
EXPANSION = 2
EX_CH = IN_CH * EXPANSION   # expanded channels
ADD = True                  # combined_channels == EX_CH
BN_EPS = 1e-5
OUT_PAD = 8                 # pad output channels 6 -> 8 for unmasked sublane stores

N, D, H, W = 2, 4, 8, 8
# TODO(synk): stride=2 path (downsampled depthwise convs, no skip connection) not implemented.


def _gcd(a, b):
    while b:
        a, b = b, a % b
    return a


def _shuffle_inv_perm(channels, groups):
    """inv_perm such that shuffled[j] = x[perm[j]]  <=>  x[c] feeds output column inv_perm[c]."""
    cpg = channels // groups
    perm = [(j % groups) * cpg + (j // groups) for j in range(channels)]
    inv = [0] * channels
    for j, pj in enumerate(perm):
        inv[pj] = j
    return inv


def _num_tensorcores():
    """2 TensorCores per chip on v7x, 1 on v5e/v6e.  Best-effort, defaults to 1."""
    try:
        kind = jax.devices()[0].device_kind.lower()
        if "v7" in kind or "7x" in kind:
            return 2
    except Exception:
        pass
    return 1


def _choose_samples_per_step(n):
    tc = _num_tensorcores()
    s = max(1, n // tc)
    while n % s:
        s -= 1
    return s


# ---------------------------------------------------------------------------
# Fused MSCB kernel (channel-major layout: channels on sublanes, spatial on lanes)
# ---------------------------------------------------------------------------
def _mscb_fused_kernel(x_ref, w1_ref, b1_ref, wp1_ref, wp3_ref, wp5_ref,
                       dwbt_ref, w2_ref, wskip_ref, b2_ref, o_ref,
                       *, d, h, w, m_total):
    x = x_ref[...]                                            # (C_in, M)

    # ---- pconv1 (BN1 scale folded into weights) + bias + ReLU6 -> (EX, M) ----
    y1 = jnp.dot(w1_ref[...], x, preferred_element_type=jnp.float32)
    y1 = jnp.clip(y1 + b1_ref[...], 0.0, 6.0)

    # ---- MSDC: shared taps across branches; masks pre-folded into weight planes ----
    wp = {1: wp1_ref, 3: wp3_ref, 5: wp5_ref}
    acc = {k: jnp.zeros_like(y1) for k in KERNEL_SIZES}

    kmax = max(KERNEL_SIZES)
    pmax = kmax // 2
    for dz in range(-pmax, pmax + 1):
        for dy in range(-pmax, pmax + 1):
            for dx in range(-pmax, pmax + 1):
                s = dz * h * w + dy * w + dx
                # tap[:, q] = y1[:, q + s]; any wrap-around / cross-sample lane is zeroed
                # by the pre-masked weight planes.
                tap = y1 if s == 0 else pltpu.roll(y1, (-s) % m_total, 1)
                for k in KERNEL_SIZES:
                    p = k // 2
                    if abs(dz) <= p and abs(dy) <= p and abs(dx) <= p:
                        t = ((dz + p) * k + (dy + p)) * k + (dx + p)
                        acc[k] = acc[k] + tap * wp[k][t]

    dwbt = dwbt_ref[...]                                      # (EX, n_scales)
    total = jnp.zeros_like(y1)
    for bi, k in enumerate(KERNEL_SIZES):
        total = total + jnp.clip(acc[k] + dwbt[:, bi:bi + 1], 0.0, 6.0)

    # ---- pconv2 (channel shuffle + BN2 folded) and 1x1 skip: two matmuls, no concat ----
    out = jnp.dot(w2_ref[...], total, preferred_element_type=jnp.float32)
    out = out + jnp.dot(wskip_ref[...], x, preferred_element_type=jnp.float32)
    o_ref[...] = out + b2_ref[...]


def _mscb_call(x_cm, w1f, b1, wp1, wp3, wp5, dwbt, w2p, wskipp, b2p,
               *, n, d, h, w, spb):
    cin = x_cm.shape[0]
    m = d * h * w
    m_blk = spb * m                       # lane width per grid step (multiple of 128)
    steps = n // spb
    const2 = lambda i: (0, 0)
    const3 = lambda i: (0, 0, 0)
    per_blk = lambda i: (0, i)
    return pl.pallas_call(
        functools.partial(_mscb_fused_kernel, d=d, h=h, w=w, m_total=m_blk),
        out_shape=jax.ShapeDtypeStruct((OUT_PAD, n * m), jnp.float32),
        grid=(steps,),
        in_specs=[
            pl.BlockSpec((cin, m_blk), per_blk),
            pl.BlockSpec(w1f.shape, const2),
            pl.BlockSpec(b1.shape, const2),
            pl.BlockSpec(wp1.shape, const3),
            pl.BlockSpec(wp3.shape, const3),
            pl.BlockSpec(wp5.shape, const3),
            pl.BlockSpec(dwbt.shape, const2),
            pl.BlockSpec(w2p.shape, const2),
            pl.BlockSpec(wskipp.shape, const2),
            pl.BlockSpec(b2p.shape, const2),
        ],
        out_specs=pl.BlockSpec((OUT_PAD, m_blk), per_blk),
        compiler_params=pltpu.CompilerParams(dimension_semantics=("parallel",)),
    )(x_cm, w1f, b1, wp1, wp3, wp5, dwbt, w2p, wskipp, b2p)


# ---------------------------------------------------------------------------
# Wrapper: layout + weight folding (BN scales, boundary masks, shuffle, padding)
# ---------------------------------------------------------------------------
def _build_dw_weight_planes(params, d, h, w, spb):
    """Per-tap depthwise weight planes with BN scale and per-lane boundary masks pre-folded."""
    m = d * h * w
    mt = spb * m
    q = jnp.arange(mt, dtype=jnp.int32) % m      # per-sample flattened (z, y, x) position
    zi = q // (h * w)
    yi = (q // w) % h
    xi = q % w
    planes = []
    for i, k in enumerate(KERNEL_SIZES):
        p = k // 2
        wk = params["dw_scale"][i][:, None] * params["w_dw"][i].T        # (EX, k^3)
        rows = []
        for dz in range(-p, p + 1):
            for dy in range(-p, p + 1):
                for dx in range(-p, p + 1):
                    valid = ((zi + dz >= 0) & (zi + dz < d) &
                             (yi + dy >= 0) & (yi + dy < h) &
                             (xi + dx >= 0) & (xi + dx < w)).astype(jnp.float32)
                    t = ((dz + p) * k + (dy + p)) * k + (dx + p)
                    rows.append(wk[:, t][:, None] * valid[None, :])      # (EX, mt)
        planes.append(jnp.stack(rows, axis=0))                            # (k^3, EX, mt)
    return planes


def mscb_forward(x_ncdhw, params, samples_per_step=None):
    x = x_ncdhw.astype(jnp.float32)
    n, cin, d, h, w = x.shape
    m = d * h * w
    spb = samples_per_step if samples_per_step is not None else _choose_samples_per_step(n)

    # channel-major flat layout: (C_in, N*D*H*W), column order (n, z, y, x)
    x_cm = jnp.transpose(x, (1, 0, 2, 3, 4)).reshape(cin, n * m)

    # fold BN1 scale into pconv1 weights
    w1f = params["bn1_scale"][:, None] * params["w_pconv1"].T            # (EX, C_in)
    b1 = params["bn1_bias"][:, None]                                     # (EX, 1)

    # per-tap depthwise weight planes (BN scale + boundary mask folded)
    wp1, wp3, wp5 = _build_dw_weight_planes(params, d, h, w, spb)
    dwbt = params["dw_bias"].T                                           # (EX, n_scales)

    # fold channel shuffle + BN2 scale into pconv2 weights; separate 1x1 skip weights
    groups = _gcd(EX_CH, OUT_CH)
    inv_perm = _shuffle_inv_perm(EX_CH, groups)
    w2t = params["w_pconv2"].T                                           # (OUT, EX)
    w2f = params["bn2_scale"][:, None] * w2t[:, jnp.array(inv_perm)]     # (OUT, EX)
    if IN_CH != OUT_CH:
        wskip = params["w_skip"].T                                       # (OUT, C_in)
    else:
        wskip = jnp.eye(IN_CH, dtype=jnp.float32)
    b2 = params["bn2_bias"][:, None]                                     # (OUT, 1)

    # pad output-channel dim 6 -> 8 for full-sublane stores
    pad = OUT_PAD - OUT_CH
    w2p = jnp.pad(w2f, ((0, pad), (0, 0)))
    wskipp = jnp.pad(wskip, ((0, pad), (0, 0)))
    b2p = jnp.pad(b2, ((0, pad), (0, 0)))

    out_cm = _mscb_call(x_cm, w1f, b1, wp1, wp3, wp5, dwbt, w2p, wskipp, b2p,
                        n=n, d=d, h=h, w=w, spb=spb)
    out = out_cm[:OUT_CH].reshape(OUT_CH, n, d, h, w)
    return jnp.transpose(out, (1, 0, 2, 3, 4))                           # back to NCDHW


# ---------------------------------------------------------------------------
# Deterministic parameter init (BatchNorm folded to per-channel scale/bias)
# ---------------------------------------------------------------------------
def _fold_bn(c, salt):
    i = jnp.arange(c, dtype=jnp.float32)
    gamma = 1.0 + 0.1 * jnp.cos(i + salt)
    beta = 0.05 * jnp.sin(i + salt)
    running_mean = 0.02 * jnp.sin(2.0 * i + salt)
    running_var = 1.0 + 0.1 * (jnp.cos(3.0 * i + salt) ** 2)
    scale = gamma * lax.rsqrt(running_var + BN_EPS)
    bias = beta - running_mean * scale
    return scale, bias


def init_params(key):
    ks = jax.random.split(key, 6)
    p = {}
    p["w_pconv1"] = 0.3 * jax.random.normal(ks[0], (IN_CH, EX_CH), jnp.float32)
    # depthwise weights stored as (k*k*k, C), row-major over (dz, dy, dx)
    p["w_dw"] = [
        (1.0 / (k * k * k)) * jax.random.normal(ks[1 + i], (k * k * k, EX_CH), jnp.float32)
        for i, k in enumerate(KERNEL_SIZES)
    ]
    p["w_pconv2"] = 0.3 * jax.random.normal(ks[4], (EX_CH, OUT_CH), jnp.float32)
    p["w_skip"] = 0.3 * jax.random.normal(ks[5], (IN_CH, OUT_CH), jnp.float32)

    p["bn1_scale"], p["bn1_bias"] = _fold_bn(EX_CH, 0.1)
    dw_sb = [_fold_bn(EX_CH, 1.0 + i) for i in range(len(KERNEL_SIZES))]
    p["dw_scale"] = jnp.stack([s for s, _ in dw_sb])
    p["dw_bias"] = jnp.stack([b for _, b in dw_sb])
    p["bn2_scale"], p["bn2_bias"] = _fold_bn(OUT_CH, 5.0)
    return p


# ---------------------------------------------------------------------------
# Pure-JAX reference (same math, via lax.conv_general_dilated) for validation
# ---------------------------------------------------------------------------
def channel_shuffle_last(x, groups):
    lead = x.shape[:-1]
    c = x.shape[-1]
    cpg = c // groups
    x = x.reshape(*lead, groups, cpg)
    x = jnp.swapaxes(x, -1, -2)
    return x.reshape(*lead, c)


def mscb_reference(x_ncdhw, params):
    x = jnp.transpose(x_ncdhw, (0, 2, 3, 4, 1)).astype(jnp.float32)
    y = jnp.einsum('ndhwc,ce->ndhwe', x, params["w_pconv1"])
    y = jnp.clip(y * params["bn1_scale"] + params["bn1_bias"], 0.0, 6.0)
    dout = jnp.zeros(y.shape, jnp.float32)
    for i, k in enumerate(KERNEL_SIZES):
        filt = params["w_dw"][i].reshape(k, k, k, 1, EX_CH)
        conv = lax.conv_general_dilated(
            y, filt, window_strides=(1, 1, 1),
            padding=[(k // 2, k // 2)] * 3,
            dimension_numbers=('NDHWC', 'DHWIO', 'NDHWC'),
            feature_group_count=EX_CH)
        dout = dout + jnp.clip(conv * params["dw_scale"][i] + params["dw_bias"][i], 0.0, 6.0)
    dout = channel_shuffle_last(dout, _gcd(EX_CH, OUT_CH))
    out = jnp.einsum('ndhwc,co->ndhwo', dout, params["w_pconv2"])
    out = out * params["bn2_scale"] + params["bn2_bias"]
    if IN_CH != OUT_CH:
        skip = jnp.einsum('ndhwc,co->ndhwo', x, params["w_skip"])
    else:
        skip = x
    return jnp.transpose(out + skip, (0, 4, 1, 2, 3))


if __name__ == "__main__":
    key = jax.random.PRNGKey(0)
    k_x, k_p = jax.random.split(key)
    # PyTorch-convention NCDHW input: (N, C, D, H, W)
    x = jax.random.normal(k_x, (N, IN_CH, D, H, W), jnp.float32)
    params = init_params(k_p)

    out = jax.jit(mscb_forward)(x, params)
    out = jax.block_until_ready(out)

    ref = mscb_reference(x, params)
    assert out.shape == (N, OUT_CH, D, H, W), out.shape
    max_err = float(jnp.max(jnp.abs(out - ref)))
    assert max_err < 1e-2, f"max abs err {max_err}"
    print("KERNEL_OK")
</pallas_src>

<mosaic_0001>
module attributes {stable_mosaic.version = 11 : i64} {
  func.func @_mscb_fused_kernel(%arg0: i32, %arg1: memref<4x512xf32, #tpu.memory_space<vmem>>, %arg2: memref<8x4xf32, #tpu.memory_space<vmem>>, %arg3: memref<8x1xf32, #tpu.memory_space<vmem>>, %arg4: memref<1x8x512xf32, #tpu.memory_space<vmem>>, %arg5: memref<27x8x512xf32, #tpu.memory_space<vmem>>, %arg6: memref<125x8x512xf32, #tpu.memory_space<vmem>>, %arg7: memref<8x3xf32, #tpu.memory_space<vmem>>, %arg8: memref<8x8xf32, #tpu.memory_space<vmem>>, %arg9: memref<8x4xf32, #tpu.memory_space<vmem>>, %arg10: memref<8x1xf32, #tpu.memory_space<vmem>>, %arg11: memref<8x512xf32, #tpu.memory_space<vmem>>) attributes {dimension_semantics = [#tpu.dimension_semantics<parallel>], iteration_bounds = array<i64: 1>, scalar_prefetch = 0 : i64, scratch_operands = 0 : i64, tpu.core_type = #tpu.core_type<tc>, window_params = [{transform_indices = @transform_0, window_bounds = array<i64: 4, 512>}, {pipeline_mode = #tpu.pipeline_mode<synchronous>, transform_indices = @transform_1, window_bounds = array<i64: 8, 4>}, {pipeline_mode = #tpu.pipeline_mode<synchronous>, transform_indices = @transform_2, window_bounds = array<i64: 8, 1>}, {pipeline_mode = #tpu.pipeline_mode<synchronous>, transform_indices = @transform_3, window_bounds = array<i64: 1, 8, 512>}, {pipeline_mode = #tpu.pipeline_mode<synchronous>, transform_indices = @transform_4, window_bounds = array<i64: 27, 8, 512>}, {pipeline_mode = #tpu.pipeline_mode<synchronous>, transform_indices = @transform_5, window_bounds = array<i64: 125, 8, 512>}, {pipeline_mode = #tpu.pipeline_mode<synchronous>, transform_indices = @transform_6, window_bounds = array<i64: 8, 3>}, {pipeline_mode = #tpu.pipeline_mode<synchronous>, transform_indices = @transform_7, window_bounds = array<i64: 8, 8>}, {pipeline_mode = #tpu.pipeline_mode<synchronous>, transform_indices = @transform_8, window_bounds = array<i64: 8, 4>}, {pipeline_mode = #tpu.pipeline_mode<synchronous>, transform_indices = @transform_9, window_bounds = array<i64: 8, 1>}, {transform_indices = @transform_10, window_bounds = array<i64: 8, 512>}]} {
    %c0 = arith.constant 0 : index
    %c0_0 = arith.constant 0 : index
    %0 = vector.load %arg1[%c0, %c0_0] : memref<4x512xf32, #tpu.memory_space<vmem>>, vector<4x512xf32>
    %c0_1 = arith.constant 0 : index
    %c0_2 = arith.constant 0 : index
    %1 = vector.load %arg2[%c0_1, %c0_2] : memref<8x4xf32, #tpu.memory_space<vmem>>, vector<8x4xf32>
    %cst = arith.constant dense<0.000000e+00> : vector<8x512xf32>
    %2 = tpu.matmul %1, %0, %cst {dimension_numbers = #tpu.dot_dimension_numbers<[1], [0], [0], [1], [0, 0, 1, 1], [], []>} : vector<8x4xf32>, vector<4x512xf32>, vector<8x512xf32> -> vector<8x512xf32>
    %c0_3 = arith.constant 0 : index
    %c0_4 = arith.constant 0 : index
    %3 = vector.load %arg3[%c0_3, %c0_4] : memref<8x1xf32, #tpu.memory_space<vmem>>, vector<8x1xf32>
    %4 = vector.broadcast %3 : vector<8x1xf32> to vector<8x512xf32>
    %5 = arith.addf %2, %4 : vector<8x512xf32>
    %cst_5 = arith.constant 0.000000e+00 : f32
    %cst_6 = arith.constant 6.000000e+00 : f32
    %6 = vector.broadcast %cst_5 : f32 to vector<8x512xf32>
    %7 = arith.maximumf %6, %5 : vector<8x512xf32>
    %8 = vector.broadcast %cst_6 : f32 to vector<8x512xf32>
    %9 = arith.minimumf %8, %7 : vector<8x512xf32>
    %cst_7 = arith.constant 0.000000e+00 : f32
    %10 = vector.broadcast %cst_7 : f32 to vector<8x512xf32>
    %cst_8 = arith.constant 0.000000e+00 : f32
    %11 = vector.broadcast %cst_8 : f32 to vector<8x512xf32>
    %cst_9 = arith.constant 0.000000e+00 : f32
    %12 = vector.broadcast %cst_9 : f32 to vector<8x512xf32>
    %c146_i32 = arith.constant 146 : i32
    %13 = tpu.dynamic_rotate %9 by %c146_i32 dim 1 : vector<8x512xf32>, i32 -> vector<8x512xf32>
    %c0_10 = arith.constant 0 : index
    %c0_11 = arith.constant 0 : index
    %c0_12 = arith.constant 0 : index
    %14 = vector.load %arg6[%c0_10, %c0_11, %c0_12] : memref<125x8x512xf32, #tpu.memory_space<vmem>>, vector<1x8x512xf32>
    %15 = vector.shape_cast %14 : vector<1x8x512xf32> to vector<8x512xf32>
    %16 = arith.mulf %13, %15 : vector<8x512xf32>
    %17 = arith.addf %12, %16 : vector<8x512xf32>
    %c145_i32 = arith.constant 145 : i32
    %18 = tpu.dynamic_rotate %9 by %c145_i32 dim 1 : vector<8x512xf32>, i32 -> vector<8x512xf32>
    %c1 = arith.constant 1 : index
    %c0_13 = arith.constant 0 : index
    %c0_14 = arith.constant 0 : index
    %19 = vector.load %arg6[%c1, %c0_13, %c0_14] : memref<125x8x512xf32, #tpu.memory_space<vmem>>, vector<1x8x512xf32>
    %20 = vector.shape_cast %19 : vector<1x8x512xf32> to vector<8x512xf32>
    %21 = arith.mulf %18, %20 : vector<8x512xf32>
    %22 = arith.addf %17, %21 : vector<8x512xf32>
    %c144_i32 = arith.constant 144 : i32
    %23 = tpu.dynamic_rotate %9 by %c144_i32 dim 1 : vector<8x512xf32>, i32 -> vector<8x512xf32>
    %c2 = arith.constant 2 : index
    %c0_15 = arith.constant 0 : index
    %c0_16 = arith.constant 0 : index
    %24 = vector.load %arg6[%c2, %c0_15, %c0_16] : memref<125x8x512xf32, #tpu.memory_space<vmem>>, vector<1x8x512xf32>
    %25 = vector.shape_cast %24 : vector<1x8x512xf32> to vector<8x512xf32>
    %26 = arith.mulf %23, %25 : vector<8x512xf32>
    %27 = arith.addf %22, %26 : vector<8x512xf32>
    %c143_i32 = arith.constant 143 : i32
    %28 = tpu.dynamic_rotate %9 by %c143_i32 dim 1 : vector<8x512xf32>, i32 -> vector<8x512xf32>
    %c3 = arith.constant 3 : index
    %c0_17 = arith.constant 0 : index
    %c0_18 = arith.constant 0 : index
    %29 = vector.load %arg6[%c3, %c0_17, %c0_18] : memref<125x8x512xf32, #tpu.memory_space<vmem>>, vector<1x8x512xf32>
    %30 = vector.shape_cast %29 : vector<1x8x512xf32> to vector<8x512xf32>
    %31 = arith.mulf %28, %30 : vector<8x512xf32>
    %32 = arith.addf %27, %31 : vector<8x512xf32>
    %c142_i32 = arith.constant 142 : i32
    %33 = tpu.dynamic_rotate %9 by %c142_i32 dim 1 : vector<8x512xf32>, i32 -> vector<8x512xf32>
    %c4 = arith.constant 4 : index
    %c0_19 = arith.constant 0 : index
    %c0_20 = arith.constant 0 : index
    %34 = vector.load %arg6[%c4, %c0_19, %c0_20] : memref<125x8x512xf32, #tpu.memory_space<vmem>>, vector<1x8x512xf32>
    %35 = vector.shape_cast %34 : vector<1x8x512xf32> to vector<8x512xf32>
    %36 = arith.mulf %33, %35 : vector<8x512xf32>
    %37 = arith.addf %32, %36 : vector<8x512xf32>
    %c138_i32 = arith.constant 138 : i32
    %38 = tpu.dynamic_rotate %9 by %c138_i32 dim 1 : vector<8x512xf32>, i32 -> vector<8x512xf32>
    %c5 = arith.constant 5 : index
    %c0_21 = arith.constant 0 : index
    %c0_22 = arith.constant 0 : index
    %39 = vector.load %arg6[%c5, %c0_21, %c0_22] : memref<125x8x512xf32, #tpu.memory_space<vmem>>, vector<1x8x512xf32>
    %40 = vector.shape_cast %39 : vector<1x8x512xf32> to vector<8x512xf32>
    %41 = arith.mulf %38, %40 : vector<8x512xf32>
    %42 = arith.addf %37, %41 : vector<8x512xf32>
    %c137_i32 = arith.constant 137 : i32
    %43 = tpu.dynamic_rotate %9 by %c137_i32 dim 1 : vector<8x512xf32>, i32 -> vector<8x512xf32>
    %c6 = arith.constant 6 : index
    %c0_23 = arith.constant 0 : index
    %c0_24 = arith.constant 0 : index
    %44 = vector.load %arg6[%c6, %c0_23, %c0_24] : memref<125x8x512xf32, #tpu.memory_space<vmem>>, vector<1x8x512xf32>
    %45 = vector.shape_cast %44 : vector<1x8x512xf32> to vector<8x512xf32>
    %46 = arith.mulf %43, %45 : vector<8x512xf32>
    %47 = arith.addf %42, %46 : vector<8x512xf32>
    %c136_i32 = arith.constant 136 : i32
    %48 = tpu.dynamic_rotate %9 by %c136_i32 dim 1 : vector<8x512xf32>, i32 -> vector<8x512xf32>
    %c7 = arith.constant 7 : index
    %c0_25 = arith.constant 0 : index
    %c0_26 = arith.constant 0 : index
    %49 = vector.load %arg6[%c7, %c0_25, %c0_26] : memref<125x8x512xf32, #tpu.memory_space<vmem>>, vector<1x8x512xf32>
    %50 = vector.shape_cast %49 : vector<1x8x512xf32> to vector<8x512xf32>
    %51 = arith.mulf %48, %50 : vector<8x512xf32>
    %52 = arith.addf %47, %51 : vector<8x512xf32>
    %c135_i32 = arith.constant 135 : i32
    %53 = tpu.dynamic_rotate %9 by %c135_i32 dim 1 : vector<8x512xf32>, i32 -> vector<8x512xf32>
    %c8 = arith.constant 8 : index
    %c0_27 = arith.constant 0 : index
    %c0_28 = arith.constant 0 : index
    %54 = vector.load %arg6[%c8, %c0_27, %c0_28] : memref<125x8x512xf32, #tpu.memory_space<vmem>>, vector<1x8x512xf32>
    %55 = vector.shape_cast %54 : vector<1x8x512xf32> to vector<8x512xf32>
    %56 = arith.mulf %53, %55 : vector<8x512xf32>
    %57 = arith.addf %52, %56 : vector<8x512xf32>
    %c134_i32 = arith.constant 134 : i32
    %58 = tpu.dynamic_rotate %9 by %c134_i32 dim 1 : vector<8x512xf32>, i32 -> vector<8x512xf32>
    %c9 = arith.constant 9 : index
    %c0_29 = arith.constant 0 : index
    %c0_30 = arith.constant 0 : index
    %59 = vector.load %arg6[%c9, %c0_29, %c0_30] : memref<125x8x512xf32, #tpu.memory_space<vmem>>, vector<1x8x512xf32>
    %60 = vector.shape_cast %59 : vector<1x8x512xf32> to vector<8x512xf32>
    %61 = arith.mulf %58, %60 : vector<8x512xf32>
    %62 = arith.addf %57, %61 : vector<8x512xf32>
    %c130_i32 = arith.constant 130 : i32
    %63 = tpu.dynamic_rotate %9 by %c130_i32 dim 1 : vector<8x512xf32>, i32 -> vector<8x512xf32>
    %c10 = arith.constant 10 : index
    %c0_31 = arith.constant 0 : index
    %c0_32 = arith.constant 0 : index
    %64 = vector.load %arg6[%c10, %c0_31, %c0_32] : memref<125x8x512xf32, #tpu.memory_space<vmem>>, vector<1x8x512xf32>
    %65 = vector.shape_cast %64 : vector<1x8x512xf32> to vector<8x512xf32>
    %66 = arith.mulf %63, %65 : vector<8x512xf32>
    %67 = arith.addf %62, %66 : vector<8x512xf32>
    %c129_i32 = arith.constant 129 : i32
    %68 = tpu.dynamic_rotate %9 by %c129_i32 dim 1 : vector<8x512xf32>, i32 -> vector<8x512xf32>
    %c11 = arith.constant 11 : index
    %c0_33 = arith.constant 0 : index
    %c0_34 = arith.constant 0 : index
    %69 = vector.load %arg6[%c11, %c0_33, %c0_34] : memref<125x8x512xf32, #tpu.memory_space<vmem>>, vector<1x8x512xf32>
    %70 = vector.shape_cast %69 : vector<1x8x512xf32> to vector<8x512xf32>
    %71 = arith.mulf %68, %70 : vector<8x512xf32>
    %72 = arith.addf %67, %71 : vector<8x512xf32>
    %c128_i32 = arith.constant 128 : i32
    %73 = tpu.dynamic_rotate %9 by %c128_i32 dim 1 : vector<8x512xf32>, i32 -> vector<8x512xf32>
    %c12 = arith.constant 12 : index
    %c0_35 = arith.constant 0 : index
    %c0_36 = arith.constant 0 : index
    %74 = vector.load %arg6[%c12, %c0_35, %c0_36] : memref<125x8x512xf32, #tpu.memory_space<vmem>>, vector<1x8x512xf32>
    %75 = vector.shape_cast %74 : vector<1x8x512xf32> to vector<8x512xf32>
    %76 = arith.mulf %73, %75 : vector<8x512xf32>
    %77 = arith.addf %72, %76 : vector<8x512xf32>
    %c127_i32 = arith.constant 127 : i32
    %78 = tpu.dynamic_rotate %9 by %c127_i32 dim 1 : vector<8x512xf32>, i32 -> vector<8x512xf32>
    %c13 = arith.constant 13 : index
    %c0_37 = arith.constant 0 : index
    %c0_38 = arith.constant 0 : index
    %79 = vector.load %arg6[%c13, %c0_37, %c0_38] : memref<125x8x512xf32, #tpu.memory_space<vmem>>, vector<1x8x512xf32>
    %80 = vector.shape_cast %79 : vector<1x8x512xf32> to vector<8x512xf32>
    %81 = arith.mulf %78, %80 : vector<8x512xf32>
    %82 = arith.addf %77, %81 : vector<8x512xf32>
    %c126_i32 = arith.constant 126 : i32
    %83 = tpu.dynamic_rotate %9 by %c126_i32 dim 1 : vector<8x512xf32>, i32 -> vector<8x512xf32>
    %c14 = arith.constant 14 : index
    %c0_39 = arith.constant 0 : index
    %c0_40 = arith.constant 0 : index
    %84 = vector.load %arg6[%c14, %c0_39, %c0_40] : memref<125x8x512xf32, #tpu.memory_space<vmem>>, vector<1x8x512xf32>
    %85 = vector.shape_cast %84 : vector<1x8x512xf32> to vector<8x512xf32>
    %86 = arith.mulf %83, %85 : vector<8x512xf32>
    %87 = arith.addf %82, %86 : vector<8x512xf32>
    %c122_i32 = arith.constant 122 : i32
    %88 = tpu.dynamic_rotate %9 by %c122_i32 dim 1 : vector<8x512xf32>, i32 -> vector<8x512xf32>
    %c15 = arith.constant 15 : index
    %c0_41 = arith.constant 0 : index
    %c0_42 = arith.constant 0 : index
    %89 = vector.load %arg6[%c15, %c0_41, %c0_42] : memref<125x8x512xf32, #tpu.memory_space<vmem>>, vector<1x8x512xf32>
    %90 = vector.shape_cast %89 : vector<1x8x512xf32> to vector<8x512xf32>
    %91 = arith.mulf %88, %90 : vector<8x512xf32>
    %92 = arith.addf %87, %91 : vector<8x512xf32>
    %c121_i32 = arith.constant 121 : i32
    %93 = tpu.dynamic_rotate %9 by %c121_i32 dim 1 : vector<8x512xf32>, i32 -> vector<8x512xf32>
    %c16 = arith.constant 16 : index
    %c0_43 = arith.constant 0 : index
    %c0_44 = arith.constant 0 : index
    %94 = vector.load %arg6[%c16, %c0_43, %c0_44] : memref<125x8x512xf32, #tpu.memory_space<vmem>>, vector<1x8x512xf32>
    %95 = vector.shape_cast %94 : vector<1x8x512xf32> to vector<8x512xf32>
    %96 = arith.mulf %93, %95 : vector<8x512xf32>
    %97 = arith.addf %92, %96 : vector<8x512xf32>
    %c120_i32 = arith.constant 120 : i32
    %98 = tpu.dynamic_rotate %9 by %c120_i32 dim 1 : vector<8x512xf32>, i32 -> vector<8x512xf32>
    %c17 = arith.constant 17 : index
    %c0_45 = arith.constant 0 : index
    %c0_46 = arith.constant 0 : index
    %99 = vector.load %arg6[%c17, %c0_45, %c0_46] : memref<125x8x512xf32, #tpu.memory_space<vmem>>, vector<1x8x512xf32>
    %100 = vector.shape_cast %99 : vector<1x8x512xf32> to vector<8x512xf32>
    %101 = arith.mulf %98, %100 : vector<8x512xf32>
    %102 = arith.addf %97, %101 : vector<8x512xf32>
    %c119_i32 = arith.constant 119 : i32
    %103 = tpu.dynamic_rotate %9 by %c119_i32 dim 1 : vector<8x512xf32>, i32 -> vector<8x512xf32>
    %c18 = arith.constant 18 : index
    %c0_47 = arith.constant 0 : index
    %c0_48 = arith.constant 0 : index
    %104 = vector.load %arg6[%c18, %c0_47, %c0_48] : memref<125x8x512xf32, #tpu.memory_space<vmem>>, vector<1x8x512xf32>
    %105 = vector.shape_cast %104 : vector<1x8x512xf32> to vector<8x512xf32>
    %106 = arith.mulf %103, %105 : vector<8x512xf32>
    %107 = arith.addf %102, %106 : vector<8x512xf32>
    %c118_i32 = arith.constant 118 : i32
    %108 = tpu.dynamic_rotate %9 by %c118_i32 dim 1 : vector<8x512xf32>, i32 -> vector<8x512xf32>
    %c19 = arith.constant 19 : index
    %c0_49 = arith.constant 0 : index
    %c0_50 = arith.constant 0 : index
    %109 = vector.load %arg6[%c19, %c0_49, %c0_50] : memref<125x8x512xf32, #tpu.memory_space<vmem>>, vector<1x8x512xf32>
    %110 = vector.shape_cast %109 : vector<1x8x512xf32> to vector<8x512xf32>
    %111 = arith.mulf %108, %110 : vector<8x512xf32>
    %112 = arith.addf %107, %111 : vector<8x512xf32>
    %c114_i32 = arith.constant 114 : i32
    %113 = tpu.dynamic_rotate %9 by %c114_i32 dim 1 : vector<8x512xf32>, i32 -> vector<8x512xf32>
    %c20 = arith.constant 20 : index
    %c0_51 = arith.constant 0 : index
    %c0_52 = arith.constant 0 : index
    %114 = vector.load %arg6[%c20, %c0_51, %c0_52] : memref<125x8x512xf32, #tpu.memory_space<vmem>>, vector<1x8x512xf32>
    %115 = vector.shape_cast %114 : vector<1x8x512xf32> to vector<8x512xf32>
    %116 = arith.mulf %113, %115 : vector<8x512xf32>
    %117 = arith.addf %112, %116 : vector<8x512xf32>
    %c113_i32 = arith.constant 113 : i32
    %118 = tpu.dynamic_rotate %9 by %c113_i32 dim 1 : vector<8x512xf32>, i32 -> vector<8x512xf32>
    %c21 = arith.constant 21 : index
    %c0_53 = arith.constant 0 : index
    %c0_54 = arith.constant 0 : index
    %119 = vector.load %arg6[%c21, %c0_53, %c0_54] : memref<125x8x512xf32, #tpu.memory_space<vmem>>, vector<1x8x512xf32>
    %120 = vector.shape_cast %119 : vector<1x8x512xf32> to vector<8x512xf32>
    %121 = arith.mulf %118, %120 : vector<8x512xf32>
    %122 = arith.addf %117, %121 : vector<8x512xf32>
    %c112_i32 = arith.constant 112 : i32
    %123 = tpu.dynamic_rotate %9 by %c112_i32 dim 1 : vector<8x512xf32>, i32 -> vector<8x512xf32>
    %c22 = arith.constant 22 : index
    %c0_55 = arith.constant 0 : index
    %c0_56 = arith.constant 0 : index
    %124 = vector.load %arg6[%c22, %c0_55, %c0_56] : memref<125x8x512xf32, #tpu.memory_space<vmem>>, vector<1x8x512xf32>
    %125 = vector.shape_cast %124 : vector<1x8x512xf32> to vector<8x512xf32>
    %126 = arith.mulf %123, %125 : vector<8x512xf32>
    %127 = arith.addf %122, %126 : vector<8x512xf32>
    %c111_i32 = arith.constant 111 : i32
    %128 = tpu.dynamic_rotate %9 by %c111_i32 dim 1 : vector<8x512xf32>, i32 -> vector<8x512xf32>
    %c23 = arith.constant 23 : index
    %c0_57 = arith.constant 0 : index
    %c0_58 = arith.constant 0 : index
    %129 = vector.load %arg6[%c23, %c0_57, %c0_58] : memref<125x8x512xf32, #tpu.memory_space<vmem>>, vector<1x8x512xf32>
    %130 = vector.shape_cast %129 : vector<1x8x512xf32> to vector<8x512xf32>
    %131 = arith.mulf %128, %130 : vector<8x512xf32>
    %132 = arith.addf %127, %131 : vector<8x512xf32>
    %c110_i32 = arith.constant 110 : i32
    %133 = tpu.dynamic_rotate %9 by %c110_i32 dim 1 : vector<8x512xf32>, i32 -> vector<8x512xf32>
    %c24 = arith.constant 24 : index
    %c0_59 = arith.constant 0 : index
    %c0_60 = arith.constant 0 : index
    %134 = vector.load %arg6[%c24, %c0_59, %c0_60] : memref<125x8x512xf32, #tpu.memory_space<vmem>>, vector<1x8x512xf32>
    %135 = vector.shape_cast %134 : vector<1x8x512xf32> to vector<8x512xf32>
    %136 = arith.mulf %133, %135 : vector<8x512xf32>
    %137 = arith.addf %132, %136 : vector<8x512xf32>
    %c82_i32 = arith.constant 82 : i32
    %138 = tpu.dynamic_rotate %9 by %c82_i32 dim 1 : vector<8x512xf32>, i32 -> vector<8x512xf32>
    %c25 = arith.constant 25 : index
    %c0_61 = arith.constant 0 : index
    %c0_62 = arith.constant 0 : index
    %139 = vector.load %arg6[%c25, %c0_61, %c0_62] : memref<125x8x512xf32, #tpu.memory_space<vmem>>, vector<1x8x512xf32>
    %140 = vector.shape_cast %139 : vector<1x8x512xf32> to vector<8x512xf32>
    %141 = arith.mulf %138, %140 : vector<8x512xf32>
    %142 = arith.addf %137, %141 : vector<8x512xf32>
    %c81_i32 = arith.constant 81 : i32
    %143 = tpu.dynamic_rotate %9 by %c81_i32 dim 1 : vector<8x512xf32>, i32 -> vector<8x512xf32>
    %c26 = arith.constant 26 : index
    %c0_63 = arith.constant 0 : index
    %c0_64 = arith.constant 0 : index
    %144 = vector.load %arg6[%c26, %c0_63, %c0_64] : memref<125x8x512xf32, #tpu.memory_space<vmem>>, vector<1x8x512xf32>
    %145 = vector.shape_cast %144 : vector<1x8x512xf32> to vector<8x512xf32>
    %146 = arith.mulf %143, %145 : vector<8x512xf32>
    %147 = arith.addf %142, %146 : vector<8x512xf32>
    %c80_i32 = arith.constant 80 : i32
    %148 = tpu.dynamic_rotate %9 by %c80_i32 dim 1 : vector<8x512xf32>, i32 -> vector<8x512xf32>
    %c27 = arith.constant 27 : index
    %c0_65 = arith.constant 0 : index
    %c0_66 = arith.constant 0 : index
    %149 = vector.load %arg6[%c27, %c0_65, %c0_66] : memref<125x8x512xf32, #tpu.memory_space<vmem>>, vector<1x8x512xf32>
    %150 = vector.shape_cast %149 : vector<1x8x512xf32> to vector<8x512xf32>
    %151 = arith.mulf %148, %150 : vector<8x512xf32>
    %152 = arith.addf %147, %151 : vector<8x512xf32>
    %c79_i32 = arith.constant 79 : i32
    %153 = tpu.dynamic_rotate %9 by %c79_i32 dim 1 : vector<8x512xf32>, i32 -> vector<8x512xf32>
    %c28 = arith.constant 28 : index
    %c0_67 = arith.constant 0 : index
    %c0_68 = arith.constant 0 : index
    %154 = vector.load %arg6[%c28, %c0_67, %c0_68] : memref<125x8x512xf32, #tpu.memory_space<vmem>>, vector<1x8x512xf32>
    %155 = vector.shape_cast %154 : vector<1x8x512xf32> to vector<8x512xf32>
    %156 = arith.mulf %153, %155 : vector<8x512xf32>
    %157 = arith.addf %152, %156 : vector<8x512xf32>
    %c78_i32 = arith.constant 78 : i32
    %158 = tpu.dynamic_rotate %9 by %c78_i32 dim 1 : vector<8x512xf32>, i32 -> vector<8x512xf32>
    %c29 = arith.constant 29 : index
    %c0_69 = arith.constant 0 : index
    %c0_70 = arith.constant 0 : index
    %159 = vector.load %arg6[%c29, %c0_69, %c0_70] : memref<125x8x512xf32, #tpu.memory_space<vmem>>, vector<1x8x512xf32>
    %160 = vector.shape_cast %159 : vector<1x8x512xf32> to vector<8x512xf32>
    %161 = arith.mulf %158, %160 : vector<8x512xf32>
    %162 = arith.addf %157, %161 : vector<8x512xf32>
    %c74_i32 = arith.constant 74 : i32
    %163 = tpu.dynamic_rotate %9 by %c74_i32 dim 1 : vector<8x512xf32>, i32 -> vector<8x512xf32>
    %c30 = arith.constant 30 : index
    %c0_71 = arith.constant 0 : index
    %c0_72 = arith.constant 0 : index
    %164 = vector.load %arg6[%c30, %c0_71, %c0_72] : memref<125x8x512xf32, #tpu.memory_space<vmem>>, vector<1x8x512xf32>
    %165 = vector.shape_cast %164 : vector<1x8x512xf32> to vector<8x512xf32>
    %166 = arith.mulf %163, %165 : vector<8x512xf32>
    %167 = arith.addf %162, %166 : vector<8x512xf32>
    %c73_i32 = arith.constant 73 : i32
    %168 = tpu.dynamic_rotate %9 by %c73_i32 dim 1 : vector<8x512xf32>, i32 -> vector<8x512xf32>
    %c0_73 = arith.constant 0 : index
    %c0_74 = arith.constant 0 : index
    %c0_75 = arith.constant 0 : index
    %169 = vector.load %arg5[%c0_73, %c0_74, %c0_75] : memref<27x8x512xf32, #tpu.memory_space<vmem>>, vector<1x8x512xf32>
    %170 = vector.shape_cast %169 : vector<1x8x512xf32> to vector<8x512xf32>
    %171 = arith.mulf %168, %170 : vector<8x512xf32>
    %172 = arith.addf %11, %171 : vector<8x512xf32>
    %c31 = arith.constant 31 : index
    %c0_76 = arith.constant 0 : index
    %c0_77 = arith.constant 0 : index
    %173 = vector.load %arg6[%c31, %c0_76, %c0_77] : memref<125x8x512xf32, #tpu.memory_space<vmem>>, vector<1x8x512xf32>
    %174 = vector.shape_cast %173 : vector<1x8x512xf32> to vector<8x512xf32>
    %175 = arith.mulf %168, %174 : vector<8x512xf32>
    %176 = arith.addf %167, %175 : vector<8x512xf32>
    %c72_i32 = arith.constant 72 : i32
    %177 = tpu.dynamic_rotate %9 by %c72_i32 dim 1 : vector<8x512xf32>, i32 -> vector<8x512xf32>
    %c1_78 = arith.constant 1 : index
    %c0_79 = arith.constant 0 : index
    %c0_80 = arith.constant 0 : index
    %178 = vector.load %arg5[%c1_78, %c0_79, %c0_80] : memref<27x8x512xf32, #tpu.memory_space<vmem>>, vector<1x8x512xf32>
    %179 = vector.shape_cast %178 : vector<1x8x512xf32> to vector<8x512xf32>
    %180 = arith.mulf %177, %179 : vector<8x512xf32>
    %181 = arith.addf %172, %180 : vector<8x512xf32>
    %c32 = arith.constant 32 : index
    %c0_81 = arith.constant 0 : index
    %c0_82 = arith.constant 0 : index
    %182 = vector.load %arg6[%c32, %c0_81, %c0_82] : memref<125x8x512xf32, #tpu.memory_space<vmem>>, vector<1x8x512xf32>
    %183 = vector.shape_cast %182 : vector<1x8x512xf32> to vector<8x512xf32>
    %184 = arith.mulf %177, %183 : vector<8x512xf32>
    %185 = arith.addf %176, %184 : vector<8x512xf32>
    %c71_i32 = arith.constant 71 : i32
    %186 = tpu.dynamic_rotate %9 by %c71_i32 dim 1 : vector<8x512xf32>, i32 -> vector<8x512xf32>
    %c2_83 = arith.constant 2 : index
    %c0_84 = arith.constant 0 : index
    %c0_85 = arith.constant 0 : index
    %187 = vector.load %arg5[%c2_83, %c0_84, %c0_85] : memref<27x8x512xf32, #tpu.memory_space<vmem>>, vector<1x8x512xf32>
    %188 = vector.shape_cast %187 : vector<1x8x512xf32> to vector<8x512xf32>
    %189 = arith.mulf %186, %188 : vector<8x512xf32>
    %190 = arith.addf %181, %189 : vector<8x512xf32>
    %c33 = arith.constant 33 : index
    %c0_86 = arith.constant 0 : index
    %c0_87 = arith.constant 0 : index
    %191 = vector.load %arg6[%c33, %c0_86, %c0_87] : memref<125x8x512xf32, #tpu.memory_space<vmem>>, vector<1x8x512xf32>
    %192 = vector.shape_cast %191 : vector<1x8x512xf32> to vector<8x512xf32>
    %193 = arith.mulf %186, %192 : vector<8x512xf32>
    %194 = arith.addf %185, %193 : vector<8x512xf32>
    %c70_i32 = arith.constant 70 : i32
    %195 = tpu.dynamic_rotate %9 by %c70_i32 dim 1 : vector<8x512xf32>, i32 -> vector<8x512xf32>
    %c34 = arith.constant 34 : index
    %c0_88 = arith.constant 0 : index
    %c0_89 = arith.constant 0 : index
    %196 = vector.load %arg6[%c34, %c0_88, %c0_89] : memref<125x8x512xf32, #tpu.memory_space<vmem>>, vector<1x8x512xf32>
    %197 = vector.shape_cast %196 : vector<1x8x512xf32> to vector<8x512xf32>
    %198 = arith.mulf %195, %197 : vector<8x512xf32>
    %199 = arith.addf %194, %198 : vector<8x512xf32>
    %c66_i32 = arith.constant 66 : i32
    %200 = tpu.dynamic_rotate %9 by %c66_i32 dim 1 : vector<8x512xf32>, i32 -> vector<8x512xf32>
    %c35 = arith.constant 35 : index
    %c0_90 = arith.constant 0 : index
    %c0_91 = arith.constant 0 : index
    %201 = vector.load %arg6[%c35, %c0_90, %c0_91] : memref<125x8x512xf32, #tpu.memory_space<vmem>>, vector<1x8x512xf32>
    %202 = vector.shape_cast %201 : vector<1x8x512xf32> to vector<8x512xf32>
    %203 = arith.mulf %200, %202 : vector<8x512xf32>
    %204 = arith.addf %199, %203 : vector<8x512xf32>
    %c65_i32 = arith.constant 65 : i32
    %205 = tpu.dynamic_rotate %9 by %c65_i32 dim 1 : vector<8x512xf32>, i32 -> vector<8x512xf32>
    %c3_92 = arith.constant 3 : index
    %c0_93 = arith.constant 0 : index
    %c0_94 = arith.constant 0 : index
    %206 = vector.load %arg5[%c3_92, %c0_93, %c0_94] : memref<27x8x512xf32, #tpu.memory_space<vmem>>, vector<1x8x512xf32>
    %207 = vector.shape_cast %206 : vector<1x8x512xf32> to vector<8x512xf32>
    %208 = arith.mulf %205, %207 : vector<8x512xf32>
    %209 = arith.addf %190, %208 : vector<8x512xf32>
    %c36 = arith.constant 36 : index
    %c0_95 = arith.constant 0 : index
    %c0_96 = arith.constant 0 : index
    %210 = vector.load %arg6[%c36, %c0_95, %c0_96] : memref<125x8x512xf32, #tpu.memory_space<vmem>>, vector<1x8x512xf32>
    %211 = vector.shape_cast %210 : vector<1x8x512xf32> to vector<8x512xf32>
    %212 = arith.mulf %205, %211 : vector<8x512xf32>
    %213 = arith.addf %204, %212 : vector<8x512xf32>
    %c64_i32 = arith.constant 64 : i32
    %214 = tpu.dynamic_rotate %9 by %c64_i32 dim 1 : vector<8x512xf32>, i32 -> vector<8x512xf32>
    %c4_97 = arith.constant 4 : index
    %c0_98 = arith.constant 0 : index
    %c0_99 = arith.constant 0 : index
    %215 = vector.load %arg5[%c4_97, %c0_98, %c0_99] : memref<27x8x512xf32, #tpu.memory_space<vmem>>, vector<1x8x512xf32>
    %216 = vector.shape_cast %215 : vector<1x8x512xf32> to vector<8x512xf32>
    %217 = arith.mulf %214, %216 : vector<8x512xf32>
    %218 = arith.addf %209, %217 : vector<8x512xf32>
    %c37 = arith.constant 37 : index
    %c0_100 = arith.constant 0 : index
    %c0_101 = arith.constant 0 : index
    %219 = vector.load %arg6[%c37, %c0_100, %c0_101] : memref<125x8x512xf32, #tpu.memory_space<vmem>>, vector<1x8x512xf32>
    %220 = vector.shape_cast %219 : vector<1x8x512xf32> to vector<8x512xf32>
    %221 = arith.mulf %214, %220 : vector<8x512xf32>
    %222 = arith.addf %213, %221 : vector<8x512xf32>
    %c63_i32 = arith.constant 63 : i32
    %223 = tpu.dynamic_rotate %9 by %c63_i32 dim 1 : vector<8x512xf32>, i32 -> vector<8x512xf32>
    %c5_102 = arith.constant 5 : index
    %c0_103 = arith.constant 0 : index
    %c0_104 = arith.constant 0 : index
    %224 = vector.load %arg5[%c5_102, %c0_103, %c0_104] : memref<27x8x512xf32, #tpu.memory_space<vmem>>, vector<1x8x512xf32>
    %225 = vector.shape_cast %224 : vector<1x8x512xf32> to vector<8x512xf32>
    %226 = arith.mulf %223, %225 : vector<8x512xf32>
    %227 = arith.addf %218, %226 : vector<8x512xf32>
    %c38 = arith.constant 38 : index
    %c0_105 = arith.constant 0 : index
    %c0_106 = arith.constant 0 : index
    %228 = vector.load %arg6[%c38, %c0_105, %c0_106] : memref<125x8x512xf32, #tpu.memory_space<vmem>>, vector<1x8x512xf32>
    %229 = vector.shape_cast %228 : vector<1x8x512xf32> to vector<8x512xf32>
    %230 = arith.mulf %223, %229 : vector<8x512xf32>
    %231 = arith.addf %222, %230 : vector<8x512xf32>
    %c62_i32 = arith.constant 62 : i32
    %232 = tpu.dynamic_rotate %9 by %c62_i32 dim 1 : vector<8x512xf32>, i32 -> vector<8x512xf32>
    %c39 = arith.constant 39 : index
    %c0_107 = arith.constant 0 : index
    %c0_108 = arith.constant 0 : index
    %233 = vector.load %arg6[%c39, %c0_107, %c0_108] : memref<125x8x512xf32, #tpu.memory_space<vmem>>, vector<1x8x512xf32>
    %234 = vector.shape_cast %233 : vector<1x8x512xf32> to vector<8x512xf32>
    %235 = arith.mulf %232, %234 : vector<8x512xf32>
    %236 = arith.addf %231, %235 : vector<8x512xf32>
    %c58_i32 = arith.constant 58 : i32
    %237 = tpu.dynamic_rotate %9 by %c58_i32 dim 1 : vector<8x512xf32>, i32 -> vector<8x512xf32>
    %c40 = arith.constant 40 : index
    %c0_109 = arith.constant 0 : index
    %c0_110 = arith.constant 0 : index
    %238 = vector.load %arg6[%c40, %c0_109, %c0_110] : memref<125x8x512xf32, #tpu.memory_space<vmem>>, vector<1x8x512xf32>
    %239 = vector.shape_cast %238 : vector<1x8x512xf32> to vector<8x512xf32>
    %240 = arith.mulf %237, %239 : vector<8x512xf32>
    %241 = arith.addf %236, %240 : vector<8x512xf32>
    %c57_i32 = arith.constant 57 : i32
    %242 = tpu.dynamic_rotate %9 by %c57_i32 dim 1 : vector<8x512xf32>, i32 -> vector<8x512xf32>
    %c6_111 = arith.constant 6 : index
    %c0_112 = arith.constant 0 : index
    %c0_113 = arith.constant 0 : index
    %243 = vector.load %arg5[%c6_111, %c0_112, %c0_113] : memref<27x8x512xf32, #tpu.memory_space<vmem>>, vector<1x8x512xf32>
    %244 = vector.shape_cast %243 : vector<1x8x512xf32> to vector<8x512xf32>
    %245 = arith.mulf %242, %244 : vector<8x512xf32>
    %246 = arith.addf %227, %245 : vector<8x512xf32>
    %c41 = arith.constant 41 : index
    %c0_114 = arith.constant 0 : index
    %c0_115 = arith.constant 0 : index
    %247 = vector.load %arg6[%c41, %c0_114, %c0_115] : memref<125x8x512xf32, #tpu.memory_space<vmem>>, vector<1x8x512xf32>
    %248 = vector.shape_cast %247 : vector<1x8x512xf32> to vector<8x512xf32>
    %249 = arith.mulf %242, %248 : vector<8x512xf32>
    %250 = arith.addf %241, %249 : vector<8x512xf32>
    %c56_i32 = arith.constant 56 : i32
    %251 = tpu.dynamic_rotate %9 by %c56_i32 dim 1 : vector<8x512xf32>, i32 -> vector<8x512xf32>
    %c7_116 = arith.constant 7 : index
    %c0_117 = arith.constant 0 : index
    %c0_118 = arith.constant 0 : index
    %252 = vector.load %arg5[%c7_116, %c0_117, %c0_118] : memref<27x8x512xf32, #tpu.memory_space<vmem>>, vector<1x8x512xf32>
    %253 = vector.shape_cast %252 : vector<1x8x512xf32> to vector<8x512xf32>
    %254 = arith.mulf %251, %253 : vector<8x512xf32>
    %255 = arith.addf %246, %254 : vector<8x512xf32>
    %c42 = arith.constant 42 : index
    %c0_119 = arith.constant 0 : index
    %c0_120 = arith.constant 0 : index
    %256 = vector.load %arg6[%c42, %c0_119, %c0_120] : memref<125x8x512xf32, #tpu.memory_space<vmem>>, vector<1x8x512xf32>
    %257 = vector.shape_cast %256 : vector<1x8x512xf32> to vector<8x512xf32>
    %258 = arith.mulf %251, %257 : vector<8x512xf32>
    %259 = arith.addf %250, %258 : vector<8x512xf32>
    %c55_i32 = arith.constant 55 : i32
    %260 = tpu.dynamic_rotate %9 by %c55_i32 dim 1 : vector<8x512xf32>, i32 -> vector<8x512xf32>
    %c8_121 = arith.constant 8 : index
    %c0_122 = arith.constant 0 : index
    %c0_123 = arith.constant 0 : index
    %261 = vector.load %arg5[%c8_121, %c0_122, %c0_123] : memref<27x8x512xf32, #tpu.memory_space<vmem>>, vector<1x8x512xf32>
    %262 = vector.shape_cast %261 : vector<1x8x512xf32> to vector<8x512xf32>
    %263 = arith.mulf %260, %262 : vector<8x512xf32>
    %264 = arith.addf %255, %263 : vector<8x512xf32>
    %c43 = arith.constant 43 : index
    %c0_124 = arith.constant 0 : index
    %c0_125 = arith.constant 0 : index
    %265 = vector.load %arg6[%c43, %c0_124, %c0_125] : memref<125x8x512xf32, #tpu.memory_space<vmem>>, vector<1x8x512xf32>
    %266 = vector.shape_cast %265 : vector<1x8x512xf32> to vector<8x512xf32>
    %267 = arith.mulf %260, %266 : vector<8x512xf32>
    %268 = arith.addf %259, %267 : vector<8x512xf32>
    %c54_i32 = arith.constant 54 : i32
    %269 = tpu.dynamic_rotate %9 by %c54_i32 dim 1 : vector<8x512xf32>, i32 -> vector<8x512xf32>
    %c44 = arith.constant 44 : index
    %c0_126 = arith.constant 0 : index
    %c0_127 = arith.constant 0 : index
    %270 = vector.load %arg6[%c44, %c0_126, %c0_127] : memref<125x8x512xf32, #tpu.memory_space<vmem>>, vector<1x8x512xf32>
    %271 = vector.shape_cast %270 : vector<1x8x512xf32> to vector<8x512xf32>
    %272 = arith.mulf %269, %271 : vector<8x512xf32>
    %273 = arith.addf %268, %272 : vector<8x512xf32>
    %c50_i32 = arith.constant 50 : i32
    %274 = tpu.dynamic_rotate %9 by %c50_i32 dim 1 : vector<8x512xf32>, i32 -> vector<8x512xf32>
    %c45 = arith.constant 45 : index
    %c0_128 = arith.constant 0 : index
    %c0_129 = arith.constant 0 : index
    %275 = vector.load %arg6[%c45, %c0_128, %c0_129] : memref<125x8x512xf32, #tpu.memory_space<vmem>>, vector<1x8x512xf32>
    %276 = vector.shape_cast %275 : vector<1x8x512xf32> to vector<8x512xf32>
    %277 = arith.mulf %274, %276 : vector<8x512xf32>
    %278 = arith.addf %273, %277 : vector<8x512xf32>
    %c49_i32 = arith.constant 49 : i32
    %279 = tpu.dynamic_rotate %9 by %c49_i32 dim 1 : vector<8x512xf32>, i32 -> vector<8x512xf32>
    %c46 = arith.constant 46 : index
    %c0_130 = arith.constant 0 : index
    %c0_131 = arith.constant 0 : index
    %280 = vector.load %arg6[%c46, %c0_130, %c0_131] : memref<125x8x512xf32, #tpu.memory_space<vmem>>, vector<1x8x512xf32>
    %281 = vector.shape_cast %280 : vector<1x8x512xf32> to vector<8x512xf32>
    %282 = arith.mulf %279, %281 : vector<8x512xf32>
    %283 = arith.addf %278, %282 : vector<8x512xf32>
    %c48_i32 = arith.constant 48 : i32
    %284 = tpu.dynamic_rotate %9 by %c48_i32 dim 1 : vector<8x512xf32>, i32 -> vector<8x512xf32>
    %c47 = arith.constant 47 : index
    %c0_132 = arith.constant 0 : index
    %c0_133 = arith.constant 0 : index
    %285 = vector.load %arg6[%c47, %c0_132, %c0_133] : memref<125x8x512xf32, #tpu.memory_space<vmem>>, vector<1x8x512xf32>
    %286 = vector.shape_cast %285 : vector<1x8x512xf32> to vector<8x512xf32>
    %287 = arith.mulf %284, %286 : vector<8x512xf32>
    %288 = arith.addf %283, %287 : vector<8x512xf32>
    %c47_i32 = arith.constant 47 : i32
    %289 = tpu.dynamic_rotate %9 by %c47_i32 dim 1 : vector<8x512xf32>, i32 -> vector<8x512xf32>
    %c48 = arith.constant 48 : index
    %c0_134 = arith.constant 0 : index
    %c0_135 = arith.constant 0 : index
    %290 = vector.load %arg6[%c48, %c0_134, %c0_135] : memref<125x8x512xf32, #tpu.memory_space<vmem>>, vector<1x8x512xf32>
    %291 = vector.shape_cast %290 : vector<1x8x512xf32> to vector<8x512xf32>
    %292 = arith.mulf %289, %291 : vector<8x512xf32>
    %293 = arith.addf %288, %292 : vector<8x512xf32>
    %c46_i32 = arith.constant 46 : i32
    %294 = tpu.dynamic_rotate %9 by %c46_i32 dim 1 : vector<8x512xf32>, i32 -> vector<8x512xf32>
    %c49 = arith.constant 49 : index
    %c0_136 = arith.constant 0 : index
    %c0_137 = arith.constant 0 : index
    %295 = vector.load %arg6[%c49, %c0_136, %c0_137] : memref<125x8x512xf32, #tpu.memory_space<vmem>>, vector<1x8x512xf32>
    %296 = vector.shape_cast %295 : vector<1x8x512xf32> to vector<8x512xf32>
    %297 = arith.mulf %294, %296 : vector<8x512xf32>
    %298 = arith.addf %293, %297 : vector<8x512xf32>
    %c18_i32 = arith.constant 18 : i32
    %299 = tpu.dynamic_rotate %9 by %c18_i32 dim 1 : vector<8x512xf32>, i32 -> vector<8x512xf32>
    %c50 = arith.constant 50 : index
    %c0_138 = arith.constant 0 : index
    %c0_139 = arith.constant 0 : index
    %300 = vector.load %arg6[%c50, %c0_138, %c0_139] : memref<125x8x512xf32, #tpu.memory_space<vmem>>, vector<1x8x512xf32>
    %301 = vector.shape_cast %300 : vector<1x8x512xf32> to vector<8x512xf32>
    %302 = arith.mulf %299, %301 : vector<8x512xf32>
    %303 = arith.addf %298, %302 : vector<8x512xf32>
    %c17_i32 = arith.constant 17 : i32
    %304 = tpu.dynamic_rotate %9 by %c17_i32 dim 1 : vector<8x512xf32>, i32 -> vector<8x512xf32>
    %c51 = arith.constant 51 : index
    %c0_140 = arith.constant 0 : index
    %c0_141 = arith.constant 0 : index
    %305 = vector.load %arg6[%c51, %c0_140, %c0_141] : memref<125x8x512xf32, #tpu.memory_space<vmem>>, vector<1x8x512xf32>
    %306 = vector.shape_cast %305 : vector<1x8x512xf32> to vector<8x512xf32>
    %307 = arith.mulf %304, %306 : vector<8x512xf32>
    %308 = arith.addf %303, %307 : vector<8x512xf32>
    %c16_i32 = arith.constant 16 : i32
    %309 = tpu.dynamic_rotate %9 by %c16_i32 dim 1 : vector<8x512xf32>, i32 -> vector<8x512xf32>
    %c52 = arith.constant 52 : index
    %c0_142 = arith.constant 0 : index
    %c0_143 = arith.constant 0 : index
    %310 = vector.load %arg6[%c52, %c0_142, %c0_143] : memref<125x8x512xf32, #tpu.memory_space<vmem>>, vector<1x8x512xf32>
    %311 = vector.shape_cast %310 : vector<1x8x512xf32> to vector<8x512xf32>
    %312 = arith.mulf %309, %311 : vector<8x512xf32>
    %313 = arith.addf %308, %312 : vector<8x512xf32>
    %c15_i32 = arith.constant 15 : i32
    %314 = tpu.dynamic_rotate %9 by %c15_i32 dim 1 : vector<8x512xf32>, i32 -> vector<8x512xf32>
    %c53 = arith.constant 53 : index
    %c0_144 = arith.constant 0 : index
    %c0_145 = arith.constant 0 : index
    %315 = vector.load %arg6[%c53, %c0_144, %c0_145] : memref<125x8x512xf32, #tpu.memory_space<vmem>>, vector<1x8x512xf32>
    %316 = vector.shape_cast %315 : vector<1x8x512xf32> to vector<8x512xf32>
    %317 = arith.mulf %314, %316 : vector<8x512xf32>
    %318 = arith.addf %313, %317 : vector<8x512xf32>
    %c14_i32 = arith.constant 14 : i32
    %319 = tpu.dynamic_rotate %9 by %c14_i32 dim 1 : vector<8x512xf32>, i32 -> vector<8x512xf32>
    %c54 = arith.constant 54 : index
    %c0_146 = arith.constant 0 : index
    %c0_147 = arith.constant 0 : index
    %320 = vector.load %arg6[%c54, %c0_146, %c0_147] : memref<125x8x512xf32, #tpu.memory_space<vmem>>, vector<1x8x512xf32>
    %321 = vector.shape_cast %320 : vector<1x8x512xf32> to vector<8x512xf32>
    %322 = arith.mulf %319, %321 : vector<8x512xf32>
    %323 = arith.addf %318, %322 : vector<8x512xf32>
    %c10_i32 = arith.constant 10 : i32
    %324 = tpu.dynamic_rotate %9 by %c10_i32 dim 1 : vector<8x512xf32>, i32 -> vector<8x512xf32>
    %c55 = arith.constant 55 : index
    %c0_148 = arith.constant 0 : index
    %c0_149 = arith.constant 0 : index
    %325 = vector.load %arg6[%c55, %c0_148, %c0_149] : memref<125x8x512xf32, #tpu.memory_space<vmem>>, vector<1x8x512xf32>
    %326 = vector.shape_cast %325 : vector<1x8x512xf32> to vector<8x512xf32>
    %327 = arith.mulf %324, %326 : vector<8x512xf32>
    %328 = arith.addf %323, %327 : vector<8x512xf32>
    %c9_i32 = arith.constant 9 : i32
    %329 = tpu.dynamic_rotate %9 by %c9_i32 dim 1 : vector<8x512xf32>, i32 -> vector<8x512xf32>
    %c9_150 = arith.constant 9 : index
    %c0_151 = arith.constant 0 : index
    %c0_152 = arith.constant 0 : index
    %330 = vector.load %arg5[%c9_150, %c0_151, %c0_152] : memref<27x8x512xf32, #tpu.memory_space<vmem>>, vector<1x8x512xf32>
    %331 = vector.shape_cast %330 : vector<1x8x512xf32> to vector<8x512xf32>
    %332 = arith.mulf %329, %331 : vector<8x512xf32>
    %333 = arith.addf %264, %332 : vector<8x512xf32>
    %c56 = arith.constant 56 : index
    %c0_153 = arith.constant 0 : index
    %c0_154 = arith.constant 0 : index
    %334 = vector.load %arg6[%c56, %c0_153, %c0_154] : memref<125x8x512xf32, #tpu.memory_space<vmem>>, vector<1x8x512xf32>
    %335 = vector.shape_cast %334 : vector<1x8x512xf32> to vector<8x512xf32>
    %336 = arith.mulf %329, %335 : vector<8x512xf32>
    %337 = arith.addf %328, %336 : vector<8x512xf32>
    %c8_i32 = arith.constant 8 : i32
    %338 = tpu.dynamic_rotate %9 by %c8_i32 dim 1 : vector<8x512xf32>, i32 -> vector<8x512xf32>
    %c10_155 = arith.constant 10 : index
    %c0_156 = arith.constant 0 : index
    %c0_157 = arith.constant 0 : index
    %339 = vector.load %arg5[%c10_155, %c0_156, %c0_157] : memref<27x8x512xf32, #tpu.memory_space<vmem>>, vector<1x8x512xf32>
    %340 = vector.shape_cast %339 : vector<1x8x512xf32> to vector<8x512xf32>
    %341 = arith.mulf %338, %340 : vector<8x512xf32>
    %342 = arith.addf %333, %341 : vector<8x512xf32>
    %c57 = arith.constant 57 : index
    %c0_158 = arith.constant 0 : index
    %c0_159 = arith.constant 0 : index
    %343 = vector.load %arg6[%c57, %c0_158, %c0_159] : memref<125x8x512xf32, #tpu.memory_space<vmem>>, vector<1x8x512xf32>
    %344 = vector.shape_cast %343 : vector<1x8x512xf32> to vector<8x512xf32>
    %345 = arith.mulf %338, %344 : vector<8x512xf32>
    %346 = arith.addf %337, %345 : vector<8x512xf32>
    %c7_i32 = arith.constant 7 : i32
    %347 = tpu.dynamic_rotate %9 by %c7_i32 dim 1 : vector<8x512xf32>, i32 -> vector<8x512xf32>
    %c11_160 = arith.constant 11 : index
    %c0_161 = arith.constant 0 : index
    %c0_162 = arith.constant 0 : index
    %348 = vector.load %arg5[%c11_160, %c0_161, %c0_162] : memref<27x8x512xf32, #tpu.memory_space<vmem>>, vector<1x8x512xf32>
    %349 = vector.shape_cast %348 : vector<1x8x512xf32> to vector<8x512xf32>
    %350 = arith.mulf %347, %349 : vector<8x512xf32>
    %351 = arith.addf %342, %350 : vector<8x512xf32>
    %c58 = arith.constant 58 : index
    %c0_163 = arith.constant 0 : index
    %c0_164 = arith.constant 0 : index
    %352 = vector.load %arg6[%c58, %c0_163, %c0_164] : memref<125x8x512xf32, #tpu.memory_space<vmem>>, vector<1x8x512xf32>
    %353 = vector.shape_cast %352 : vector<1x8x512xf32> to vector<8x512xf32>
    %354 = arith.mulf %347, %353 : vector<8x512xf32>
    %355 = arith.addf %346, %354 : vector<8x512xf32>
    %c6_i32 = arith.constant 6 : i32
    %356 = tpu.dynamic_rotate %9 by %c6_i32 dim 1 : vector<8x512xf32>, i32 -> vector<8x512xf32>
    %c59 = arith.constant 59 : index
    %c0_165 = arith.constant 0 : index
    %c0_166 = arith.constant 0 : index
    %357 = vector.load %arg6[%c59, %c0_165, %c0_166] : memref<125x8x512xf32, #tpu.memory_space<vmem>>, vector<1x8x512xf32>
    %358 = vector.shape_cast %357 : vector<1x8x512xf32> to vector<8x512xf32>
    %359 = arith.mulf %356, %358 : vector<8x512xf32>
    %360 = arith.addf %355, %359 : vector<8x512xf32>
    %c2_i32 = arith.constant 2 : i32
    %361 = tpu.dynamic_rotate %9 by %c2_i32 dim 1 : vector<8x512xf32>, i32 -> vector<8x512xf32>
    %c60 = arith.constant 60 : index
    %c0_167 = arith.constant 0 : index
    %c0_168 = arith.constant 0 : index
    %362 = vector.load %arg6[%c60, %c0_167, %c0_168] : memref<125x8x512xf32, #tpu.memory_space<vmem>>, vector<1x8x512xf32>
    %363 = vector.shape_cast %362 : vector<1x8x512xf32> to vector<8x512xf32>
    %364 = arith.mulf %361, %363 : vector<8x512xf32>
    %365 = arith.addf %360, %364 : vector<8x512xf32>
    %c1_i32 = arith.constant 1 : i32
    %366 = tpu.dynamic_rotate %9 by %c1_i32 dim 1 : vector<8x512xf32>, i32 -> vector<8x512xf32>
    %c12_169 = arith.constant 12 : index
    %c0_170 = arith.constant 0 : index
    %c0_171 = arith.constant 0 : index
    %367 = vector.load %arg5[%c12_169, %c0_170, %c0_171] : memref<27x8x512xf32, #tpu.memory_space<vmem>>, vector<1x8x512xf32>
    %368 = vector.shape_cast %367 : vector<1x8x512xf32> to vector<8x512xf32>
    %369 = arith.mulf %366, %368 : vector<8x512xf32>
    %370 = arith.addf %351, %369 : vector<8x512xf32>
    %c61 = arith.constant 61 : index
    %c0_172 = arith.constant 0 : index
    %c0_173 = arith.constant 0 : index
    %371 = vector.load %arg6[%c61, %c0_172, %c0_173] : memref<125x8x512xf32, #tpu.memory_space<vmem>>, vector<1x8x512xf32>
    %372 = vector.shape_cast %371 : vector<1x8x512xf32> to vector<8x512xf32>
    %373 = arith.mulf %366, %372 : vector<8x512xf32>
    %374 = arith.addf %365, %373 : vector<8x512xf32>
    %c0_174 = arith.constant 0 : index
    %c0_175 = arith.constant 0 : index
    %c0_176 = arith.constant 0 : index
    %375 = vector.load %arg4[%c0_174, %c0_175, %c0_176] : memref<1x8x512xf32, #tpu.memory_space<vmem>>, vector<1x8x512xf32>
    %376 = vector.shape_cast %375 : vector<1x8x512xf32> to vector<8x512xf32>
    %377 = arith.mulf %9, %376 : vector<8x512xf32>
    %378 = arith.addf %10, %377 : vector<8x512xf32>
    %c13_177 = arith.constant 13 : index
    %c0_178 = arith.constant 0 : index
    %c0_179 = arith.constant 0 : index
    %379 = vector.load %arg5[%c13_177, %c0_178, %c0_179] : memref<27x8x512xf32, #tpu.memory_space<vmem>>, vector<1x8x512xf32>
    %380 = vector.shape_cast %379 : vector<1x8x512xf32> to vector<8x512xf32>
    %381 = arith.mulf %9, %380 : vector<8x512xf32>
    %382 = arith.addf %370, %381 : vector<8x512xf32>
    %c62 = arith.constant 62 : index
    %c0_180 = arith.constant 0 : index
    %c0_181 = arith.constant 0 : index
    %383 = vector.load %arg6[%c62, %c0_180, %c0_181] : memref<125x8x512xf32, #tpu.memory_space<vmem>>, vector<1x8x512xf32>
    %384 = vector.shape_cast %383 : vector<1x8x512xf32> to vector<8x512xf32>
    %385 = arith.mulf %9, %384 : vector<8x512xf32>
    %386 = arith.addf %374, %385 : vector<8x512xf32>
    %c511_i32 = arith.constant 511 : i32
    %387 = tpu.dynamic_rotate %9 by %c511_i32 dim 1 : vector<8x512xf32>, i32 -> vector<8x512xf32>
    %c14_182 = arith.constant 14 : index
    %c0_183 = arith.constant 0 : index
    %c0_184 = arith.constant 0 : index
    %388 = vector.load %arg5[%c14_182, %c0_183, %c0_184] : memref<27x8x512xf32, #tpu.memory_space<vmem>>, vector<1x8x512xf32>
    %389 = vector.shape_cast %388 : vector<1x8x512xf32> to vector<8x512xf32>
    %390 = arith.mulf %387, %389 : vector<8x512xf32>
    %391 = arith.addf %382, %390 : vector<8x512xf32>
    %c63 = arith.constant 63 : index
    %c0_185 = arith.constant 0 : index
    %c0_186 = arith.constant 0 : index
    %392 = vector.load %arg6[%c63, %c0_185, %c0_186] : memref<125x8x512xf32, #tpu.memory_space<vmem>>, vector<1x8x512xf32>
    %393 = vector.shape_cast %392 : vector<1x8x512xf32> to vector<8x512xf32>
    %394 = arith.mulf %387, %393 : vector<8x512xf32>
    %395 = arith.addf %386, %394 : vector<8x512xf32>
    %c510_i32 = arith.constant 510 : i32
    %396 = tpu.dynamic_rotate %9 by %c510_i32 dim 1 : vector<8x512xf32>, i32 -> vector<8x512xf32>
    %c64 = arith.constant 64 : index
    %c0_187 = arith.constant 0 : index
    %c0_188 = arith.constant 0 : index
    %397 = vector.load %arg6[%c64, %c0_187, %c0_188] : memref<125x8x512xf32, #tpu.memory_space<vmem>>, vector<1x8x512xf32>
    %398 = vector.shape_cast %397 : vector<1x8x512xf32> to vector<8x512xf32>
    %399 = arith.mulf %396, %398 : vector<8x512xf32>
    %400 = arith.addf %395, %399 : vector<8x512xf32>
    %c506_i32 = arith.constant 506 : i32
    %401 = tpu.dynamic_rotate %9 by %c506_i32 dim 1 : vector<8x512xf32>, i32 -> vector<8x512xf32>
    %c65 = arith.constant 65 : index
    %c0_189 = arith.constant 0 : index
    %c0_190 = arith.constant 0 : index
    %402 = vector.load %arg6[%c65, %c0_189, %c0_190] : memref<125x8x512xf32, #tpu.memory_space<vmem>>, vector<1x8x512xf32>
    %403 = vector.shape_cast %402 : vector<1x8x512xf32> to vector<8x512xf32>
    %404 = arith.mulf %401, %403 : vector<8x512xf32>
    %405 = arith.addf %400, %404 : vector<8x512xf32>
    %c505_i32 = arith.constant 505 : i32
    %406 = tpu.dynamic_rotate %9 by %c505_i32 dim 1 : vector<8x512xf32>, i32 -> vector<8x512xf32>
    %c15_191 = arith.constant 15 : index
    %c0_192 = arith.constant 0 : index
    %c0_193 = arith.constant 0 : index
    %407 = vector.load %arg5[%c15_191, %c0_192, %c0_193] : memref<27x8x512xf32, #tpu.memory_space<vmem>>, vector<1x8x512xf32>
    %408 = vector.shape_cast %407 : vector<1x8x512xf32> to vector<8x512xf32>
    %409 = arith.mulf %406, %408 : vector<8x512xf32>
    %410 = arith.addf %391, %409 : vector<8x512xf32>
    %c66 = arith.constant 66 : index
    %c0_194 = arith.constant 0 : index
    %c0_195 = arith.constant 0 : index
    %411 = vector.load %arg6[%c66, %c0_194, %c0_195] : memref<125x8x512xf32, #tpu.memory_space<vmem>>, vector<1x8x512xf32>
    %412 = vector.shape_cast %411 : vector<1x8x512xf32> to vector<8x512xf32>
    %413 = arith.mulf %406, %412 : vector<8x512xf32>
    %414 = arith.addf %405, %413 : vector<8x512xf32>
    %c504_i32 = arith.constant 504 : i32
    %415 = tpu.dynamic_rotate %9 by %c504_i32 dim 1 : vector<8x512xf32>, i32 -> vector<8x512xf32>
    %c16_196 = arith.constant 16 : index
    %c0_197 = arith.constant 0 : index
    %c0_198 = arith.constant 0 : index
    %416 = vector.load %arg5[%c16_196, %c0_197, %c0_198] : memref<27x8x512xf32, #tpu.memory_space<vmem>>, vector<1x8x512xf32>
    %417 = vector.shape_cast %416 : vector<1x8x512xf32> to vector<8x512xf32>
    %418 = arith.mulf %415, %417 : vector<8x512xf32>
    %419 = arith.addf %410, %418 : vector<8x512xf32>
    %c67 = arith.constant 67 : index
    %c0_199 = arith.constant 0 : index
    %c0_200 = arith.constant 0 : index
    %420 = vector.load %arg6[%c67, %c0_199, %c0_200] : memref<125x8x512xf32, #tpu.memory_space<vmem>>, vector<1x8x512xf32>
    %421 = vector.shape_cast %420 : vector<1x8x512xf32> to vector<8x512xf32>
    %422 = arith.mulf %415, %421 : vector<8x512xf32>
    %423 = arith.addf %414, %422 : vector<8x512xf32>
    %c503_i32 = arith.constant 503 : i32
    %424 = tpu.dynamic_rotate %9 by %c503_i32 dim 1 : vector<8x512xf32>, i32 -> vector<8x512xf32>
    %c17_201 = arith.constant 17 : index
    %c0_202 = arith.constant 0 : index
    %c0_203 = arith.constant 0 : index
    %425 = vector.load %arg5[%c17_201, %c0_202, %c0_203] : memref<27x8x512xf32, #tpu.memory_space<vmem>>, vector<1x8x512xf32>
    %426 = vector.shape_cast %425 : vector<1x8x512xf32> to vector<8x512xf32>
    %427 = arith.mulf %424, %426 : vector<8x512xf32>
    %428 = arith.addf %419, %427 : vector<8x512xf32>
    %c68 = arith.constant 68 : index
    %c0_204 = arith.constant 0 : index
    %c0_205 = arith.constant 0 : index
    %429 = vector.load %arg6[%c68, %c0_204, %c0_205] : memref<125x8x512xf32, #tpu.memory_space<vmem>>, vector<1x8x512xf32>
    %430 = vector.shape_cast %429 : vector<1x8x512xf32> to vector<8x512xf32>
    %431 = arith.mulf %424, %430 : vector<8x512xf32>
    %432 = arith.addf %423, %431 : vector<8x512xf32>
    %c502_i32 = arith.constant 502 : i32
    %433 = tpu.dynamic_rotate %9 by %c502_i32 dim 1 : vector<8x512xf32>, i32 -> vector<8x512xf32>
    %c69 = arith.constant 69 : index
    %c0_206 = arith.constant 0 : index
    %c0_207 = arith.constant 0 : index
    %434 = vector.load %arg6[%c69, %c0_206, %c0_207] : memref<125x8x512xf32, #tpu.memory_space<vmem>>, vector<1x8x512xf32>
    %435 = vector.shape_cast %434 : vector<1x8x512xf32> to vector<8x512xf32>
    %436 = arith.mulf %433, %435 : vector<8x512xf32>
    %437 = arith.addf %432, %436 : vector<8x512xf32>
    %c498_i32 = arith.constant 498 : i32
    %438 = tpu.dynamic_rotate %9 by %c498_i32 dim 1 : vector<8x512xf32>, i32 -> vector<8x512xf32>
    %c70 = arith.constant 70 : index
    %c0_208 = arith.constant 0 : index
    %c0_209 = arith.constant 0 : index
    %439 = vector.load %arg6[%c70, %c0_208, %c0_209] : memref<125x8x512xf32, #tpu.memory_space<vmem>>, vector<1x8x512xf32>
    %440 = vector.shape_cast %439 : vector<1x8x512xf32> to vector<8x512xf32>
    %441 = arith.mulf %438, %440 : vector<8x512xf32>
    %442 = arith.addf %437, %441 : vector<8x512xf32>
    %c497_i32 = arith.constant 497 : i32
    %443 = tpu.dynamic_rotate %9 by %c497_i32 dim 1 : vector<8x512xf32>, i32 -> vector<8x512xf32>
    %c71 = arith.constant 71 : index
    %c0_210 = arith.constant 0 : index
    %c0_211 = arith.constant 0 : index
    %444 = vector.load %arg6[%c71, %c0_210, %c0_211] : memref<125x8x512xf32, #tpu.memory_space<vmem>>, vector<1x8x512xf32>
    %445 = vector.shape_cast %444 : vector<1x8x512xf32> to vector<8x512xf32>
    %446 = arith.mulf %443, %445 : vector<8x512xf32>
    %447 = arith.addf %442, %446 : vector<8x512xf32>
    %c496_i32 = arith.constant 496 : i32
    %448 = tpu.dynamic_rotate %9 by %c496_i32 dim 1 : vector<8x512xf32>, i32 -> vector<8x512xf32>
    %c72 = arith.constant 72 : index
    %c0_212 = arith.constant 0 : index
    %c0_213 = arith.constant 0 : index
    %449 = vector.load %arg6[%c72, %c0_212, %c0_213] : memref<125x8x512xf32, #tpu.memory_space<vmem>>, vector<1x8x512xf32>
    %450 = vector.shape_cast %449 : vector<1x8x512xf32> to vector<8x512xf32>
    %451 = arith.mulf %448, %450 : vector<8x512xf32>
    %452 = arith.addf %447, %451 : vector<8x512xf32>
    %c495_i32 = arith.constant 495 : i32
    %453 = tpu.dynamic_rotate %9 by %c495_i32 dim 1 : vector<8x512xf32>, i32 -> vector<8x512xf32>
    %c73 = arith.constant 73 : index
    %c0_214 = arith.constant 0 : index
    %c0_215 = arith.constant 0 : index
    %454 = vector.load %arg6[%c73, %c0_214, %c0_215] : memref<125x8x512xf32, #tpu.memory_space<vmem>>, vector<1x8x512xf32>
    %455 = vector.shape_cast %454 : vector<1x8x512xf32> to vector<8x512xf32>
    %456 = arith.mulf %453, %455 : vector<8x512xf32>
    %457 = arith.addf %452, %456 : vector<8x512xf32>
    %c494_i32 = arith.constant 494 : i32
    %458 = tpu.dynamic_rotate %9 by %c494_i32 dim 1 : vector<8x512xf32>, i32 -> vector<8x512xf32>
    %c74 = arith.constant 74 : index
    %c0_216 = arith.constant 0 : index
    %c0_217 = arith.constant 0 : index
    %459 = vector.load %arg6[%c74, %c0_216, %c0_217] : memref<125x8x512xf32, #tpu.memory_space<vmem>>, vector<1x8x512xf32>
    %460 = vector.shape_cast %459 : vector<1x8x512xf32> to vector<8x512xf32>
    %461 = arith.mulf %458, %460 : vector<8x512xf32>
    %462 = arith.addf %457, %461 : vector<8x512xf32>
    %c466_i32 = arith.constant 466 : i32
    %463 = tpu.dynamic_rotate %9 by %c466_i32 dim 1 : vector<8x512xf32>, i32 -> vector<8x512xf32>
    %c75 = arith.constant 75 : index
    %c0_218 = arith.constant 0 : index
    %c0_219 = arith.constant 0 : index
    %464 = vector.load %arg6[%c75, %c0_218, %c0_219] : memref<125x8x512xf32, #tpu.memory_space<vmem>>, vector<1x8x512xf32>
    %465 = vector.shape_cast %464 : vector<1x8x512xf32> to vector<8x512xf32>
    %466 = arith.mulf %463, %465 : vector<8x512xf32>
    %467 = arith.addf %462, %466 : vector<8x512xf32>
    %c465_i32 = arith.constant 465 : i32
    %468 = tpu.dynamic_rotate %9 by %c465_i32 dim 1 : vector<8x512xf32>, i32 -> vector<8x512xf32>
    %c76 = arith.constant 76 : index
    %c0_220 = arith.constant 0 : index
    %c0_221 = arith.constant 0 : index
    %469 = vector.load %arg6[%c76, %c0_220, %c0_221] : memref<125x8x512xf32, #tpu.memory_space<vmem>>, vector<1x8x512xf32>
    %470 = vector.shape_cast %469 : vector<1x8x512xf32> to vector<8x512xf32>
    %471 = arith.mulf %468, %470 : vector<8x512xf32>
    %472 = arith.addf %467, %471 : vector<8x512xf32>
    %c464_i32 = arith.constant 464 : i32
    %473 = tpu.dynamic_rotate %9 by %c464_i32 dim 1 : vector<8x512xf32>, i32 -> vector<8x512xf32>
    %c77 = arith.constant 77 : index
    %c0_222 = arith.constant 0 : index
    %c0_223 = arith.constant 0 : index
    %474 = vector.load %arg6[%c77, %c0_222, %c0_223] : memref<125x8x512xf32, #tpu.memory_space<vmem>>, vector<1x8x512xf32>
    %475 = vector.shape_cast %474 : vector<1x8x512xf32> to vector<8x512xf32>
    %476 = arith.mulf %473, %475 : vector<8x512xf32>
    %477 = arith.addf %472, %476 : vector<8x512xf32>
    %c463_i32 = arith.constant 463 : i32
    %478 = tpu.dynamic_rotate %9 by %c463_i32 dim 1 : vector<8x512xf32>, i32 -> vector<8x512xf32>
    %c78 = arith.constant 78 : index
    %c0_224 = arith.constant 0 : index
    %c0_225 = arith.constant 0 : index
    %479 = vector.load %arg6[%c78, %c0_224, %c0_225] : memref<125x8x512xf32, #tpu.memory_space<vmem>>, vector<1x8x512xf32>
    %480 = vector.shape_cast %479 : vector<1x8x512xf32> to vector<8x512xf32>
    %481 = arith.mulf %478, %480 : vector<8x512xf32>
    %482 = arith.addf %477, %481 : vector<8x512xf32>
    %c462_i32 = arith.constant 462 : i32
    %483 = tpu.dynamic_rotate %9 by %c462_i32 dim 1 : vector<8x512xf32>, i32 -> vector<8x512xf32>
    %c79 = arith.constant 79 : index
    %c0_226 = arith.constant 0 : index
    %c0_227 = arith.constant 0 : index
    %484 = vector.load %arg6[%c79, %c0_226, %c0_227] : memref<125x8x512xf32, #tpu.memory_space<vmem>>, vector<1x8x512xf32>
    %485 = vector.shape_cast %484 : vector<1x8x512xf32> to vector<8x512xf32>
    %486 = arith.mulf %483, %485 : vector<8x512xf32>
    %487 = arith.addf %482, %486 : vector<8x512xf32>
    %c458_i32 = arith.constant 458 : i32
    %488 = tpu.dynamic_rotate %9 by %c458_i32 dim 1 : vector<8x512xf32>, i32 -> vector<8x512xf32>
    %c80 = arith.constant 80 : index
    %c0_228 = arith.constant 0 : index
    %c0_229 = arith.constant 0 : index
    %489 = vector.load %arg6[%c80, %c0_228, %c0_229] : memref<125x8x512xf32, #tpu.memory_space<vmem>>, vector<1x8x512xf32>
    %490 = vector.shape_cast %489 : vector<1x8x512xf32> to vector<8x512xf32>
    %491 = arith.mulf %488, %490 : vector<8x512xf32>
    %492 = arith.addf %487, %491 : vector<8x512xf32>
    %c457_i32 = arith.constant 457 : i32
    %493 = tpu.dynamic_rotate %9 by %c457_i32 dim 1 : vector<8x512xf32>, i32 -> vector<8x512xf32>
    %c18_230 = arith.constant 18 : index
    %c0_231 = arith.constant 0 : index
    %c0_232 = arith.constant 0 : index
    %494 = vector.load %arg5[%c18_230, %c0_231, %c0_232] : memref<27x8x512xf32, #tpu.memory_space<vmem>>, vector<1x8x512xf32>
    %495 = vector.shape_cast %494 : vector<1x8x512xf32> to vector<8x512xf32>
    %496 = arith.mulf %493, %495 : vector<8x512xf32>
    %497 = arith.addf %428, %496 : vector<8x512xf32>
    %c81 = arith.constant 81 : index
    %c0_233 = arith.constant 0 : index
    %c0_234 = arith.constant 0 : index
    %498 = vector.load %arg6[%c81, %c0_233, %c0_234] : memref<125x8x512xf32, #tpu.memory_space<vmem>>, vector<1x8x512xf32>
    %499 = vector.shape_cast %498 : vector<1x8x512xf32> to vector<8x512xf32>
    %500 = arith.mulf %493, %499 : vector<8x512xf32>
    %501 = arith.addf %492, %500 : vector<8x512xf32>
    %c456_i32 = arith.constant 456 : i32
    %502 = tpu.dynamic_rotate %9 by %c456_i32 dim 1 : vector<8x512xf32>, i32 -> vector<8x512xf32>
    %c19_235 = arith.constant 19 : index
    %c0_236 = arith.constant 0 : index
    %c0_237 = arith.constant 0 : index
    %503 = vector.load %arg5[%c19_235, %c0_236, %c0_237] : memref<27x8x512xf32, #tpu.memory_space<vmem>>, vector<1x8x512xf32>
    %504 = vector.shape_cast %503 : vector<1x8x512xf32> to vector<8x512xf32>
    %505 = arith.mulf %502, %504 : vector<8x512xf32>
    %506 = arith.addf %497, %505 : vector<8x512xf32>
    %c82 = arith.constant 82 : index
    %c0_238 = arith.constant 0 : index
    %c0_239 = arith.constant 0 : index
    %507 = vector.load %arg6[%c82, %c0_238, %c0_239] : memref<125x8x512xf32, #tpu.memory_space<vmem>>, vector<1x8x512xf32>
    %508 = vector.shape_cast %507 : vector<1x8x512xf32> to vector<8x512xf32>
    %509 = arith.mulf %502, %508 : vector<8x512xf32>
    %510 = arith.addf %501, %509 : vector<8x512xf32>
    %c455_i32 = arith.constant 455 : i32
    %511 = tpu.dynamic_rotate %9 by %c455_i32 dim 1 : vector<8x512xf32>, i32 -> vector<8x512xf32>
    %c20_240 = arith.constant 20 : index
    %c0_241 = arith.constant 0 : index
    %c0_242 = arith.constant 0 : index
    %512 = vector.load %arg5[%c20_240, %c0_241, %c0_242] : memref<27x8x512xf32, #tpu.memory_space<vmem>>, vector<1x8x512xf32>
    %513 = vector.shape_cast %512 : vector<1x8x512xf32> to vector<8x512xf32>
    %514 = arith.mulf %511, %513 : vector<8x512xf32>
    %515 = arith.addf %506, %514 : vector<8x512xf32>
    %c83 = arith.constant 83 : index
    %c0_243 = arith.constant 0 : index
    %c0_244 = arith.constant 0 : index
    %516 = vector.load %arg6[%c83, %c0_243, %c0_244] : memref<125x8x512xf32, #tpu.memory_space<vmem>>, vector<1x8x512xf32>
    %517 = vector.shape_cast %516 : vector<1x8x512xf32> to vector<8x512xf32>
    %518 = arith.mulf %511, %517 : vector<8x512xf32>
    %519 = arith.addf %510, %518 : vector<8x512xf32>
    %c454_i32 = arith.constant 454 : i32
    %520 = tpu.dynamic_rotate %9 by %c454_i32 dim 1 : vector<8x512xf32>, i32 -> vector<8x512xf32>
    %c84 = arith.constant 84 : index
    %c0_245 = arith.constant 0 : index
    %c0_246 = arith.constant 0 : index
    %521 = vector.load %arg6[%c84, %c0_245, %c0_246] : memref<125x8x512xf32, #tpu.memory_space<vmem>>, vector<1x8x512xf32>
    %522 = vector.shape_cast %521 : vector<1x8x512xf32> to vector<8x512xf32>
    %523 = arith.mulf %520, %522 : vector<8x512xf32>
    %524 = arith.addf %519, %523 : vector<8x512xf32>
    %c450_i32 = arith.constant 450 : i32
    %525 = tpu.dynamic_rotate %9 by %c450_i32 dim 1 : vector<8x512xf32>, i32 -> vector<8x512xf32>
    %c85 = arith.constant 85 : index
    %c0_247 = arith.constant 0 : index
    %c0_248 = arith.constant 0 : index
    %526 = vector.load %arg6[%c85, %c0_247, %c0_248] : memref<125x8x512xf32, #tpu.memory_space<vmem>>, vector<1x8x512xf32>
    %527 = vector.shape_cast %526 : vector<1x8x512xf32> to vector<8x512xf32>
    %528 = arith.mulf %525, %527 : vector<8x512xf32>
    %529 = arith.addf %524, %528 : vector<8x512xf32>
    %c449_i32 = arith.constant 449 : i32
    %530 = tpu.dynamic_rotate %9 by %c449_i32 dim 1 : vector<8x512xf32>, i32 -> vector<8x512xf32>
    %c21_249 = arith.constant 21 : index
    %c0_250 = arith.constant 0 : index
    %c0_251 = arith.constant 0 : index
    %531 = vector.load %arg5[%c21_249, %c0_250, %c0_251] : memref<27x8x512xf32, #tpu.memory_space<vmem>>, vector<1x8x512xf32>
    %532 = vector.shape_cast %531 : vector<1x8x512xf32> to vector<8x512xf32>
    %533 = arith.mulf %530, %532 : vector<8x512xf32>
    %534 = arith.addf %515, %533 : vector<8x512xf32>
    %c86 = arith.constant 86 : index
    %c0_252 = arith.constant 0 : index
    %c0_253 = arith.constant 0 : index
    %535 = vector.load %arg6[%c86, %c0_252, %c0_253] : memref<125x8x512xf32, #tpu.memory_space<vmem>>, vector<1x8x512xf32>
    %536 = vector.shape_cast %535 : vector<1x8x512xf32> to vector<8x512xf32>
    %537 = arith.mulf %530, %536 : vector<8x512xf32>
    %538 = arith.addf %529, %537 : vector<8x512xf32>
    %c448_i32 = arith.constant 448 : i32
    %539 = tpu.dynamic_rotate %9 by %c448_i32 dim 1 : vector<8x512xf32>, i32 -> vector<8x512xf32>
    %c22_254 = arith.constant 22 : index
    %c0_255 = arith.constant 0 : index
    %c0_256 = arith.constant 0 : index
    %540 = vector.load %arg5[%c22_254, %c0_255, %c0_256] : memref<27x8x512xf32, #tpu.memory_space<vmem>>, vector<1x8x512xf32>
    %541 = vector.shape_cast %540 : vector<1x8x512xf32> to vector<8x512xf32>
    %542 = arith.mulf %539, %541 : vector<8x512xf32>
    %543 = arith.addf %534, %542 : vector<8x512xf32>
    %c87 = arith.constant 87 : index
    %c0_257 = arith.constant 0 : index
    %c0_258 = arith.constant 0 : index
    %544 = vector.load %arg6[%c87, %c0_257, %c0_258] : memref<125x8x512xf32, #tpu.memory_space<vmem>>, vector<1x8x512xf32>
    %545 = vector.shape_cast %544 : vector<1x8x512xf32> to vector<8x512xf32>
    %546 = arith.mulf %539, %545 : vector<8x512xf32>
    %547 = arith.addf %538, %546 : vector<8x512xf32>
    %c447_i32 = arith.constant 447 : i32
    %548 = tpu.dynamic_rotate %9 by %c447_i32 dim 1 : vector<8x512xf32>, i32 -> vector<8x512xf32>
    %c23_259 = arith.constant 23 : index
    %c0_260 = arith.constant 0 : index
    %c0_261 = arith.constant 0 : index
    %549 = vector.load %arg5[%c23_259, %c0_260, %c0_261] : memref<27x8x512xf32, #tpu.memory_space<vmem>>, vector<1x8x512xf32>
    %550 = vector.shape_cast %549 : vector<1x8x512xf32> to vector<8x512xf32>
    %551 = arith.mulf %548, %550 : vector<8x512xf32>
    %552 = arith.addf %543, %551 : vector<8x512xf32>
    %c88 = arith.constant 88 : index
    %c0_262 = arith.constant 0 : index
    %c0_263 = arith.constant 0 : index
    %553 = vector.load %arg6[%c88, %c0_262, %c0_263] : memref<125x8x512xf32, #tpu.memory_space<vmem>>, vector<1x8x512xf32>
    %554 = vector.shape_cast %553 : vector<1x8x512xf32> to vector<8x512xf32>
    %555 = arith.mulf %548, %554 : vector<8x512xf32>
    %556 = arith.addf %547, %555 : vector<8x512xf32>
    %c446_i32 = arith.constant 446 : i32
    %557 = tpu.dynamic_rotate %9 by %c446_i32 dim 1 : vector<8x512xf32>, i32 -> vector<8x512xf32>
    %c89 = arith.constant 89 : index
    %c0_264 = arith.constant 0 : index
    %c0_265 = arith.constant 0 : index
    %558 = vector.load %arg6[%c89, %c0_264, %c0_265] : memref<125x8x512xf32, #tpu.memory_space<vmem>>, vector<1x8x512xf32>
    %559 = vector.shape_cast %558 : vector<1x8x512xf32> to vector<8x512xf32>
    %560 = arith.mulf %557, %559 : vector<8x512xf32>
    %561 = arith.addf %556, %560 : vector<8x512xf32>
    %c442_i32 = arith.constant 442 : i32
    %562 = tpu.dynamic_rotate %9 by %c442_i32 dim 1 : vector<8x512xf32>, i32 -> vector<8x512xf32>
    %c90 = arith.constant 90 : index
    %c0_266 = arith.constant 0 : index
    %c0_267 = arith.constant 0 : index
    %563 = vector.load %arg6[%c90, %c0_266, %c0_267] : memref<125x8x512xf32, #tpu.memory_space<vmem>>, vector<1x8x512xf32>
    %564 = vector.shape_cast %563 : vector<1x8x512xf32> to vector<8x512xf32>
    %565 = arith.mulf %562, %564 : vector<8x512xf32>
    %566 = arith.addf %561, %565 : vector<8x512xf32>
    %c441_i32 = arith.constant 441 : i32
    %567 = tpu.dynamic_rotate %9 by %c441_i32 dim 1 : vector<8x512xf32>, i32 -> vector<8x512xf32>
    %c24_268 = arith.constant 24 : index
    %c0_269 = arith.constant 0 : index
    %c0_270 = arith.constant 0 : index
    %568 = vector.load %arg5[%c24_268, %c0_269, %c0_270] : memref<27x8x512xf32, #tpu.memory_space<vmem>>, vector<1x8x512xf32>
    %569 = vector.shape_cast %568 : vector<1x8x512xf32> to vector<8x512xf32>
    %570 = arith.mulf %567, %569 : vector<8x512xf32>
    %571 = arith.addf %552, %570 : vector<8x512xf32>
    %c91 = arith.constant 91 : index
    %c0_271 = arith.constant 0 : index
    %c0_272 = arith.constant 0 : index
    %572 = vector.load %arg6[%c91, %c0_271, %c0_272] : memref<125x8x512xf32, #tpu.memory_space<vmem>>, vector<1x8x512xf32>
    %573 = vector.shape_cast %572 : vector<1x8x512xf32> to vector<8x512xf32>
    %574 = arith.mulf %567, %573 : vector<8x512xf32>
    %575 = arith.addf %566, %574 : vector<8x512xf32>
    %c440_i32 = arith.constant 440 : i32
    %576 = tpu.dynamic_rotate %9 by %c440_i32 dim 1 : vector<8x512xf32>, i32 -> vector<8x512xf32>
    %c25_273 = arith.constant 25 : index
    %c0_274 = arith.constant 0 : index
    %c0_275 = arith.constant 0 : index
    %577 = vector.load %arg5[%c25_273, %c0_274, %c0_275] : memref<27x8x512xf32, #tpu.memory_space<vmem>>, vector<1x8x512xf32>
    %578 = vector.shape_cast %577 : vector<1x8x512xf32> to vector<8x512xf32>
    %579 = arith.mulf %576, %578 : vector<8x512xf32>
    %580 = arith.addf %571, %579 : vector<8x512xf32>
    %c92 = arith.constant 92 : index
    %c0_276 = arith.constant 0 : index
    %c0_277 = arith.constant 0 : index
    %581 = vector.load %arg6[%c92, %c0_276, %c0_277] : memref<125x8x512xf32, #tpu.memory_space<vmem>>, vector<1x8x512xf32>
    %582 = vector.shape_cast %581 : vector<1x8x512xf32> to vector<8x512xf32>
    %583 = arith.mulf %576, %582 : vector<8x512xf32>
    %584 = arith.addf %575, %583 : vector<8x512xf32>
    %c439_i32 = arith.constant 439 : i32
    %585 = tpu.dynamic_rotate %9 by %c439_i32 dim 1 : vector<8x512xf32>, i32 -> vector<8x512xf32>
    %c26_278 = arith.constant 26 : index
    %c0_279 = arith.constant 0 : index
    %c0_280 = arith.constant 0 : index
    %586 = vector.load %arg5[%c26_278, %c0_279, %c0_280] : memref<27x8x512xf32, #tpu.memory_space<vmem>>, vector<1x8x512xf32>
    %587 = vector.shape_cast %586 : vector<1x8x512xf32> to vector<8x512xf32>
    %588 = arith.mulf %585, %587 : vector<8x512xf32>
    %589 = arith.addf %580, %588 : vector<8x512xf32>
    %c93 = arith.constant 93 : index
    %c0_281 = arith.constant 0 : index
    %c0_282 = arith.constant 0 : index
    %590 = vector.load %arg6[%c93, %c0_281, %c0_282] : memref<125x8x512xf32, #tpu.memory_space<vmem>>, vector<1x8x512xf32>
    %591 = vector.shape_cast %590 : vector<1x8x512xf32> to vector<8x512xf32>
    %592 = arith.mulf %585, %591 : vector<8x512xf32>
    %593 = arith.addf %584, %592 : vector<8x512xf32>
    %c438_i32 = arith.constant 438 : i32
    %594 = tpu.dynamic_rotate %9 by %c438_i32 dim 1 : vector<8x512xf32>, i32 -> vector<8x512xf32>
    %c94 = arith.constant 94 : index
    %c0_283 = arith.constant 0 : index
    %c0_284 = arith.constant 0 : index
    %595 = vector.load %arg6[%c94, %c0_283, %c0_284] : memref<125x8x512xf32, #tpu.memory_space<vmem>>, vector<1x8x512xf32>
    %596 = vector.shape_cast %595 : vector<1x8x512xf32> to vector<8x512xf32>
    %597 = arith.mulf %594, %596 : vector<8x512xf32>
    %598 = arith.addf %593, %597 : vector<8x512xf32>
    %c434_i32 = arith.constant 434 : i32
    %599 = tpu.dynamic_rotate %9 by %c434_i32 dim 1 : vector<8x512xf32>, i32 -> vector<8x512xf32>
    %c95 = arith.constant 95 : index
    %c0_285 = arith.constant 0 : index
    %c0_286 = arith.constant 0 : index
    %600 = vector.load %arg6[%c95, %c0_285, %c0_286] : memref<125x8x512xf32, #tpu.memory_space<vmem>>, vector<1x8x512xf32>
    %601 = vector.shape_cast %600 : vector<1x8x512xf32> to vector<8x512xf32>
    %602 = arith.mulf %599, %601 : vector<8x512xf32>
    %603 = arith.addf %598, %602 : vector<8x512xf32>
    %c433_i32 = arith.constant 433 : i32
    %604 = tpu.dynamic_rotate %9 by %c433_i32 dim 1 : vector<8x512xf32>, i32 -> vector<8x512xf32>
    %c96 = arith.constant 96 : index
    %c0_287 = arith.constant 0 : index
    %c0_288 = arith.constant 0 : index
    %605 = vector.load %arg6[%c96, %c0_287, %c0_288] : memref<125x8x512xf32, #tpu.memory_space<vmem>>, vector<1x8x512xf32>
    %606 = vector.shape_cast %605 : vector<1x8x512xf32> to vector<8x512xf32>
    %607 = arith.mulf %604, %606 : vector<8x512xf32>
    %608 = arith.addf %603, %607 : vector<8x512xf32>
    %c432_i32 = arith.constant 432 : i32
    %609 = tpu.dynamic_rotate %9 by %c432_i32 dim 1 : vector<8x512xf32>, i32 -> vector<8x512xf32>
    %c97 = arith.constant 97 : index
    %c0_289 = arith.constant 0 : index
    %c0_290 = arith.constant 0 : index
    %610 = vector.load %arg6[%c97, %c0_289, %c0_290] : memref<125x8x512xf32, #tpu.memory_space<vmem>>, vector<1x8x512xf32>
    %611 = vector.shape_cast %610 : vector<1x8x512xf32> to vector<8x512xf32>
    %612 = arith.mulf %609, %611 : vector<8x512xf32>
    %613 = arith.addf %608, %612 : vector<8x512xf32>
    %c431_i32 = arith.constant 431 : i32
    %614 = tpu.dynamic_rotate %9 by %c431_i32 dim 1 : vector<8x512xf32>, i32 -> vector<8x512xf32>
    %c98 = arith.constant 98 : index
    %c0_291 = arith.constant 0 : index
    %c0_292 = arith.constant 0 : index
    %615 = vector.load %arg6[%c98, %c0_291, %c0_292] : memref<125x8x512xf32, #tpu.memory_space<vmem>>, vector<1x8x512xf32>
    %616 = vector.shape_cast %615 : vector<1x8x512xf32> to vector<8x512xf32>
    %617 = arith.mulf %614, %616 : vector<8x512xf32>
    %618 = arith.addf %613, %617 : vector<8x512xf32>
    %c430_i32 = arith.constant 430 : i32
    %619 = tpu.dynamic_rotate %9 by %c430_i32 dim 1 : vector<8x512xf32>, i32 -> vector<8x512xf32>
    %c99 = arith.constant 99 : index
    %c0_293 = arith.constant 0 : index
    %c0_294 = arith.constant 0 : index
    %620 = vector.load %arg6[%c99, %c0_293, %c0_294] : memref<125x8x512xf32, #tpu.memory_space<vmem>>, vector<1x8x512xf32>
    %621 = vector.shape_cast %620 : vector<1x8x512xf32> to vector<8x512xf32>
    %622 = arith.mulf %619, %621 : vector<8x512xf32>
    %623 = arith.addf %618, %622 : vector<8x512xf32>
    %c402_i32 = arith.constant 402 : i32
    %624 = tpu.dynamic_rotate %9 by %c402_i32 dim 1 : vector<8x512xf32>, i32 -> vector<8x512xf32>
    %c100 = arith.constant 100 : index
    %c0_295 = arith.constant 0 : index
    %c0_296 = arith.constant 0 : index
    %625 = vector.load %arg6[%c100, %c0_295, %c0_296] : memref<125x8x512xf32, #tpu.memory_space<vmem>>, vector<1x8x512xf32>
    %626 = vector.shape_cast %625 : vector<1x8x512xf32> to vector<8x512xf32>
    %627 = arith.mulf %624, %626 : vector<8x512xf32>
    %628 = arith.addf %623, %627 : vector<8x512xf32>
    %c401_i32 = arith.constant 401 : i32
    %629 = tpu.dynamic_rotate %9 by %c401_i32 dim 1 : vector<8x512xf32>, i32 -> vector<8x512xf32>
    %c101 = arith.constant 101 : index
    %c0_297 = arith.constant 0 : index
    %c0_298 = arith.constant 0 : index
    %630 = vector.load %arg6[%c101, %c0_297, %c0_298] : memref<125x8x512xf32, #tpu.memory_space<vmem>>, vector<1x8x512xf32>
    %631 = vector.shape_cast %630 : vector<1x8x512xf32> to vector<8x512xf32>
    %632 = arith.mulf %629, %631 : vector<8x512xf32>
    %633 = arith.addf %628, %632 : vector<8x512xf32>
    %c400_i32 = arith.constant 400 : i32
    %634 = tpu.dynamic_rotate %9 by %c400_i32 dim 1 : vector<8x512xf32>, i32 -> vector<8x512xf32>
    %c102 = arith.constant 102 : index
    %c0_299 = arith.constant 0 : index
    %c0_300 = arith.constant 0 : index
    %635 = vector.load %arg6[%c102, %c0_299, %c0_300] : memref<125x8x512xf32, #tpu.memory_space<vmem>>, vector<1x8x512xf32>
    %636 = vector.shape_cast %635 : vector<1x8x512xf32> to vector<8x512xf32>
    %637 = arith.mulf %634, %636 : vector<8x512xf32>
    %638 = arith.addf %633, %637 : vector<8x512xf32>
    %c399_i32 = arith.constant 399 : i32
    %639 = tpu.dynamic_rotate %9 by %c399_i32 dim 1 : vector<8x512xf32>, i32 -> vector<8x512xf32>
    %c103 = arith.constant 103 : index
    %c0_301 = arith.constant 0 : index
    %c0_302 = arith.constant 0 : index
    %640 = vector.load %arg6[%c103, %c0_301, %c0_302] : memref<125x8x512xf32, #tpu.memory_space<vmem>>, vector<1x8x512xf32>
    %641 = vector.shape_cast %640 : vector<1x8x512xf32> to vector<8x512xf32>
    %642 = arith.mulf %639, %641 : vector<8x512xf32>
    %643 = arith.addf %638, %642 : vector<8x512xf32>
    %c398_i32 = arith.constant 398 : i32
    %644 = tpu.dynamic_rotate %9 by %c398_i32 dim 1 : vector<8x512xf32>, i32 -> vector<8x512xf32>
    %c104 = arith.constant 104 : index
    %c0_303 = arith.constant 0 : index
    %c0_304 = arith.constant 0 : index
    %645 = vector.load %arg6[%c104, %c0_303, %c0_304] : memref<125x8x512xf32, #tpu.memory_space<vmem>>, vector<1x8x512xf32>
    %646 = vector.shape_cast %645 : vector<1x8x512xf32> to vector<8x512xf32>
    %647 = arith.mulf %644, %646 : vector<8x512xf32>
    %648 = arith.addf %643, %647 : vector<8x512xf32>
    %c394_i32 = arith.constant 394 : i32
    %649 = tpu.dynamic_rotate %9 by %c394_i32 dim 1 : vector<8x512xf32>, i32 -> vector<8x512xf32>
    %c105 = arith.constant 105 : index
    %c0_305 = arith.constant 0 : index
    %c0_306 = arith.constant 0 : index
    %650 = vector.load %arg6[%c105, %c0_305, %c0_306] : memref<125x8x512xf32, #tpu.memory_space<vmem>>, vector<1x8x512xf32>
    %651 = vector.shape_cast %650 : vector<1x8x512xf32> to vector<8x512xf32>
    %652 = arith.mulf %649, %651 : vector<8x512xf32>
    %653 = arith.addf %648, %652 : vector<8x512xf32>
    %c393_i32 = arith.constant 393 : i32
    %654 = tpu.dynamic_rotate %9 by %c393_i32 dim 1 : vector<8x512xf32>, i32 -> vector<8x512xf32>
    %c106 = arith.constant 106 : index
    %c0_307 = arith.constant 0 : index
    %c0_308 = arith.constant 0 : index
    %655 = vector.load %arg6[%c106, %c0_307, %c0_308] : memref<125x8x512xf32, #tpu.memory_space<vmem>>, vector<1x8x512xf32>
    %656 = vector.shape_cast %655 : vector<1x8x512xf32> to vector<8x512xf32>
    %657 = arith.mulf %654, %656 : vector<8x512xf32>
    %658 = arith.addf %653, %657 : vector<8x512xf32>
    %c392_i32 = arith.constant 392 : i32
    %659 = tpu.dynamic_rotate %9 by %c392_i32 dim 1 : vector<8x512xf32>, i32 -> vector<8x512xf32>
    %c107 = arith.constant 107 : index
    %c0_309 = arith.constant 0 : index
    %c0_310 = arith.constant 0 : index
    %660 = vector.load %arg6[%c107, %c0_309, %c0_310] : memref<125x8x512xf32, #tpu.memory_space<vmem>>, vector<1x8x512xf32>
    %661 = vector.shape_cast %660 : vector<1x8x512xf32> to vector<8x512xf32>
    %662 = arith.mulf %659, %661 : vector<8x512xf32>
    %663 = arith.addf %658, %662 : vector<8x512xf32>
    %c391_i32 = arith.constant 391 : i32
    %664 = tpu.dynamic_rotate %9 by %c391_i32 dim 1 : vector<8x512xf32>, i32 -> vector<8x512xf32>
    %c108 = arith.constant 108 : index
    %c0_311 = arith.constant 0 : index
    %c0_312 = arith.constant 0 : index
    %665 = vector.load %arg6[%c108, %c0_311, %c0_312] : memref<125x8x512xf32, #tpu.memory_space<vmem>>, vector<1x8x512xf32>
    %666 = vector.shape_cast %665 : vector<1x8x512xf32> to vector<8x512xf32>
    %667 = arith.mulf %664, %666 : vector<8x512xf32>
    %668 = arith.addf %663, %667 : vector<8x512xf32>
    %c390_i32 = arith.constant 390 : i32
    %669 = tpu.dynamic_rotate %9 by %c390_i32 dim 1 : vector<8x512xf32>, i32 -> vector<8x512xf32>
    %c109 = arith.constant 109 : index
    %c0_313 = arith.constant 0 : index
    %c0_314 = arith.constant 0 : index
    %670 = vector.load %arg6[%c109, %c0_313, %c0_314] : memref<125x8x512xf32, #tpu.memory_space<vmem>>, vector<1x8x512xf32>
    %671 = vector.shape_cast %670 : vector<1x8x512xf32> to vector<8x512xf32>
    %672 = arith.mulf %669, %671 : vector<8x512xf32>
    %673 = arith.addf %668, %672 : vector<8x512xf32>
    %c386_i32 = arith.constant 386 : i32
    %674 = tpu.dynamic_rotate %9 by %c386_i32 dim 1 : vector<8x512xf32>, i32 -> vector<8x512xf32>
    %c110 = arith.constant 110 : index
    %c0_315 = arith.constant 0 : index
    %c0_316 = arith.constant 0 : index
    %675 = vector.load %arg6[%c110, %c0_315, %c0_316] : memref<125x8x512xf32, #tpu.memory_space<vmem>>, vector<1x8x512xf32>
    %676 = vector.shape_cast %675 : vector<1x8x512xf32> to vector<8x512xf32>
    %677 = arith.mulf %674, %676 : vector<8x512xf32>
    %678 = arith.addf %673, %677 : vector<8x512xf32>
    %c385_i32 = arith.constant 385 : i32
    %679 = tpu.dynamic_rotate %9 by %c385_i32 dim 1 : vector<8x512xf32>, i32 -> vector<8x512xf32>
    %c111 = arith.constant 111 : index
    %c0_317 = arith.constant 0 : index
    %c0_318 = arith.constant 0 : index
    %680 = vector.load %arg6[%c111, %c0_317, %c0_318] : memref<125x8x512xf32, #tpu.memory_space<vmem>>, vector<1x8x512xf32>
    %681 = vector.shape_cast %680 : vector<1x8x512xf32> to vector<8x512xf32>
    %682 = arith.mulf %679, %681 : vector<8x512xf32>
    %683 = arith.addf %678, %682 : vector<8x512xf32>
    %c384_i32 = arith.constant 384 : i32
    %684 = tpu.dynamic_rotate %9 by %c384_i32 dim 1 : vector<8x512xf32>, i32 -> vector<8x512xf32>
    %c112 = arith.constant 112 : index
    %c0_319 = arith.constant 0 : index
    %c0_320 = arith.constant 0 : index
    %685 = vector.load %arg6[%c112, %c0_319, %c0_320] : memref<125x8x512xf32, #tpu.memory_space<vmem>>, vector<1x8x512xf32>
    %686 = vector.shape_cast %685 : vector<1x8x512xf32> to vector<8x512xf32>
    %687 = arith.mulf %684, %686 : vector<8x512xf32>
    %688 = arith.addf %683, %687 : vector<8x512xf32>
    %c383_i32 = arith.constant 383 : i32
    %689 = tpu.dynamic_rotate %9 by %c383_i32 dim 1 : vector<8x512xf32>, i32 -> vector<8x512xf32>
    %c113 = arith.constant 113 : index
    %c0_321 = arith.constant 0 : index
    %c0_322 = arith.constant 0 : index
    %690 = vector.load %arg6[%c113, %c0_321, %c0_322] : memref<125x8x512xf32, #tpu.memory_space<vmem>>, vector<1x8x512xf32>
    %691 = vector.shape_cast %690 : vector<1x8x512xf32> to vector<8x512xf32>
    %692 = arith.mulf %689, %691 : vector<8x512xf32>
    %693 = arith.addf %688, %692 : vector<8x512xf32>
    %c382_i32 = arith.constant 382 : i32
    %694 = tpu.dynamic_rotate %9 by %c382_i32 dim 1 : vector<8x512xf32>, i32 -> vector<8x512xf32>
    %c114 = arith.constant 114 : index
    %c0_323 = arith.constant 0 : index
    %c0_324 = arith.constant 0 : index
    %695 = vector.load %arg6[%c114, %c0_323, %c0_324] : memref<125x8x512xf32, #tpu.memory_space<vmem>>, vector<1x8x512xf32>
    %696 = vector.shape_cast %695 : vector<1x8x512xf32> to vector<8x512xf32>
    %697 = arith.mulf %694, %696 : vector<8x512xf32>
    %698 = arith.addf %693, %697 : vector<8x512xf32>
    %c378_i32 = arith.constant 378 : i32
    %699 = tpu.dynamic_rotate %9 by %c378_i32 dim 1 : vector<8x512xf32>, i32 -> vector<8x512xf32>
    %c115 = arith.constant 115 : index
    %c0_325 = arith.constant 0 : index
    %c0_326 = arith.constant 0 : index
    %700 = vector.load %arg6[%c115, %c0_325, %c0_326] : memref<125x8x512xf32, #tpu.memory_space<vmem>>, vector<1x8x512xf32>
    %701 = vector.shape_cast %700 : vector<1x8x512xf32> to vector<8x512xf32>
    %702 = arith.mulf %699, %701 : vector<8x512xf32>
    %703 = arith.addf %698, %702 : vector<8x512xf32>
    %c377_i32 = arith.constant 377 : i32
    %704 = tpu.dynamic_rotate %9 by %c377_i32 dim 1 : vector<8x512xf32>, i32 -> vector<8x512xf32>
    %c116 = arith.constant 116 : index
    %c0_327 = arith.constant 0 : index
    %c0_328 = arith.constant 0 : index
    %705 = vector.load %arg6[%c116, %c0_327, %c0_328] : memref<125x8x512xf32, #tpu.memory_space<vmem>>, vector<1x8x512xf32>
    %706 = vector.shape_cast %705 : vector<1x8x512xf32> to vector<8x512xf32>
    %707 = arith.mulf %704, %706 : vector<8x512xf32>
    %708 = arith.addf %703, %707 : vector<8x512xf32>
    %c376_i32 = arith.constant 376 : i32
    %709 = tpu.dynamic_rotate %9 by %c376_i32 dim 1 : vector<8x512xf32>, i32 -> vector<8x512xf32>
    %c117 = arith.constant 117 : index
    %c0_329 = arith.constant 0 : index
    %c0_330 = arith.constant 0 : index
    %710 = vector.load %arg6[%c117, %c0_329, %c0_330] : memref<125x8x512xf32, #tpu.memory_space<vmem>>, vector<1x8x512xf32>
    %711 = vector.shape_cast %710 : vector<1x8x512xf32> to vector<8x512xf32>
    %712 = arith.mulf %709, %711 : vector<8x512xf32>
    %713 = arith.addf %708, %712 : vector<8x512xf32>
    %c375_i32 = arith.constant 375 : i32
    %714 = tpu.dynamic_rotate %9 by %c375_i32 dim 1 : vector<8x512xf32>, i32 -> vector<8x512xf32>
    %c118 = arith.constant 118 : index
    %c0_331 = arith.constant 0 : index
    %c0_332 = arith.constant 0 : index
    %715 = vector.load %arg6[%c118, %c0_331, %c0_332] : memref<125x8x512xf32, #tpu.memory_space<vmem>>, vector<1x8x512xf32>
    %716 = vector.shape_cast %715 : vector<1x8x512xf32> to vector<8x512xf32>
    %717 = arith.mulf %714, %716 : vector<8x512xf32>
    %718 = arith.addf %713, %717 : vector<8x512xf32>
    %c374_i32 = arith.constant 374 : i32
    %719 = tpu.dynamic_rotate %9 by %c374_i32 dim 1 : vector<8x512xf32>, i32 -> vector<8x512xf32>
    %c119 = arith.constant 119 : index
    %c0_333 = arith.constant 0 : index
    %c0_334 = arith.constant 0 : index
    %720 = vector.load %arg6[%c119, %c0_333, %c0_334] : memref<125x8x512xf32, #tpu.memory_space<vmem>>, vector<1x8x512xf32>
    %721 = vector.shape_cast %720 : vector<1x8x512xf32> to vector<8x512xf32>
    %722 = arith.mulf %719, %721 : vector<8x512xf32>
    %723 = arith.addf %718, %722 : vector<8x512xf32>
    %c370_i32 = arith.constant 370 : i32
    %724 = tpu.dynamic_rotate %9 by %c370_i32 dim 1 : vector<8x512xf32>, i32 -> vector<8x512xf32>
    %c120 = arith.constant 120 : index
    %c0_335 = arith.constant 0 : index
    %c0_336 = arith.constant 0 : index
    %725 = vector.load %arg6[%c120, %c0_335, %c0_336] : memref<125x8x512xf32, #tpu.memory_space<vmem>>, vector<1x8x512xf32>
    %726 = vector.shape_cast %725 : vector<1x8x512xf32> to vector<8x512xf32>
    %727 = arith.mulf %724, %726 : vector<8x512xf32>
    %728 = arith.addf %723, %727 : vector<8x512xf32>
    %c369_i32 = arith.constant 369 : i32
    %729 = tpu.dynamic_rotate %9 by %c369_i32 dim 1 : vector<8x512xf32>, i32 -> vector<8x512xf32>
    %c121 = arith.constant 121 : index
    %c0_337 = arith.constant 0 : index
    %c0_338 = arith.constant 0 : index
    %730 = vector.load %arg6[%c121, %c0_337, %c0_338] : memref<125x8x512xf32, #tpu.memory_space<vmem>>, vector<1x8x512xf32>
    %731 = vector.shape_cast %730 : vector<1x8x512xf32> to vector<8x512xf32>
    %732 = arith.mulf %729, %731 : vector<8x512xf32>
    %733 = arith.addf %728, %732 : vector<8x512xf32>
    %c368_i32 = arith.constant 368 : i32
    %734 = tpu.dynamic_rotate %9 by %c368_i32 dim 1 : vector<8x512xf32>, i32 -> vector<8x512xf32>
    %c122 = arith.constant 122 : index
    %c0_339 = arith.constant 0 : index
    %c0_340 = arith.constant 0 : index
    %735 = vector.load %arg6[%c122, %c0_339, %c0_340] : memref<125x8x512xf32, #tpu.memory_space<vmem>>, vector<1x8x512xf32>
    %736 = vector.shape_cast %735 : vector<1x8x512xf32> to vector<8x512xf32>
    %737 = arith.mulf %734, %736 : vector<8x512xf32>
    %738 = arith.addf %733, %737 : vector<8x512xf32>
    %c367_i32 = arith.constant 367 : i32
    %739 = tpu.dynamic_rotate %9 by %c367_i32 dim 1 : vector<8x512xf32>, i32 -> vector<8x512xf32>
    %c123 = arith.constant 123 : index
    %c0_341 = arith.constant 0 : index
    %c0_342 = arith.constant 0 : index
    %740 = vector.load %arg6[%c123, %c0_341, %c0_342] : memref<125x8x512xf32, #tpu.memory_space<vmem>>, vector<1x8x512xf32>
    %741 = vector.shape_cast %740 : vector<1x8x512xf32> to vector<8x512xf32>
    %742 = arith.mulf %739, %741 : vector<8x512xf32>
    %743 = arith.addf %738, %742 : vector<8x512xf32>
    %c366_i32 = arith.constant 366 : i32
    %744 = tpu.dynamic_rotate %9 by %c366_i32 dim 1 : vector<8x512xf32>, i32 -> vector<8x512xf32>
    %c124 = arith.constant 124 : index
    %c0_343 = arith.constant 0 : index
    %c0_344 = arith.constant 0 : index
    %745 = vector.load %arg6[%c124, %c0_343, %c0_344] : memref<125x8x512xf32, #tpu.memory_space<vmem>>, vector<1x8x512xf32>
    %746 = vector.shape_cast %745 : vector<1x8x512xf32> to vector<8x512xf32>
    %747 = arith.mulf %744, %746 : vector<8x512xf32>
    %748 = arith.addf %743, %747 : vector<8x512xf32>
    %c0_345 = arith.constant 0 : index
    %c0_346 = arith.constant 0 : index
    %749 = vector.load %arg7[%c0_345, %c0_346] : memref<8x3xf32, #tpu.memory_space<vmem>>, vector<8x3xf32>
    %cst_347 = arith.constant 0.000000e+00 : f32
    %750 = vector.broadcast %cst_347 : f32 to vector<8x512xf32>
    %751 = vector.extract_strided_slice %749 {offsets = [0, 0], sizes = [8, 1], strides = [1, 1]} : vector<8x3xf32> to vector<8x1xf32>
    %752 = vector.broadcast %751 : vector<8x1xf32> to vector<8x512xf32>
    %753 = arith.addf %378, %752 : vector<8x512xf32>
    %cst_348 = arith.constant 0.000000e+00 : f32
    %cst_349 = arith.constant 6.000000e+00 : f32
    %754 = vector.broadcast %cst_348 : f32 to vector<8x512xf32>
    %755 = arith.maximumf %754, %753 : vector<8x512xf32>
    %756 = vector.broadcast %cst_349 : f32 to vector<8x512xf32>
    %757 = arith.minimumf %756, %755 : vector<8x512xf32>
    %758 = arith.addf %750, %757 : vector<8x512xf32>
    %759 = vector.extract_strided_slice %749 {offsets = [0, 1], sizes = [8, 1], strides = [1, 1]} : vector<8x3xf32> to vector<8x1xf32>
    %760 = vector.broadcast %759 : vector<8x1xf32> to vector<8x512xf32>
    %761 = arith.addf %589, %760 : vector<8x512xf32>
    %cst_350 = arith.constant 0.000000e+00 : f32
    %cst_351 = arith.constant 6.000000e+00 : f32
    %762 = vector.broadcast %cst_350 : f32 to vector<8x512xf32>
    %763 = arith.maximumf %762, %761 : vector<8x512xf32>
    %764 = vector.broadcast %cst_351 : f32 to vector<8x512xf32>
    %765 = arith.minimumf %764, %763 : vector<8x512xf32>
    %766 = arith.addf %758, %765 : vector<8x512xf32>
    %767 = vector.extract_strided_slice %749 {offsets = [0, 2], sizes = [8, 1], strides = [1, 1]} : vector<8x3xf32> to vector<8x1xf32>
    %768 = vector.broadcast %767 : vector<8x1xf32> to vector<8x512xf32>
    %769 = arith.addf %748, %768 : vector<8x512xf32>
    %cst_352 = arith.constant 0.000000e+00 : f32
    %cst_353 = arith.constant 6.000000e+00 : f32
    %770 = vector.broadcast %cst_352 : f32 to vector<8x512xf32>
    %771 = arith.maximumf %770, %769 : vector<8x512xf32>
    %772 = vector.broadcast %cst_353 : f32 to vector<8x512xf32>
    %773 = arith.minimumf %772, %771 : vector<8x512xf32>
    %774 = arith.addf %766, %773 : vector<8x512xf32>
    %c0_354 = arith.constant 0 : index
    %c0_355 = arith.constant 0 : index
    %775 = vector.load %arg8[%c0_354, %c0_355] : memref<8x8xf32, #tpu.memory_space<vmem>>, vector<8x8xf32>
    %cst_356 = arith.constant dense<0.000000e+00> : vector<8x512xf32>
    %776 = tpu.matmul %775, %774, %cst_356 {dimension_numbers = #tpu.dot_dimension_numbers<[1], [0], [0], [1], [0, 0, 1, 1], [], []>} : vector<8x8xf32>, vector<8x512xf32>, vector<8x512xf32> -> vector<8x512xf32>
    %c0_357 = arith.constant 0 : index
    %c0_358 = arith.constant 0 : index
    %777 = vector.load %arg9[%c0_357, %c0_358] : memref<8x4xf32, #tpu.memory_space<vmem>>, vector<8x4xf32>
    %cst_359 = arith.constant dense<0.000000e+00> : vector<8x512xf32>
    %778 = tpu.matmul %777, %0, %cst_359 {dimension_numbers = #tpu.dot_dimension_numbers<[1], [0], [0], [1], [0, 0, 1, 1], [], []>} : vector<8x4xf32>, vector<4x512xf32>, vector<8x512xf32> -> vector<8x512xf32>
    %779 = arith.addf %776, %778 : vector<8x512xf32>
    %c0_360 = arith.constant 0 : index
    %c0_361 = arith.constant 0 : index
    %780 = vector.load %arg10[%c0_360, %c0_361] : memref<8x1xf32, #tpu.memory_space<vmem>>, vector<8x1xf32>
    %781 = vector.broadcast %780 : vector<8x1xf32> to vector<8x512xf32>
    %782 = arith.addf %779, %781 : vector<8x512xf32>
    %c0_362 = arith.constant 0 : index
    %c0_363 = arith.constant 0 : index
    %783 = vector.load %arg11[%c0_362, %c0_363] : memref<8x512xf32, #tpu.memory_space<vmem>>, vector<8x512xf32>
    tpu.vector_store %arg11[%c0_362, %c0_363], %782 {strides = array<i32>} : memref<8x512xf32, #tpu.memory_space<vmem>>, vector<8x512xf32>,
    return
  }
  func.func @transform_0(%arg0: i32) -> (i32, i32) {
    %c0_i32 = arith.constant 0 : i32
    %c0_i32_0 = arith.constant 0 : i32
    return %c0_i32, %arg0 : i32, i32
  }
  func.func @transform_1(%arg0: i32) -> (i32, i32) {
    %c0_i32 = arith.constant 0 : i32
    %c0_i32_0 = arith.constant 0 : i32
    %c0_i32_1 = arith.constant 0 : i32
    return %c0_i32, %c0_i32_0 : i32, i32
  }
  func.func @transform_2(%arg0: i32) -> (i32, i32) {
    %c0_i32 = arith.constant 0 : i32
    %c0_i32_0 = arith.constant 0 : i32
    %c0_i32_1 = arith.constant 0 : i32
    return %c0_i32, %c0_i32_0 : i32, i32
  }
  func.func @transform_3(%arg0: i32) -> (i32, i32, i32) {
    %c0_i32 = arith.constant 0 : i32
    %c0_i32_0 = arith.constant 0 : i32
    %c0_i32_1 = arith.constant 0 : i32
    %c0_i32_2 = arith.constant 0 : i32
    return %c0_i32, %c0_i32_0, %c0_i32_1 : i32, i32, i32
  }
  func.func @transform_4(%arg0: i32) -> (i32, i32, i32) {
    %c0_i32 = arith.constant 0 : i32
    %c0_i32_0 = arith.constant 0 : i32
    %c0_i32_1 = arith.constant 0 : i32
    %c0_i32_2 = arith.constant 0 : i32
    return %c0_i32, %c0_i32_0, %c0_i32_1 : i32, i32, i32
  }
  func.func @transform_5(%arg0: i32) -> (i32, i32, i32) {
    %c0_i32 = arith.constant 0 : i32
    %c0_i32_0 = arith.constant 0 : i32
    %c0_i32_1 = arith.constant 0 : i32
    %c0_i32_2 = arith.constant 0 : i32
    return %c0_i32, %c0_i32_0, %c0_i32_1 : i32, i32, i32
  }
  func.func @transform_6(%arg0: i32) -> (i32, i32) {
    %c0_i32 = arith.constant 0 : i32
    %c0_i32_0 = arith.constant 0 : i32
    %c0_i32_1 = arith.constant 0 : i32
    return %c0_i32, %c0_i32_0 : i32, i32
  }
  func.func @transform_7(%arg0: i32) -> (i32, i32) {
    %c0_i32 = arith.constant 0 : i32
    %c0_i32_0 = arith.constant 0 : i32
    %c0_i32_1 = arith.constant 0 : i32
    return %c0_i32, %c0_i32_0 : i32, i32
  }
  func.func @transform_8(%arg0: i32) -> (i32, i32) {
    %c0_i32 = arith.constant 0 : i32
    %c0_i32_0 = arith.constant 0 : i32
    %c0_i32_1 = arith.constant 0 : i32
    return %c0_i32, %c0_i32_0 : i32, i32
  }
  func.func @transform_9(%arg0: i32) -> (i32, i32) {
    %c0_i32 = arith.constant 0 : i32
    %c0_i32_0 = arith.constant 0 : i32
    %c0_i32_1 = arith.constant 0 : i32
    return %c0_i32, %c0_i32_0 : i32, i32
  }
  func.func @transform_10(%arg0: i32) -> (i32, i32) {
    %c0_i32 = arith.constant 0 : i32
    %c0_i32_0 = arith.constant 0 : i32
    return %c0_i32, %arg0 : i32, i32
  }
}

</mosaic_0001>

<llo_original>
// kernel: mscb_forward.1
$region0: #{mscb_forward.1}
  #allocation0 [shape = 'u32[]', space=smem, size = 0x4, offset = 0x4, fixed_abs, tag = 'smem constant byte address 0x4 - core index']
  #allocation1 [shape = 'u32[72,128]{1,0:T(1,128)}', space=vmem, size = 0x9000, scoped, tag = 'internal scratch']
  %s0 = inlined_call_operand.vmem [shape: f32[4,512], index: 0, kind: input, shape index: {}]
  %s1 = inlined_call_operand.vmem [shape: f32[8,4], index: 1, kind: input, shape index: {}]
  %s2 = inlined_call_operand.vmem [shape: f32[8,1], index: 2, kind: input, shape index: {}]
  %s3 = inlined_call_operand.vmem [shape: f32[1,8,512], index: 3, kind: input, shape index: {}]
  %s4 = inlined_call_operand.vmem [shape: f32[27,8,512], index: 4, kind: input, shape index: {}]
  %s5 = inlined_call_operand.vmem [shape: f32[125,8,512], index: 5, kind: input, shape index: {}]
  %s6 = inlined_call_operand.vmem [shape: f32[8,3], index: 6, kind: input, shape index: {}]
  %s7 = inlined_call_operand.vmem [shape: f32[8,8], index: 7, kind: input, shape index: {}]
  %s8 = inlined_call_operand.vmem [shape: f32[8,4], index: 8, kind: input, shape index: {}]
  %s9 = inlined_call_operand.vmem [shape: f32[8,1], index: 9, kind: input, shape index: {}]
  %s10 = inlined_call_operand.vmem [shape: f32[8,512], index: 10, kind: output, shape index: {}]
  %s11 = sld [smem:[#allocation0]]
  $region50: #{mscb_forward.1} parent=0
    _
  %s13 = ssub.s32 1, %s11
  %s14 = scalar_select 0, %s13, %s11
  // Predicated region
  $region2: #{mscb_forward.1} parent=0 // pred_check
    _
  $region3: #{mscb_forward.1} parent=0 // pred_check_branch
    %16 = sbr.rel (0) target = $region5
  $region4: #{mscb_forward.1} parent=0 // pred_region
    _
  $region5: #{mscb_forward.1} parent=0 // pred_fallthru
    _
  // Predicated region
  $region6: #{mscb_forward.1} parent=0 // pred_check
    _
  $region7: #{mscb_forward.1} parent=0 // pred_check_branch
    %18 = sbr.rel (0) target = $region9
  $region8: #{mscb_forward.1} parent=0 // pred_region
    _
  $region9: #{mscb_forward.1} parent=0 // pred_fallthru
    _
  // Predicated region
  $region10: #{mscb_forward.1} parent=0 // pred_check
    _
  $region11: #{mscb_forward.1} parent=0 // pred_check_branch
    %20 = sbr.rel (0) target = $region13
  $region12: #{mscb_forward.1} parent=0 // pred_region
    _
  $region13: #{mscb_forward.1} parent=0 // pred_fallthru
    _
  // Predicated region
  $region14: #{mscb_forward.1} parent=0 // pred_check
    _
  $region15: #{mscb_forward.1} parent=0 // pred_check_branch
    %22 = sbr.rel (0) target = $region17
  $region16: #{mscb_forward.1} parent=0 // pred_region
    _
  $region17: #{mscb_forward.1} parent=0 // pred_fallthru
    _
  // Predicated region
  $region18: #{mscb_forward.1} parent=0 // pred_check
    _
  $region19: #{mscb_forward.1} parent=0 // pred_check_branch
    %24 = sbr.rel (0) target = $region21
  $region20: #{mscb_forward.1} parent=0 // pred_region
    _
  $region21: #{mscb_forward.1} parent=0 // pred_fallthru
    _
  // Predicated region
  $region22: #{mscb_forward.1} parent=0 // pred_check
    _
  $region23: #{mscb_forward.1} parent=0 // pred_check_branch
    %26 = sbr.rel (0) target = $region25
  $region24: #{mscb_forward.1} parent=0 // pred_region
    _
  $region25: #{mscb_forward.1} parent=0 // pred_fallthru
    _
  // Predicated region
  $region26: #{mscb_forward.1} parent=0 // pred_check
    _
  $region27: #{mscb_forward.1} parent=0 // pred_check_branch
    %28 = sbr.rel (0) target = $region29
  $region28: #{mscb_forward.1} parent=0 // pred_region
    _
  $region29: #{mscb_forward.1} parent=0 // pred_fallthru
    _
  // Predicated region
  $region30: #{mscb_forward.1} parent=0 // pred_check
    _
  $region31: #{mscb_forward.1} parent=0 // pred_check_branch
    %30 = sbr.rel (0) target = $region33
  $region32: #{mscb_forward.1} parent=0 // pred_region
    _
  $region33: #{mscb_forward.1} parent=0 // pred_fallthru
    _
  // Predicated region
  $region34: #{mscb_forward.1} parent=0 // pred_check
    _
  $region35: #{mscb_forward.1} parent=0 // pred_check_branch
    %32 = sbr.rel (0) target = $region37
  $region36: #{mscb_forward.1} parent=0 // pred_region
    _
  $region37: #{mscb_forward.1} parent=0 // pred_fallthru
    _
  // Predicated region
  $region38: #{mscb_forward.1} parent=0 // pred_check
    _
  $region39: #{mscb_forward.1} parent=0 // pred_check_branch
    %34 = sbr.rel (0) target = $region41
  $region40: #{mscb_forward.1} parent=0 // pred_region
    _
  $region41: #{mscb_forward.1} parent=0 // pred_fallthru
    _
  %v35 = vld [vmem:[%s0] sm:$0xff]
  %v36 = vld [vmem:[%s0 + $0x8] sm:$0xff]
  %v37 = vld [vmem:[%s1] sm:$0xff]
  %v38 = vld [vmem:[%s2] sm:$0xff]
  %40 = vset.pattern.permute.xlu0 0
  %41 = vperm.xlu0 %40, %v38
  %v42 = vpop.permute.xlu0 %41
  %46 = vst [vmem:[#allocation1] ss:$2 sm:$0xff] %v35
  %s47 = scalar_lea.vmem [#allocation1], 16
  %48 = vst [vmem:[%s47] ss:$2 sm:$0xff] %v36
  %v49 = vld.sshfl [vmem:[#allocation1] sm:$0xff pattern:$0x75316420]
  %v50 = vld.sshfl [vmem:[#allocation1 + $0x8] sm:$0xff pattern:$0x75316420]
  %v51 = vld.sshfl [vmem:[#allocation1 + $0x10] sm:$0xff pattern:$0x75316420]
  %v52 = vld.sshfl [vmem:[#allocation1 + $0x18] sm:$0xff pattern:$0x75316420]
  %vm53 = vcmask 31744
  %v55 = vsel %vm53, %v37, 0
  %vm57 = vcmask 1043456
  %v58 = vsel %vm57, %v49, 0
  %v60 = vsel %vm57, %v50, 0
  %v62 = vsel %vm57, %v51, 0
  %v64 = vsel %vm57, %v52, 0
  %66 = vmatpush.msra.mxu0 0.0
  %67 = vmatpush.msra.mxu0 0.0
  %68 = vmatpush.msra.mxu0 0.0
  %69 = vmatpush.msra.mxu0 0.0
  %70 = vmatpush.msra.mxu0 0.0
  %71 = vmatpush.msra.mxu0 0.0
  %72 = vmatpush.msra.mxu0 0.0
  %73 = vmatpush.msra.mxu0 0.0
  %74 = vmatpush.msra.mxu0 0.0
  %75 = vmatpush.msra.mxu0 0.0
  %76 = vmatpush.msra.mxu0 0.0
  %77 = vmatpush.msra.mxu0 0.0
  %78 = vmatpush.msra.mxu0 0.0
  %79 = vmatpush.msra.mxu0 0.0
  %80 = vmatpush.msra.mxu0 0.0
  %81 = vmatpush.msra.mxu0 %v58
  %82 = vmatmul.f32.gmra.mxu0 %v55
  %v83 = vpop.f32.mrf.mxu0
  %v84 = vadd.f32 %v42, %v83
  %85 = vdwg.mxu0
  %86 = vmatpush.msra.mxu0 0.0
  %87 = vmatpush.msra.mxu0 0.0
  %88 = vmatpush.msra.mxu0 0.0
  %89 = vmatpush.msra.mxu0 0.0
  %90 = vmatpush.msra.mxu0 0.0
  %91 = vmatpush.msra.mxu0 0.0
  %92 = vmatpush.msra.mxu0 0.0
  %93 = vmatpush.msra.mxu0 0.0
  %94 = vmatpush.msra.mxu0 0.0
  %95 = vmatpush.msra.mxu0 0.0
  %96 = vmatpush.msra.mxu0 0.0
  %97 = vmatpush.msra.mxu0 0.0
  %98 = vmatpush.msra.mxu0 0.0
  %99 = vmatpush.msra.mxu0 0.0
  %100 = vmatpush.msra.mxu0 0.0
  %101 = vmatpush.msra.mxu0 %v60
  %102 = vmatmul.f32.gmra.mxu0 %v55
  %v103 = vpop.f32.mrf.mxu0
  %v104 = vadd.f32 %v42, %v103
  %105 = vdwg.mxu0
  %106 = vmatpush.msra.mxu0 0.0
  %107 = vmatpush.msra.mxu0 0.0
  %108 = vmatpush.msra.mxu0 0.0
  %109 = vmatpush.msra.mxu0 0.0
  %110 = vmatpush.msra.mxu0 0.0
  %111 = vmatpush.msra.mxu0 0.0
  %112 = vmatpush.msra.mxu0 0.0
  %113 = vmatpush.msra.mxu0 0.0
  %114 = vmatpush.msra.mxu0 0.0
  %115 = vmatpush.msra.mxu0 0.0
  %116 = vmatpush.msra.mxu0 0.0
  %117 = vmatpush.msra.mxu0 0.0
  %118 = vmatpush.msra.mxu0 0.0
  %119 = vmatpush.msra.mxu0 0.0
  %120 = vmatpush.msra.mxu0 0.0
  %121 = vmatpush.msra.mxu0 %v62
  %122 = vmatmul.f32.gmra.mxu0 %v55
  %v123 = vpop.f32.mrf.mxu0
  %v124 = vadd.f32 %v42, %v123
  %125 = vdwg.mxu0
  %126 = vmatpush.msra.mxu0 0.0
  %127 = vmatpush.msra.mxu0 0.0
  %128 = vmatpush.msra.mxu0 0.0
  %129 = vmatpush.msra.mxu0 0.0
  %130 = vmatpush.msra.mxu0 0.0
  %131 = vmatpush.msra.mxu0 0.0
  %132 = vmatpush.msra.mxu0 0.0
  %133 = vmatpush.msra.mxu0 0.0
  %134 = vmatpush.msra.mxu0 0.0
  %135 = vmatpush.msra.mxu0 0.0
  %136 = vmatpush.msra.mxu0 0.0
  %137 = vmatpush.msra.mxu0 0.0
  %138 = vmatpush.msra.mxu0 0.0
  %139 = vmatpush.msra.mxu0 0.0
  %140 = vmatpush.msra.mxu0 0.0
  %141 = vmatpush.msra.mxu0 %v64
  %142 = vmatmul.f32.gmra.mxu0 %v55
  %v143 = vpop.f32.mrf.mxu0
  %v144 = vadd.f32 %v42, %v143
  %145 = vdwg.mxu0
  %v146 = vmax.f32 %v84, 0.0
  %v147 = vmax.f32 %v104, 0.0
  %v148 = vmax.f32 %v124, 0.0
  %v149 = vmax.f32 %v144, 0.0
  %v150 = vmin.f32 %v146, 6.0
  %v151 = vmin.f32 %v147, 6.0
  %v152 = vmin.f32 %v148, 6.0
  %v153 = vmin.f32 %v149, 6.0
  %154 = vrot.lane.b32.xlu0 %v150, 18
  %v155 = vpop.permute.xlu0 %154
  %156 = vrot.lane.b32.xlu0 %v151, 18
  %v157 = vpop.permute.xlu0 %156
  %158 = vrot.lane.b32.xlu0 %v152, 18
  %v159 = vpop.permute.xlu0 %158
  %160 = vrot.lane.b32.xlu0 %v153, 18
  %v161 = vpop.permute.xlu0 %160
  %v162 = vlaneseq
  %v163 = vand.u32 %v162, 127
  %vm164 = vcmp.lt.s32.totalorder %v163, 18
  %v165 = vsel %vm164, %v159, %v161
  %v166 = vsel %vm164, %v157, %v159
  %v167 = vsel %vm164, %v155, %v157
  %v168 = vsel %vm164, %v161, %v155
  %v169 = vld [vmem:[%s5] sm:$0xff]
  %v170 = vld [vmem:[%s5 + $0x8] sm:$0xff]
  %v171 = vld [vmem:[%s5 + $0x10] sm:$0xff]
  %v172 = vld [vmem:[%s5 + $0x18] sm:$0xff]
  %v173 = vmul.f32 %v165, %v169
  %v174 = vmul.f32 %v168, %v170
  %v175 = vmul.f32 %v167, %v171
  %v176 = vmul.f32 %v166, %v172
  %v177 = vadd.f32 %v173, 0.0
  %v178 = vadd.f32 %v174, 0.0
  %v179 = vadd.f32 %v175, 0.0
  %v180 = vadd.f32 %v176, 0.0
  %181 = vrot.lane.b32.xlu0 %v150, 17
  %v182 = vpop.permute.xlu0 %181
  %183 = vrot.lane.b32.xlu0 %v151, 17
  %v184 = vpop.permute.xlu0 %183
  %185 = vrot.lane.b32.xlu0 %v152, 17
  %v186 = vpop.permute.xlu0 %185
  %187 = vrot.lane.b32.xlu0 %v153, 17
  %v188 = vpop.permute.xlu0 %187
  %vm189 = vcmp.lt.s32.totalorder %v163, 17
  %v190 = vsel %vm189, %v186, %v188
  %v191 = vsel %vm189, %v184, %v186
  %v192 = vsel %vm189, %v182, %v184
  %v193 = vsel %vm189, %v188, %v182
  %s194 = scalar_lea.vmem %s5, 32
  %v195 = vld [vmem:[%s194] sm:$0xff]
  %v196 = vld [vmem:[%s194 + $0x8] sm:$0xff]
  %v197 = vld [vmem:[%s194 + $0x10] sm:$0xff]
  %v198 = vld [vmem:[%s194 + $0x18] sm:$0xff]
  %v199 = vmul.f32 %v190, %v195
  %v200 = vmul.f32 %v193, %v196
  %v201 = vmul.f32 %v192, %v197
  %v202 = vmul.f32 %v191, %v198
  %v203 = vadd.f32 %v177, %v199
  %v204 = vadd.f32 %v178, %v200
  %v205 = vadd.f32 %v179, %v201
  %v206 = vadd.f32 %v180, %v202
  %207 = vrot.lane.b32.xlu0 %v150, 16
  %v208 = vpop.permute.xlu0 %207
  %209 = vrot.lane.b32.xlu0 %v151, 16
  %v210 = vpop.permute.xlu0 %209
  %211 = vrot.lane.b32.xlu0 %v152, 16
  %v212 = vpop.permute.xlu0 %211
  %213 = vrot.lane.b32.xlu0 %v153, 16
  %v214 = vpop.permute.xlu0 %213
  %vm215 = vcmp.lt.s32.totalorder %v163, 16
  %v216 = vsel %vm215, %v212, %v214
  %v217 = vsel %vm215, %v210, %v212
  %v218 = vsel %vm215, %v208, %v210
  %v219 = vsel %vm215, %v214, %v208
  %s220 = scalar_lea.vmem %s5, 64
  %v221 = vld [vmem:[%s220] sm:$0xff]
  %v222 = vld [vmem:[%s220 + $0x8] sm:$0xff]
  %v223 = vld [vmem:[%s220 + $0x10] sm:$0xff]
  %v224 = vld [vmem:[%s220 + $0x18] sm:$0xff]
  %v225 = vmul.f32 %v216, %v221
  %v226 = vmul.f32 %v219, %v222
  %v227 = vmul.f32 %v218, %v223
  %v228 = vmul.f32 %v217, %v224
  %v229 = vadd.f32 %v203, %v225
  %v230 = vadd.f32 %v204, %v226
  %v231 = vadd.f32 %v205, %v227
  %v232 = vadd.f32 %v206, %v228
  %233 = vrot.lane.b32.xlu0 %v150, 15
  %v234 = vpop.permute.xlu0 %233
  %235 = vrot.lane.b32.xlu0 %v151, 15
  %v236 = vpop.permute.xlu0 %235
  %237 = vrot.lane.b32.xlu0 %v152, 15
  %v238 = vpop.permute.xlu0 %237
  %239 = vrot.lane.b32.xlu0 %v153, 15
  %v240 = vpop.permute.xlu0 %239
  %vm241 = vcmp.lt.s32.totalorder %v163, 15
  %v242 = vsel %vm241, %v238, %v240
  %v243 = vsel %vm241, %v236, %v238
  %v244 = vsel %vm241, %v234, %v236
  %v245 = vsel %vm241, %v240, %v234
  %s246 = scalar_lea.vmem %s5, 96
  %v247 = vld [vmem:[%s246] sm:$0xff]
  %v248 = vld [vmem:[%s246 + $0x8] sm:$0xff]
  %v249 = vld [vmem:[%s246 + $0x10] sm:$0xff]
  %v250 = vld [vmem:[%s246 + $0x18] sm:$0xff]
  %v251 = vmul.f32 %v242, %v247
  %v252 = vmul.f32 %v245, %v248
  %v253 = vmul.f32 %v244, %v249
  %v254 = vmul.f32 %v243, %v250
  %v255 = vadd.f32 %v229, %v251
  %v256 = vadd.f32 %v230, %v252
  %v257 = vadd.f32 %v231, %v253
  %v258 = vadd.f32 %v232, %v254
  %259 = vrot.lane.b32.xlu0 %v150, 14
  %v260 = vpop.permute.xlu0 %259
  %261 = vrot.lane.b32.xlu0 %v151, 14
  %v262 = vpop.permute.xlu0 %261
  %263 = vrot.lane.b32.xlu0 %v152, 14
  %v264 = vpop.permute.xlu0 %263
  %265 = vrot.lane.b32.xlu0 %v153, 14
  %v266 = vpop.permute.xlu0 %265
  %vm267 = vcmp.lt.s32.totalorder %v163, 14
  %v268 = vsel %vm267, %v264, %v266
  %v269 = vsel %vm267, %v262, %v264
  %v270 = vsel %vm267, %v260, %v262
  %v271 = vsel %vm267, %v266, %v260
  %s272 = scalar_lea.vmem %s5, 128
  %v273 = vld [vmem:[%s272] sm:$0xff]
  %v274 = vld [vmem:[%s272 + $0x8] sm:$0xff]
  %v275 = vld [vmem:[%s272 + $0x10] sm:$0xff]
  %v276 = vld [vmem:[%s272 + $0x18] sm:$0xff]
  %v277 = vmul.f32 %v268, %v273
  %v278 = vmul.f32 %v271, %v274
  %v279 = vmul.f32 %v270, %v275
  %v280 = vmul.f32 %v269, %v276
  %v281 = vadd.f32 %v255, %v277
  %v282 = vadd.f32 %v256, %v278
  %v283 = vadd.f32 %v257, %v279
  %v284 = vadd.f32 %v258, %v280
  %285 = vrot.lane.b32.xlu0 %v150, 10
  %v286 = vpop.permute.xlu0 %285
  %287 = vrot.lane.b32.xlu0 %v151, 10
  %v288 = vpop.permute.xlu0 %287
  %289 = vrot.lane.b32.xlu0 %v152, 10
  %v290 = vpop.permute.xlu0 %289
  %291 = vrot.lane.b32.xlu0 %v153, 10
  %v292 = vpop.permute.xlu0 %291
  %vm293 = vcmp.lt.s32.totalorder %v163, 10
  %v294 = vsel %vm293, %v290, %v292
  %v295 = vsel %vm293, %v288, %v290
  %v296 = vsel %vm293, %v286, %v288
  %v297 = vsel %vm293, %v292, %v286
  %s298 = scalar_lea.vmem %s5, 160
  %v299 = vld [vmem:[%s298] sm:$0xff]
  %v300 = vld [vmem:[%s298 + $0x8] sm:$0xff]
  %v301 = vld [vmem:[%s298 + $0x10] sm:$0xff]
  %v302 = vld [vmem:[%s298 + $0x18] sm:$0xff]
  %v303 = vmul.f32 %v294, %v299
  %v304 = vmul.f32 %v297, %v300
  %v305 = vmul.f32 %v296, %v301
  %v306 = vmul.f32 %v295, %v302
  %v307 = vadd.f32 %v281, %v303
  %v308 = vadd.f32 %v282, %v304
  %v309 = vadd.f32 %v283, %v305
  %v310 = vadd.f32 %v284, %v306
  %311 = vrot.lane.b32.xlu0 %v150, 9
  %v312 = vpop.permute.xlu0 %311
  %313 = vrot.lane.b32.xlu0 %v151, 9
  %v314 = vpop.permute.xlu0 %313
  %315 = vrot.lane.b32.xlu0 %v152, 9
  %v316 = vpop.permute.xlu0 %315
  %317 = vrot.lane.b32.xlu0 %v153, 9
  %v318 = vpop.permute.xlu0 %317
  %vm319 = vcmp.lt.s32.totalorder %v163, 9
  %v320 = vsel %vm319, %v316, %v318
  %v321 = vsel %vm319, %v314, %v316
  %v322 = vsel %vm319, %v312, %v314
  %v323 = vsel %vm319, %v318, %v312
  %s324 = scalar_lea.vmem %s5, 192
  %v325 = vld [vmem:[%s324] sm:$0xff]
  %v326 = vld [vmem:[%s324 + $0x8] sm:$0xff]
  %v327 = vld [vmem:[%s324 + $0x10] sm:$0xff]
  %v328 = vld [vmem:[%s324 + $0x18] sm:$0xff]
  %v329 = vmul.f32 %v320, %v325
  %v330 = vmul.f32 %v323, %v326
  %v331 = vmul.f32 %v322, %v327
  %v332 = vmul.f32 %v321, %v328
  %v333 = vadd.f32 %v307, %v329
  %v334 = vadd.f32 %v308, %v330
  %v335 = vadd.f32 %v309, %v331
  %v336 = vadd.f32 %v310, %v332
  %337 = vrot.lane.b32.xlu0 %v150, 8
  %v338 = vpop.permute.xlu0 %337
  %339 = vrot.lane.b32.xlu0 %v151, 8
  %v340 = vpop.permute.xlu0 %339
  %341 = vrot.lane.b32.xlu0 %v152, 8
  %v342 = vpop.permute.xlu0 %341
  %343 = vrot.lane.b32.xlu0 %v153, 8
  %v344 = vpop.permute.xlu0 %343
  %vm345 = vcmp.lt.s32.totalorder %v163, 8
  %v346 = vsel %vm345, %v342, %v344
  %v347 = vsel %vm345, %v340, %v342
  %v348 = vsel %vm345, %v338, %v340
  %v349 = vsel %vm345, %v344, %v338
  %s350 = scalar_lea.vmem %s5, 224
  %v351 = vld [vmem:[%s350] sm:$0xff]
  %v352 = vld [vmem:[%s350 + $0x8] sm:$0xff]
  %v353 = vld [vmem:[%s350 + $0x10] sm:$0xff]
  %v354 = vld [vmem:[%s350 + $0x18] sm:$0xff]
  %v355 = vmul.f32 %v346, %v351
  %v356 = vmul.f32 %v349, %v352
  %v357 = vmul.f32 %v348, %v353
  %v358 = vmul.f32 %v347, %v354
  %v359 = vadd.f32 %v333, %v355
  %v360 = vadd.f32 %v334, %v356
  %v361 = vadd.f32 %v335, %v357
  %v362 = vadd.f32 %v336, %v358
  %363 = vrot.lane.b32.xlu0 %v150, 7
  %v364 = vpop.permute.xlu0 %363
  %365 = vrot.lane.b32.xlu0 %v151, 7
  %v366 = vpop.permute.xlu0 %365
  %367 = vrot.lane.b32.xlu0 %v152, 7
  %v368 = vpop.permute.xlu0 %367
  %369 = vrot.lane.b32.xlu0 %v153, 7
  %v370 = vpop.permute.xlu0 %369
  %vm371 = vcmp.lt.s32.totalorder %v163, 7
  %v372 = vsel %vm371, %v368, %v370
  %v373 = vsel %vm371, %v366, %v368
  %v374 = vsel %vm371, %v364, %v366
  %v375 = vsel %vm371, %v370, %v364
  %s376 = scalar_lea.vmem %s5, 256
  %v377 = vld [vmem:[%s376] sm:$0xff]
  %v378 = vld [vmem:[%s376 + $0x8] sm:$0xff]
  %v379 = vld [vmem:[%s376 + $0x10] sm:$0xff]
  %v380 = vld [vmem:[%s376 + $0x18] sm:$0xff]
  %v381 = vmul.f32 %v372, %v377
  %v382 = vmul.f32 %v375, %v378
  %v383 = vmul.f32 %v374, %v379
  %v384 = vmul.f32 %v373, %v380
  %v385 = vadd.f32 %v359, %v381
  %v386 = vadd.f32 %v360, %v382
  %v387 = vadd.f32 %v361, %v383
  %v388 = vadd.f32 %v362, %v384
  %389 = vrot.lane.b32.xlu0 %v150, 6
  %v390 = vpop.permute.xlu0 %389
  %391 = vrot.lane.b32.xlu0 %v151, 6
  %v392 = vpop.permute.xlu0 %391
  %393 = vrot.lane.b32.xlu0 %v152, 6
  %v394 = vpop.permute.xlu0 %393
  %395 = vrot.lane.b32.xlu0 %v153, 6
  %v396 = vpop.permute.xlu0 %395
  %vm397 = vcmp.lt.s32.totalorder %v163, 6
  %v398 = vsel %vm397, %v394, %v396
  %v399 = vsel %vm397, %v392, %v394
  %v400 = vsel %vm397, %v390, %v392
  %v401 = vsel %vm397, %v396, %v390
  %s402 = scalar_lea.vmem %s5, 288
  %v403 = vld [vmem:[%s402] sm:$0xff]
  %v404 = vld [vmem:[%s402 + $0x8] sm:$0xff]
  %v405 = vld [vmem:[%s402 + $0x10] sm:$0xff]
  %v406 = vld [vmem:[%s402 + $0x18] sm:$0xff]
  %v407 = vmul.f32 %v398, %v403
  %v408 = vmul.f32 %v401, %v404
  %v409 = vmul.f32 %v400, %v405
  %v410 = vmul.f32 %v399, %v406
  %v411 = vadd.f32 %v385, %v407
  %v412 = vadd.f32 %v386, %v408
  %v413 = vadd.f32 %v387, %v409
  %v414 = vadd.f32 %v388, %v410
  %415 = vrot.lane.b32.xlu0 %v150, 2
  %v416 = vpop.permute.xlu0 %415
  %417 = vrot.lane.b32.xlu0 %v151, 2
  %v418 = vpop.permute.xlu0 %417
  %419 = vrot.lane.b32.xlu0 %v152, 2
  %v420 = vpop.permute.xlu0 %419
  %421 = vrot.lane.b32.xlu0 %v153, 2
  %v422 = vpop.permute.xlu0 %421
  %vm423 = vcmp.lt.s32.totalorder %v163, 2
  %v424 = vsel %vm423, %v420, %v422
  %v425 = vsel %vm423, %v418, %v420
  %v426 = vsel %vm423, %v416, %v418
  %v427 = vsel %vm423, %v422, %v416
  %s428 = scalar_lea.vmem %s5, 320
  %v429 = vld [vmem:[%s428] sm:$0xff]
  %v430 = vld [vmem:[%s428 + $0x8] sm:$0xff]
  %v431 = vld [vmem:[%s428 + $0x10] sm:$0xff]
  %v432 = vld [vmem:[%s428 + $0x18] sm:$0xff]
  %v433 = vmul.f32 %v424, %v429
  %v434 = vmul.f32 %v427, %v430
  %v435 = vmul.f32 %v426, %v431
  %v436 = vmul.f32 %v425, %v432
  %v437 = vadd.f32 %v411, %v433
  %v438 = vadd.f32 %v412, %v434
  %v439 = vadd.f32 %v413, %v435
  %v440 = vadd.f32 %v414, %v436
  %441 = vrot.lane.b32.xlu0 %v150, 1
  %v442 = vpop.permute.xlu0 %441
  %443 = vrot.lane.b32.xlu0 %v151, 1
  %v444 = vpop.permute.xlu0 %443
  %445 = vrot.lane.b32.xlu0 %v152, 1
  %v446 = vpop.permute.xlu0 %445
  %447 = vrot.lane.b32.xlu0 %v153, 1
  %v448 = vpop.permute.xlu0 %447
  %vm449 = vcmp.lt.s32.totalorder %v163, 1
  %v450 = vsel %vm449, %v446, %v448
  %v451 = vsel %vm449, %v444, %v446
  %v452 = vsel %vm449, %v442, %v444
  %v453 = vsel %vm449, %v448, %v442
  %s454 = scalar_lea.vmem %s5, 352
  %v455 = vld [vmem:[%s454] sm:$0xff]
  %v456 = vld [vmem:[%s454 + $0x8] sm:$0xff]
  %v457 = vld [vmem:[%s454 + $0x10] sm:$0xff]
  %v458 = vld [vmem:[%s454 + $0x18] sm:$0xff]
  %v459 = vmul.f32 %v450, %v455
  %v460 = vmul.f32 %v453, %v456
  %v461 = vmul.f32 %v452, %v457
  %v462 = vmul.f32 %v451, %v458
  %v463 = vadd.f32 %v437, %v459
  %v464 = vadd.f32 %v438, %v460
  %v465 = vadd.f32 %v439, %v461
  %v466 = vadd.f32 %v440, %v462
  %s467 = scalar_lea.vmem %s5, 384
  %v468 = vld [vmem:[%s467] sm:$0xff]
  %v469 = vld [vmem:[%s467 + $0x8] sm:$0xff]
  %v470 = vld [vmem:[%s467 + $0x10] sm:$0xff]
  %v471 = vld [vmem:[%s467 + $0x18] sm:$0xff]
  %v472 = vmul.f32 %v153, %v468
  %v473 = vmul.f32 %v150, %v469
  %v474 = vmul.f32 %v151, %v470
  %v475 = vmul.f32 %v152, %v471
  %v476 = vadd.f32 %v463, %v472
  %v477 = vadd.f32 %v464, %v473
  %v478 = vadd.f32 %v465, %v474
  %v479 = vadd.f32 %v466, %v475
  %480 = vrot.lane.b32.xlu0 %v150, 127
  %v481 = vpop.permute.xlu0 %480
  %482 = vrot.lane.b32.xlu0 %v151, 127
  %v483 = vpop.permute.xlu0 %482
  %484 = vrot.lane.b32.xlu0 %v152, 127
  %v485 = vpop.permute.xlu0 %484
  %486 = vrot.lane.b32.xlu0 %v153, 127
  %v487 = vpop.permute.xlu0 %486
  %vm488 = vcmp.lt.s32.totalorder %v163, 127
  %v489 = vsel %vm488, %v485, %v487
  %v490 = vsel %vm488, %v483, %v485
  %v491 = vsel %vm488, %v481, %v483
  %v492 = vsel %vm488, %v487, %v481
  %s493 = scalar_lea.vmem %s5, 416
  %v494 = vld [vmem:[%s493] sm:$0xff]
  %v495 = vld [vmem:[%s493 + $0x8] sm:$0xff]
  %v496 = vld [vmem:[%s493 + $0x10] sm:$0xff]
  %v497 = vld [vmem:[%s493 + $0x18] sm:$0xff]
  %v498 = vmul.f32 %v492, %v494
  %v499 = vmul.f32 %v491, %v495
  %v500 = vmul.f32 %v490, %v496
  %v501 = vmul.f32 %v489, %v497
  %v502 = vadd.f32 %v476, %v498
  %v503 = vadd.f32 %v477, %v499
  %v504 = vadd.f32 %v478, %v500
  %v505 = vadd.f32 %v479, %v501
  %506 = vrot.lane.b32.xlu0 %v150, 126
  %v507 = vpop.permute.xlu0 %506
  %508 = vrot.lane.b32.xlu0 %v151, 126
  %v509 = vpop.permute.xlu0 %508
  %510 = vrot.lane.b32.xlu0 %v152, 126
  %v511 = vpop.permute.xlu0 %510
  %512 = vrot.lane.b32.xlu0 %v153, 126
  %v513 = vpop.permute.xlu0 %512
  %vm514 = vcmp.lt.s32.totalorder %v163, 126
  %v515 = vsel %vm514, %v511, %v513
  %v516 = vsel %vm514, %v509, %v511
  %v517 = vsel %vm514, %v507, %v509
  %v518 = vsel %vm514, %v513, %v507
  %s519 = scalar_lea.vmem %s5, 448
  %v520 = vld [vmem:[%s519] sm:$0xff]
  %v521 = vld [vmem:[%s519 + $0x8] sm:$0xff]
  %v522 = vld [vmem:[%s519 + $0x10] sm:$0xff]
  %v523 = vld [vmem:[%s519 + $0x18] sm:$0xff]
  %v524 = vmul.f32 %v518, %v520
  %v525 = vmul.f32 %v517, %v521
  %v526 = vmul.f32 %v516, %v522
  %v527 = vmul.f32 %v515, %v523
  %v528 = vadd.f32 %v502, %v524
  %v529 = vadd.f32 %v503, %v525
  %v530 = vadd.f32 %v504, %v526
  %v531 = vadd.f32 %v505, %v527
  %532 = vrot.lane.b32.xlu0 %v150, 122
  %v533 = vpop.permute.xlu0 %532
  %534 = vrot.lane.b32.xlu0 %v151, 122
  %v535 = vpop.permute.xlu0 %534
  %536 = vrot.lane.b32.xlu0 %v152, 122
  %v537 = vpop.permute.xlu0 %536
  %538 = vrot.lane.b32.xlu0 %v153, 122
  %v539 = vpop.permute.xlu0 %538
  %vm540 = vcmp.lt.s32.totalorder %v163, 122
  %v541 = vsel %vm540, %v537, %v539
  %v542 = vsel %vm540, %v535, %v537
  %v543 = vsel %vm540, %v533, %v535
  %v544 = vsel %vm540, %v539, %v533
  %s545 = scalar_lea.vmem %s5, 480
  %v546 = vld [vmem:[%s545] sm:$0xff]
  %v547 = vld [vmem:[%s545 + $0x8] sm:$0xff]
  %v548 = vld [vmem:[%s545 + $0x10] sm:$0xff]
  %v549 = vld [vmem:[%s545 + $0x18] sm:$0xff]
  %v550 = vmul.f32 %v544, %v546
  %v551 = vmul.f32 %v543, %v547
  %v552 = vmul.f32 %v542, %v548
  %v553 = vmul.f32 %v541, %v549
  %v554 = vadd.f32 %v528, %v550
  %v555 = vadd.f32 %v529, %v551
  %v556 = vadd.f32 %v530, %v552
  %v557 = vadd.f32 %v531, %v553
  %558 = vrot.lane.b32.xlu0 %v150, 121
  %v559 = vpop.permute.xlu0 %558
  %560 = vrot.lane.b32.xlu0 %v151, 121
  %v561 = vpop.permute.xlu0 %560
  %562 = vrot.lane.b32.xlu0 %v152, 121
  %v563 = vpop.permute.xlu0 %562
  %564 = vrot.lane.b32.xlu0 %v153, 121
  %v565 = vpop.permute.xlu0 %564
  %vm566 = vcmp.lt.s32.totalorder %v163, 121
  %v567 = vsel %vm566, %v563, %v565
  %v568 = vsel %vm566, %v561, %v563
  %v569 = vsel %vm566, %v559, %v561
  %v570 = vsel %vm566, %v565, %v559
  %s571 = scalar_lea.vmem %s5, 512
  %v572 = vld [vmem:[%s571] sm:$0xff]
  %v573 = vld [vmem:[%s571 + $0x8] sm:$0xff]
  %v574 = vld [vmem:[%s571 + $0x10] sm:$0xff]
  %v575 = vld [vmem:[%s571 + $0x18] sm:$0xff]
  %v576 = vmul.f32 %v570, %v572
  %v577 = vmul.f32 %v569, %v573
  %v578 = vmul.f32 %v568, %v574
  %v579 = vmul.f32 %v567, %v575
  %v580 = vadd.f32 %v554, %v576
  %v581 = vadd.f32 %v555, %v577
  %v582 = vadd.f32 %v556, %v578
  %v583 = vadd.f32 %v557, %v579
  %584 = vrot.lane.b32.xlu0 %v150, 120
  %v585 = vpop.permute.xlu0 %584
  %586 = vrot.lane.b32.xlu0 %v151, 120
  %v587 = vpop.permute.xlu0 %586
  %588 = vrot.lane.b32.xlu0 %v152, 120
  %v589 = vpop.permute.xlu0 %588
  %590 = vrot.lane.b32.xlu0 %v153, 120
  %v591 = vpop.permute.xlu0 %590
  %vm592 = vcmp.lt.s32.totalorder %v163, 120
  %v593 = vsel %vm592, %v589, %v591
  %v594 = vsel %vm592, %v587, %v589
  %v595 = vsel %vm592, %v585, %v587
  %v596 = vsel %vm592, %v591, %v585
  %s597 = scalar_lea.vmem %s5, 544
  %v598 = vld [vmem:[%s597] sm:$0xff]
  %v599 = vld [vmem:[%s597 + $0x8] sm:$0xff]
  %v600 = vld [vmem:[%s597 + $0x10] sm:$0xff]
  %v601 = vld [vmem:[%s597 + $0x18] sm:$0xff]
  %v602 = vmul.f32 %v596, %v598
  %v603 = vmul.f32 %v595, %v599
  %v604 = vmul.f32 %v594, %v600
  %v605 = vmul.f32 %v593, %v601
  %v606 = vadd.f32 %v580, %v602
  %v607 = vadd.f32 %v581, %v603
  %v608 = vadd.f32 %v582, %v604
  %v609 = vadd.f32 %v583, %v605
  %610 = vrot.lane.b32.xlu0 %v150, 119
  %v611 = vpop.permute.xlu0 %610
  %612 = vrot.lane.b32.xlu0 %v151, 119
  %v613 = vpop.permute.xlu0 %612
  %614 = vrot.lane.b32.xlu0 %v152, 119
  %v615 = vpop.permute.xlu0 %614
  %616 = vrot.lane.b32.xlu0 %v153, 119
  %v617 = vpop.permute.xlu0 %616
  %vm618 = vcmp.lt.s32.totalorder %v163, 119
  %v619 = vsel %vm618, %v615, %v617
  %v620 = vsel %vm618, %v613, %v615
  %v621 = vsel %vm618, %v611, %v613
  %v622 = vsel %vm618, %v617, %v611
  %s623 = scalar_lea.vmem %s5, 576
  %v624 = vld [vmem:[%s623] sm:$0xff]
  %v625 = vld [vmem:[%s623 + $0x8] sm:$0xff]
  %v626 = vld [vmem:[%s623 + $0x10] sm:$0xff]
  %v627 = vld [vmem:[%s623 + $0x18] sm:$0xff]
  %v628 = vmul.f32 %v622, %v624
  %v629 = vmul.f32 %v621, %v625
  %v630 = vmul.f32 %v620, %v626
  %v631 = vmul.f32 %v619, %v627
  %v632 = vadd.f32 %v606, %v628
  %v633 = vadd.f32 %v607, %v629
  %v634 = vadd.f32 %v608, %v630
  %v635 = vadd.f32 %v609, %v631
  %636 = vrot.lane.b32.xlu0 %v150, 118
  %v637 = vpop.permute.xlu0 %636
  %638 = vrot.lane.b32.xlu0 %v151, 118
  %v639 = vpop.permute.xlu0 %638
  %640 = vrot.lane.b32.xlu0 %v152, 118
  %v641 = vpop.permute.xlu0 %640
  %642 = vrot.lane.b32.xlu0 %v153, 118
  %v643 = vpop.permute.xlu0 %642
  %vm644 = vcmp.lt.s32.totalorder %v163, 118
  %v645 = vsel %vm644, %v641, %v643
  %v646 = vsel %vm644, %v639, %v641
  %v647 = vsel %vm644, %v637, %v639
  %v648 = vsel %vm644, %v643, %v637
  %s649 = scalar_lea.vmem %s5, 608
  %v650 = vld [vmem:[%s649] sm:$0xff]
  %v651 = vld [vmem:[%s649 + $0x8] sm:$0xff]
  %v652 = vld [vmem:[%s649 + $0x10] sm:$0xff]
  %v653 = vld [vmem:[%s649 + $0x18] sm:$0xff]
  %v654 = vmul.f32 %v648, %v650
  %v655 = vmul.f32 %v647, %v651
  %v656 = vmul.f32 %v646, %v652
  %v657 = vmul.f32 %v645, %v653
  %v658 = vadd.f32 %v632, %v654
  %v659 = vadd.f32 %v633, %v655
  %v660 = vadd.f32 %v634, %v656
  %v661 = vadd.f32 %v635, %v657
  %662 = vrot.lane.b32.xlu0 %v150, 114
  %v663 = vpop.permute.xlu0 %662
  %664 = vrot.lane.b32.xlu0 %v151, 114
  %v665 = vpop.permute.xlu0 %664
  %666 = vrot.lane.b32.xlu0 %v152, 114
  %v667 = vpop.permute.xlu0 %666
  %668 = vrot.lane.b32.xlu0 %v153, 114
  %v669 = vpop.permute.xlu0 %668
  %vm670 = vcmp.lt.s32.totalorder %v163, 114
  %v671 = vsel %vm670, %v667, %v669
  %v672 = vsel %vm670, %v665, %v667
  %v673 = vsel %vm670, %v663, %v665
  %v674 = vsel %vm670, %v669, %v663
  %s675 = scalar_lea.vmem %s5, 640
  %v676 = vld [vmem:[%s675] sm:$0xff]
  %v677 = vld [vmem:[%s675 + $0x8] sm:$0xff]
  %v678 = vld [vmem:[%s675 + $0x10] sm:$0xff]
  %v679 = vld [vmem:[%s675 + $0x18] sm:$0xff]
  %v680 = vmul.f32 %v674, %v676
  %v681 = vmul.f32 %v673, %v677
  %v682 = vmul.f32 %v672, %v678
  %v683 = vmul.f32 %v671, %v679
  %v684 = vadd.f32 %v658, %v680
  %v685 = vadd.f32 %v659, %v681
  %v686 = vadd.f32 %v660, %v682
  %v687 = vadd.f32 %v661, %v683
  %688 = vrot.lane.b32.xlu0 %v150, 113
  %v689 = vpop.permute.xlu0 %688
  %690 = vrot.lane.b32.xlu0 %v151, 113
  %v691 = vpop.permute.xlu0 %690
  %692 = vrot.lane.b32.xlu0 %v152, 113
  %v693 = vpop.permute.xlu0 %692
  %694 = vrot.lane.b32.xlu0 %v153, 113
  %v695 = vpop.permute.xlu0 %694
  %vm696 = vcmp.lt.s32.totalorder %v163, 113
  %v697 = vsel %vm696, %v693, %v695
  %v698 = vsel %vm696, %v691, %v693
  %v699 = vsel %vm696, %v689, %v691
  %v700 = vsel %vm696, %v695, %v689
  %s701 = scalar_lea.vmem %s5, 672
  %v702 = vld [vmem:[%s701] sm:$0xff]
  %v703 = vld [vmem:[%s701 + $0x8] sm:$0xff]
  %v704 = vld [vmem:[%s701 + $0x10] sm:$0xff]
  %v705 = vld [vmem:[%s701 + $0x18] sm:$0xff]
  %v706 = vmul.f32 %v700, %v702
  %v707 = vmul.f32 %v699, %v703
  %v708 = vmul.f32 %v698, %v704
  %v709 = vmul.f32 %v697, %v705
  %v710 = vadd.f32 %v684, %v706
  %v711 = vadd.f32 %v685, %v707
  %v712 = vadd.f32 %v686, %v708
  %v713 = vadd.f32 %v687, %v709
  %714 = vrot.lane.b32.xlu0 %v150, 112
  %v715 = vpop.permute.xlu0 %714
  %716 = vrot.lane.b32.xlu0 %v151, 112
  %v717 = vpop.permute.xlu0 %716
  %718 = vrot.lane.b32.xlu0 %v152, 112
  %v719 = vpop.permute.xlu0 %718
  %720 = vrot.lane.b32.xlu0 %v153, 112
  %v721 = vpop.permute.xlu0 %720
  %vm722 = vcmp.lt.s32.totalorder %v163, 112
  %v723 = vsel %vm722, %v719, %v721
  %v724 = vsel %vm722, %v717, %v719
  %v725 = vsel %vm722, %v715, %v717
  %v726 = vsel %vm722, %v721, %v715
  %s727 = scalar_lea.vmem %s5, 704
  %v728 = vld [vmem:[%s727] sm:$0xff]
  %v729 = vld [vmem:[%s727 + $0x8] sm:$0xff]
  %v730 = vld [vmem:[%s727 + $0x10] sm:$0xff]
  %v731 = vld [vmem:[%s727 + $0x18] sm:$0xff]
  %v732 = vmul.f32 %v726, %v728
  %v733 = vmul.f32 %v725, %v729
  %v734 = vmul.f32 %v724, %v730
  %v735 = vmul.f32 %v723, %v731
  %v736 = vadd.f32 %v710, %v732
  %v737 = vadd.f32 %v711, %v733
  %v738 = vadd.f32 %v712, %v734
  %v739 = vadd.f32 %v713, %v735
  %740 = vrot.lane.b32.xlu0 %v150, 111
  %v741 = vpop.permute.xlu0 %740
  %742 = vrot.lane.b32.xlu0 %v151, 111
  %v743 = vpop.permute.xlu0 %742
  %744 = vrot.lane.b32.xlu0 %v152, 111
  %v745 = vpop.permute.xlu0 %744
  %746 = vrot.lane.b32.xlu0 %v153, 111
  %v747 = vpop.permute.xlu0 %746
  %vm748 = vcmp.lt.s32.totalorder %v163, 111
  %v749 = vsel %vm748, %v745, %v747
  %v750 = vsel %vm748, %v743, %v745
  %v751 = vsel %vm748, %v741, %v743
  %v752 = vsel %vm748, %v747, %v741
  %s753 = scalar_lea.vmem %s5, 736
  %v754 = vld [vmem:[%s753] sm:$0xff]
  %v755 = vld [vmem:[%s753 + $0x8] sm:$0xff]
  %v756 = vld [vmem:[%s753 + $0x10] sm:$0xff]
  %v757 = vld [vmem:[%s753 + $0x18] sm:$0xff]
  %v758 = vmul.f32 %v752, %v754
  %v759 = vmul.f32 %v751, %v755
  %v760 = vmul.f32 %v750, %v756
  %v761 = vmul.f32 %v749, %v757
  %v762 = vadd.f32 %v736, %v758
  %v763 = vadd.f32 %v737, %v759
  %v764 = vadd.f32 %v738, %v760
  %v765 = vadd.f32 %v739, %v761
  %766 = vrot.lane.b32.xlu0 %v150, 110
  %v767 = vpop.permute.xlu0 %766
  %768 = vrot.lane.b32.xlu0 %v151, 110
  %v769 = vpop.permute.xlu0 %768
  %770 = vrot.lane.b32.xlu0 %v152, 110
  %v771 = vpop.permute.xlu0 %770
  %772 = vrot.lane.b32.xlu0 %v153, 110
  %v773 = vpop.permute.xlu0 %772
  %vm774 = vcmp.lt.s32.totalorder %v163, 110
  %v775 = vsel %vm774, %v771, %v773
  %v776 = vsel %vm774, %v769, %v771
  %v777 = vsel %vm774, %v767, %v769
  %v778 = vsel %vm774, %v773, %v767
  %s779 = scalar_lea.vmem %s5, 768
  %v780 = vld [vmem:[%s779] sm:$0xff]
  %v781 = vld [vmem:[%s779 + $0x8] sm:$0xff]
  %v782 = vld [vmem:[%s779 + $0x10] sm:$0xff]
  %v783 = vld [vmem:[%s779 + $0x18] sm:$0xff]
  %v784 = vmul.f32 %v778, %v780
  %v785 = vmul.f32 %v777, %v781
  %v786 = vmul.f32 %v776, %v782
  %v787 = vmul.f32 %v775, %v783
  %v788 = vadd.f32 %v762, %v784
  %v789 = vadd.f32 %v763, %v785
  %v790 = vadd.f32 %v764, %v786
  %v791 = vadd.f32 %v765, %v787
  %792 = vrot.lane.b32.xlu0 %v150, 82
  %v793 = vpop.permute.xlu0 %792
  %794 = vrot.lane.b32.xlu0 %v151, 82
  %v795 = vpop.permute.xlu0 %794
  %796 = vrot.lane.b32.xlu0 %v152, 82
  %v797 = vpop.permute.xlu0 %796
  %798 = vrot.lane.b32.xlu0 %v153, 82
  %v799 = vpop.permute.xlu0 %798
  %vm800 = vcmp.lt.s32.totalorder %v163, 82
  %v801 = vsel %vm800, %v797, %v799
  %v802 = vsel %vm800, %v795, %v797
  %v803 = vsel %vm800, %v793, %v795
  %v804 = vsel %vm800, %v799, %v793
  %s805 = scalar_lea.vmem %s5, 800
  %v806 = vld [vmem:[%s805] sm:$0xff]
  %v807 = vld [vmem:[%s805 + $0x8] sm:$0xff]
  %v808 = vld [vmem:[%s805 + $0x10] sm:$0xff]
  %v809 = vld [vmem:[%s805 + $0x18] sm:$0xff]
  %v810 = vmul.f32 %v804, %v806
  %v811 = vmul.f32 %v803, %v807
  %v812 = vmul.f32 %v802, %v808
  %v813 = vmul.f32 %v801, %v809
  %v814 = vadd.f32 %v788, %v810
  %v815 = vadd.f32 %v789, %v811
  %v816 = vadd.f32 %v790, %v812
  %v817 = vadd.f32 %v791, %v813
  %818 = vrot.lane.b32.xlu0 %v150, 81
  %v819 = vpop.permute.xlu0 %818
  %820 = vrot.lane.b32.xlu0 %v151, 81
  %v821 = vpop.permute.xlu0 %820
  %822 = vrot.lane.b32.xlu0 %v152, 81
  %v823 = vpop.permute.xlu0 %822
  %824 = vrot.lane.b32.xlu0 %v153, 81
  %v825 = vpop.permute.xlu0 %824
  %vm826 = vcmp.lt.s32.totalorder %v163, 81
  %v827 = vsel %vm826, %v823, %v825
  %v828 = vsel %vm826, %v821, %v823
  %v829 = vsel %vm826, %v819, %v821
  %v830 = vsel %vm826, %v825, %v819
  %s831 = scalar_lea.vmem %s5, 832
  %v832 = vld [vmem:[%s831] sm:$0xff]
  %v833 = vld [vmem:[%s831 + $0x8] sm:$0xff]
  %v834 = vld [vmem:[%s831 + $0x10] sm:$0xff]
  %v835 = vld [vmem:[%s831 + $0x18] sm:$0xff]
  %v836 = vmul.f32 %v830, %v832
  %v837 = vmul.f32 %v829, %v833
  %v838 = vmul.f32 %v828, %v834
  %v839 = vmul.f32 %v827, %v835
  %v840 = vadd.f32 %v814, %v836
  %v841 = vadd.f32 %v815, %v837
  %v842 = vadd.f32 %v816, %v838
  %v843 = vadd.f32 %v817, %v839
  %844 = vrot.lane.b32.xlu0 %v150, 80
  %v845 = vpop.permute.xlu0 %844
  %846 = vrot.lane.b32.xlu0 %v151, 80
  %v847 = vpop.permute.xlu0 %846
  %848 = vrot.lane.b32.xlu0 %v152, 80
  %v849 = vpop.permute.xlu0 %848
  %850 = vrot.lane.b32.xlu0 %v153, 80
  %v851 = vpop.permute.xlu0 %850
  %vm852 = vcmp.lt.s32.totalorder %v163, 80
  %v853 = vsel %vm852, %v849, %v851
  %v854 = vsel %vm852, %v847, %v849
  %v855 = vsel %vm852, %v845, %v847
  %v856 = vsel %vm852, %v851, %v845
  %s857 = scalar_lea.vmem %s5, 864
  %v858 = vld [vmem:[%s857] sm:$0xff]
  %v859 = vld [vmem:[%s857 + $0x8] sm:$0xff]
  %v860 = vld [vmem:[%s857 + $0x10] sm:$0xff]
  %v861 = vld [vmem:[%s857 + $0x18] sm:$0xff]
  %v862 = vmul.f32 %v856, %v858
  %v863 = vmul.f32 %v855, %v859
  %v864 = vmul.f32 %v854, %v860
  %v865 = vmul.f32 %v853, %v861
  %v866 = vadd.f32 %v840, %v862
  %v867 = vadd.f32 %v841, %v863
  %v868 = vadd.f32 %v842, %v864
  %v869 = vadd.f32 %v843, %v865
  %870 = vrot.lane.b32.xlu0 %v150, 79
  %v871 = vpop.permute.xlu0 %870
  %872 = vrot.lane.b32.xlu0 %v151, 79
  %v873 = vpop.permute.xlu0 %872
  %874 = vrot.lane.b32.xlu0 %v152, 79
  %v875 = vpop.permute.xlu0 %874
  %876 = vrot.lane.b32.xlu0 %v153, 79
  %v877 = vpop.permute.xlu0 %876
  %vm878 = vcmp.lt.s32.totalorder %v163, 79
  %v879 = vsel %vm878, %v875, %v877
  %v880 = vsel %vm878, %v873, %v875
  %v881 = vsel %vm878, %v871, %v873
  %v882 = vsel %vm878, %v877, %v871
  %s883 = scalar_lea.vmem %s5, 896
  %v884 = vld [vmem:[%s883] sm:$0xff]
  %v885 = vld [vmem:[%s883 + $0x8] sm:$0xff]
  %v886 = vld [vmem:[%s883 + $0x10] sm:$0xff]
  %v887 = vld [vmem:[%s883 + $0x18] sm:$0xff]
  %v888 = vmul.f32 %v882, %v884
  %v889 = vmul.f32 %v881, %v885
  %v890 = vmul.f32 %v880, %v886
  %v891 = vmul.f32 %v879, %v887
  %v892 = vadd.f32 %v866, %v888
  %v893 = vadd.f32 %v867, %v889
  %v894 = vadd.f32 %v868, %v890
  %v895 = vadd.f32 %v869, %v891
  %896 = vrot.lane.b32.xlu0 %v150, 78
  %v897 = vpop.permute.xlu0 %896
  %898 = vrot.lane.b32.xlu0 %v151, 78
  %v899 = vpop.permute.xlu0 %898
  %900 = vrot.lane.b32.xlu0 %v152, 78
  %v901 = vpop.permute.xlu0 %900
  %902 = vrot.lane.b32.xlu0 %v153, 78
  %v903 = vpop.permute.xlu0 %902
  %vm904 = vcmp.lt.s32.totalorder %v163, 78
  %v905 = vsel %vm904, %v901, %v903
  %v906 = vsel %vm904, %v899, %v901
  %v907 = vsel %vm904, %v897, %v899
  %v908 = vsel %vm904, %v903, %v897
  %s909 = scalar_lea.vmem %s5, 928
  %v910 = vld [vmem:[%s909] sm:$0xff]
  %v911 = vld [vmem:[%s909 + $0x8] sm:$0xff]
  %v912 = vld [vmem:[%s909 + $0x10] sm:$0xff]
  %v913 = vld [vmem:[%s909 + $0x18] sm:$0xff]
  %v914 = vmul.f32 %v908, %v910
  %v915 = vmul.f32 %v907, %v911
  %v916 = vmul.f32 %v906, %v912
  %v917 = vmul.f32 %v905, %v913
  %v918 = vadd.f32 %v892, %v914
  %v919 = vadd.f32 %v893, %v915
  %v920 = vadd.f32 %v894, %v916
  %v921 = vadd.f32 %v895, %v917
  %922 = vrot.lane.b32.xlu0 %v150, 74
  %v923 = vpop.permute.xlu0 %922
  %924 = vrot.lane.b32.xlu0 %v151, 74
  %v925 = vpop.permute.xlu0 %924
  %926 = vrot.lane.b32.xlu0 %v152, 74
  %v927 = vpop.permute.xlu0 %926
  %928 = vrot.lane.b32.xlu0 %v153, 74
  %v929 = vpop.permute.xlu0 %928
  %vm930 = vcmp.lt.s32.totalorder %v163, 74
  %v931 = vsel %vm930, %v927, %v929
  %v932 = vsel %vm930, %v925, %v927
  %v933 = vsel %vm930, %v923, %v925
  %v934 = vsel %vm930, %v929, %v923
  %s935 = scalar_lea.vmem %s5, 960
  %v936 = vld [vmem:[%s935] sm:$0xff]
  %v937 = vld [vmem:[%s935 + $0x8] sm:$0xff]
  %v938 = vld [vmem:[%s935 + $0x10] sm:$0xff]
  %v939 = vld [vmem:[%s935 + $0x18] sm:$0xff]
  %v940 = vmul.f32 %v934, %v936
  %v941 = vmul.f32 %v933, %v937
  %v942 = vmul.f32 %v932, %v938
  %v943 = vmul.f32 %v931, %v939
  %v944 = vadd.f32 %v918, %v940
  %v945 = vadd.f32 %v919, %v941
  %v946 = vadd.f32 %v920, %v942
  %v947 = vadd.f32 %v921, %v943
  %948 = vrot.lane.b32.xlu0 %v150, 73
  %v949 = vpop.permute.xlu0 %948
  %950 = vrot.lane.b32.xlu0 %v151, 73
  %v951 = vpop.permute.xlu0 %950
  %952 = vrot.lane.b32.xlu0 %v152, 73
  %v953 = vpop.permute.xlu0 %952
  %954 = vrot.lane.b32.xlu0 %v153, 73
  %v955 = vpop.permute.xlu0 %954
  %vm956 = vcmp.lt.s32.totalorder %v163, 73
  %v957 = vsel %vm956, %v953, %v955
  %v958 = vsel %vm956, %v951, %v953
  %v959 = vsel %vm956, %v949, %v951
  %v960 = vsel %vm956, %v955, %v949
  %v961 = vld [vmem:[%s4] sm:$0xff]
  %v962 = vld [vmem:[%s4 + $0x8] sm:$0xff]
  %v963 = vld [vmem:[%s4 + $0x10] sm:$0xff]
  %v964 = vld [vmem:[%s4 + $0x18] sm:$0xff]
  %v965 = vmul.f32 %v960, %v961
  %v966 = vmul.f32 %v959, %v962
  %v967 = vmul.f32 %v958, %v963
  %v968 = vmul.f32 %v957, %v964
  %v969 = vadd.f32 %v965, 0.0
  %v970 = vadd.f32 %v966, 0.0
  %v971 = vadd.f32 %v967, 0.0
  %v972 = vadd.f32 %v968, 0.0
  %s973 = scalar_lea.vmem %s5, 992
  %v974 = vld [vmem:[%s973] sm:$0xff]
  %v975 = vld [vmem:[%s973 + $0x8] sm:$0xff]
  %v976 = vld [vmem:[%s973 + $0x10] sm:$0xff]
  %v977 = vld [vmem:[%s973 + $0x18] sm:$0xff]
  %v978 = vmul.f32 %v960, %v974
  %v979 = vmul.f32 %v959, %v975
  %v980 = vmul.f32 %v958, %v976
  %v981 = vmul.f32 %v957, %v977
  %v982 = vadd.f32 %v944, %v978
  %v983 = vadd.f32 %v945, %v979
  %v984 = vadd.f32 %v946, %v980
  %v985 = vadd.f32 %v947, %v981
  %986 = vrot.lane.b32.xlu0 %v150, 72
  %v987 = vpop.permute.xlu0 %986
  %988 = vrot.lane.b32.xlu0 %v151, 72
  %v989 = vpop.permute.xlu0 %988
  %990 = vrot.lane.b32.xlu0 %v152, 72
  %v991 = vpop.permute.xlu0 %990
  %992 = vrot.lane.b32.xlu0 %v153, 72
  %v993 = vpop.permute.xlu0 %992
  %vm994 = vcmp.lt.s32.totalorder %v163, 72
  %v995 = vsel %vm994, %v991, %v993
  %v996 = vsel %vm994, %v989, %v991
  %v997 = vsel %vm994, %v987, %v989
  %v998 = vsel %vm994, %v993, %v987
  %s999 = scalar_lea.vmem %s4, 32
  %v1000 = vld [vmem:[%s999] sm:$0xff]
  %v1001 = vld [vmem:[%s999 + $0x8] sm:$0xff]
  %v1002 = vld [vmem:[%s999 + $0x10] sm:$0xff]
  %v1003 = vld [vmem:[%s999 + $0x18] sm:$0xff]
  %v1004 = vmul.f32 %v998, %v1000
  %v1005 = vmul.f32 %v997, %v1001
  %v1006 = vmul.f32 %v996, %v1002
  %v1007 = vmul.f32 %v995, %v1003
  %v1008 = vadd.f32 %v969, %v1004
  %v1009 = vadd.f32 %v970, %v1005
  %v1010 = vadd.f32 %v971, %v1006
  %v1011 = vadd.f32 %v972, %v1007
  %s1012 = scalar_lea.vmem %s5, 1024
  %v1013 = vld [vmem:[%s1012] sm:$0xff]
  %v1014 = vld [vmem:[%s1012 + $0x8] sm:$0xff]
  %v1015 = vld [vmem:[%s1012 + $0x10] sm:$0xff]
  %v1016 = vld [vmem:[%s1012 + $0x18] sm:$0xff]
  %v1017 = vmul.f32 %v998, %v1013
  %v1018 = vmul.f32 %v997, %v1014
  %v1019 = vmul.f32 %v996, %v1015
  %v1020 = vmul.f32 %v995, %v1016
  %v1021 = vadd.f32 %v982, %v1017
  %v1022 = vadd.f32 %v983, %v1018
  %v1023 = vadd.f32 %v984, %v1019
  %v1024 = vadd.f32 %v985, %v1020
  %1025 = vrot.lane.b32.xlu0 %v150, 71
  %v1026 = vpop.permute.xlu0 %1025
  %1027 = vrot.lane.b32.xlu0 %v151, 71
  %v1028 = vpop.permute.xlu0 %1027
  %1029 = vrot.lane.b32.xlu0 %v152, 71
  %v1030 = vpop.permute.xlu0 %1029
  %1031 = vrot.lane.b32.xlu0 %v153, 71
  %v1032 = vpop.permute.xlu0 %1031
  %vm1033 = vcmp.lt.s32.totalorder %v163, 71
  %v1034 = vsel %vm1033, %v1030, %v1032
  %v1035 = vsel %vm1033, %v1028, %v1030
  %v1036 = vsel %vm1033, %v1026, %v1028
  %v1037 = vsel %vm1033, %v1032, %v1026
  %s1038 = scalar_lea.vmem %s4, 64
  %v1039 = vld [vmem:[%s1038] sm:$0xff]
  %v1040 = vld [vmem:[%s1038 + $0x8] sm:$0xff]
  %v1041 = vld [vmem:[%s1038 + $0x10] sm:$0xff]
  %v1042 = vld [vmem:[%s1038 + $0x18] sm:$0xff]
  %v1043 = vmul.f32 %v1037, %v1039
  %v1044 = vmul.f32 %v1036, %v1040
  %v1045 = vmul.f32 %v1035, %v1041
  %v1046 = vmul.f32 %v1034, %v1042
  %v1047 = vadd.f32 %v1008, %v1043
  %v1048 = vadd.f32 %v1009, %v1044
  %v1049 = vadd.f32 %v1010, %v1045
  %v1050 = vadd.f32 %v1011, %v1046
  %s1051 = scalar_lea.vmem %s5, 1056
  %v1052 = vld [vmem:[%s1051] sm:$0xff]
  %v1053 = vld [vmem:[%s1051 + $0x8] sm:$0xff]
  %v1054 = vld [vmem:[%s1051 + $0x10] sm:$0xff]
  %v1055 = vld [vmem:[%s1051 + $0x18] sm:$0xff]
  %v1056 = vmul.f32 %v1037, %v1052
  %v1057 = vmul.f32 %v1036, %v1053
  %v1058 = vmul.f32 %v1035, %v1054
  %v1059 = vmul.f32 %v1034, %v1055
  %v1060 = vadd.f32 %v1021, %v1056
  %v1061 = vadd.f32 %v1022, %v1057
  %v1062 = vadd.f32 %v1023, %v1058
  %v1063 = vadd.f32 %v1024, %v1059
  %1064 = vrot.lane.b32.xlu0 %v150, 70
  %v1065 = vpop.permute.xlu0 %1064
  %1066 = vrot.lane.b32.xlu0 %v151, 70
  %v1067 = vpop.permute.xlu0 %1066
  %1068 = vrot.lane.b32.xlu0 %v152, 70
  %v1069 = vpop.permute.xlu0 %1068
  %1070 = vrot.lane.b32.xlu0 %v153, 70
  %v1071 = vpop.permute.xlu0 %1070
  %vm1072 = vcmp.lt.s32.totalorder %v163, 70
  %v1073 = vsel %vm1072, %v1069, %v1071
  %v1074 = vsel %vm1072, %v1067, %v1069
  %v1075 = vsel %vm1072, %v1065, %v1067
  %v1076 = vsel %vm1072, %v1071, %v1065
  %s1077 = scalar_lea.vmem %s5, 1088
  %v1078 = vld [vmem:[%s1077] sm:$0xff]
  %v1079 = vld [vmem:[%s1077 + $0x8] sm:$0xff]
  %v1080 = vld [vmem:[%s1077 + $0x10] sm:$0xff]
  %v1081 = vld [vmem:[%s1077 + $0x18] sm:$0xff]
  %v1082 = vmul.f32 %v1076, %v1078
  %v1083 = vmul.f32 %v1075, %v1079
  %v1084 = vmul.f32 %v1074, %v1080
  %v1085 = vmul.f32 %v1073, %v1081
  %v1086 = vadd.f32 %v1060, %v1082
  %v1087 = vadd.f32 %v1061, %v1083
  %v1088 = vadd.f32 %v1062, %v1084
  %v1089 = vadd.f32 %v1063, %v1085
  %1090 = vrot.lane.b32.xlu0 %v150, 66
  %v1091 = vpop.permute.xlu0 %1090
  %1092 = vrot.lane.b32.xlu0 %v151, 66
  %v1093 = vpop.permute.xlu0 %1092
  %1094 = vrot.lane.b32.xlu0 %v152, 66
  %v1095 = vpop.permute.xlu0 %1094
  %1096 = vrot.lane.b32.xlu0 %v153, 66
  %v1097 = vpop.permute.xlu0 %1096
  %vm1098 = vcmp.lt.s32.totalorder %v163, 66
  %v1099 = vsel %vm1098, %v1095, %v1097
  %v1100 = vsel %vm1098, %v1093, %v1095
  %v1101 = vsel %vm1098, %v1091, %v1093
  %v1102 = vsel %vm1098, %v1097, %v1091
  %s1103 = scalar_lea.vmem %s5, 1120
  %v1104 = vld [vmem:[%s1103] sm:$0xff]
  %v1105 = vld [vmem:[%s1103 + $0x8] sm:$0xff]
  %v1106 = vld [vmem:[%s1103 + $0x10] sm:$0xff]
  %v1107 = vld [vmem:[%s1103 + $0x18] sm:$0xff]
  %v1108 = vmul.f32 %v1102, %v1104
  %v1109 = vmul.f32 %v1101, %v1105
  %v1110 = vmul.f32 %v1100, %v1106
  %v1111 = vmul.f32 %v1099, %v1107
  %v1112 = vadd.f32 %v1086, %v1108
  %v1113 = vadd.f32 %v1087, %v1109
  %v1114 = vadd.f32 %v1088, %v1110
  %v1115 = vadd.f32 %v1089, %v1111
  %1116 = vrot.lane.b32.xlu0 %v150, 65
  %v1117 = vpop.permute.xlu0 %1116
  %1118 = vrot.lane.b32.xlu0 %v151, 65
  %v1119 = vpop.permute.xlu0 %1118
  %1120 = vrot.lane.b32.xlu0 %v152, 65
  %v1121 = vpop.permute.xlu0 %1120
  %1122 = vrot.lane.b32.xlu0 %v153, 65
  %v1123 = vpop.permute.xlu0 %1122
  %vm1124 = vcmp.lt.s32.totalorder %v163, 65
  %v1125 = vsel %vm1124, %v1121, %v1123
  %v1126 = vsel %vm1124, %v1119, %v1121
  %v1127 = vsel %vm1124, %v1117, %v1119
  %v1128 = vsel %vm1124, %v1123, %v1117
  %s1129 = scalar_lea.vmem %s4, 96
  %v1130 = vld [vmem:[%s1129] sm:$0xff]
  %v1131 = vld [vmem:[%s1129 + $0x8] sm:$0xff]
  %v1132 = vld [vmem:[%s1129 + $0x10] sm:$0xff]
  %v1133 = vld [vmem:[%s1129 + $0x18] sm:$0xff]
  %v1134 = vmul.f32 %v1128, %v1130
  %v1135 = vmul.f32 %v1127, %v1131
  %v1136 = vmul.f32 %v1126, %v1132
  %v1137 = vmul.f32 %v1125, %v1133
  %v1138 = vadd.f32 %v1047, %v1134
  %v1139 = vadd.f32 %v1048, %v1135
  %v1140 = vadd.f32 %v1049, %v1136
  %v1141 = vadd.f32 %v1050, %v1137
  %s1142 = scalar_lea.vmem %s5, 1152
  %v1143 = vld [vmem:[%s1142] sm:$0xff]
  %v1144 = vld [vmem:[%s1142 + $0x8] sm:$0xff]
  %v1145 = vld [vmem:[%s1142 + $0x10] sm:$0xff]
  %v1146 = vld [vmem:[%s1142 + $0x18] sm:$0xff]
  %v1147 = vmul.f32 %v1128, %v1143
  %v1148 = vmul.f32 %v1127, %v1144
  %v1149 = vmul.f32 %v1126, %v1145
  %v1150 = vmul.f32 %v1125, %v1146
  %v1151 = vadd.f32 %v1112, %v1147
  %v1152 = vadd.f32 %v1113, %v1148
  %v1153 = vadd.f32 %v1114, %v1149
  %v1154 = vadd.f32 %v1115, %v1150
  %1155 = vrot.lane.b32.xlu0 %v150, 64
  %v1156 = vpop.permute.xlu0 %1155
  %1157 = vrot.lane.b32.xlu0 %v151, 64
  %v1158 = vpop.permute.xlu0 %1157
  %1159 = vrot.lane.b32.xlu0 %v152, 64
  %v1160 = vpop.permute.xlu0 %1159
  %1161 = vrot.lane.b32.xlu0 %v153, 64
  %v1162 = vpop.permute.xlu0 %1161
  %vm1163 = vcmp.lt.s32.totalorder %v163, 64
  %v1164 = vsel %vm1163, %v1160, %v1162
  %v1165 = vsel %vm1163, %v1158, %v1160
  %v1166 = vsel %vm1163, %v1156, %v1158
  %v1167 = vsel %vm1163, %v1162, %v1156
  %s1168 = scalar_lea.vmem %s4, 128
  %v1169 = vld [vmem:[%s1168] sm:$0xff]
  %v1170 = vld [vmem:[%s1168 + $0x8] sm:$0xff]
  %v1171 = vld [vmem:[%s1168 + $0x10] sm:$0xff]
  %v1172 = vld [vmem:[%s1168 + $0x18] sm:$0xff]
  %v1173 = vmul.f32 %v1167, %v1169
  %v1174 = vmul.f32 %v1166, %v1170
  %v1175 = vmul.f32 %v1165, %v1171
  %v1176 = vmul.f32 %v1164, %v1172
  %v1177 = vadd.f32 %v1138, %v1173
  %v1178 = vadd.f32 %v1139, %v1174
  %v1179 = vadd.f32 %v1140, %v1175
  %v1180 = vadd.f32 %v1141, %v1176
  %s1181 = scalar_lea.vmem %s5, 1184
  %v1182 = vld [vmem:[%s1181] sm:$0xff]
  %v1183 = vld [vmem:[%s1181 + $0x8] sm:$0xff]
  %v1184 = vld [vmem:[%s1181 + $0x10] sm:$0xff]
  %v1185 = vld [vmem:[%s1181 + $0x18] sm:$0xff]
  %v1186 = vmul.f32 %v1167, %v1182
  %v1187 = vmul.f32 %v1166, %v1183
  %v1188 = vmul.f32 %v1165, %v1184
  %v1189 = vmul.f32 %v1164, %v1185
  %v1190 = vadd.f32 %v1151, %v1186
  %v1191 = vadd.f32 %v1152, %v1187
  %v1192 = vadd.f32 %v1153, %v1188
  %v1193 = vadd.f32 %v1154, %v1189
  %1194 = vrot.lane.b32.xlu0 %v150, 63
  %v1195 = vpop.permute.xlu0 %1194
  %1196 = vrot.lane.b32.xlu0 %v151, 63
  %v1197 = vpop.permute.xlu0 %1196
  %1198 = vrot.lane.b32.xlu0 %v152, 63
  %v1199 = vpop.permute.xlu0 %1198
  %1200 = vrot.lane.b32.xlu0 %v153, 63
  %v1201 = vpop.permute.xlu0 %1200
  %vm1202 = vcmp.lt.s32.totalorder %v163, 63
  %v1203 = vsel %vm1202, %v1199, %v1201
  %v1204 = vsel %vm1202, %v1197, %v1199
  %v1205 = vsel %vm1202, %v1195, %v1197
  %v1206 = vsel %vm1202, %v1201, %v1195
  %s1207 = scalar_lea.vmem %s4, 160
  %v1208 = vld [vmem:[%s1207] sm:$0xff]
  %v1209 = vld [vmem:[%s1207 + $0x8] sm:$0xff]
  %v1210 = vld [vmem:[%s1207 + $0x10] sm:$0xff]
  %v1211 = vld [vmem:[%s1207 + $0x18] sm:$0xff]
  %v1212 = vmul.f32 %v1206, %v1208
  %v1213 = vmul.f32 %v1205, %v1209
  %v1214 = vmul.f32 %v1204, %v1210
  %v1215 = vmul.f32 %v1203, %v1211
  %v1216 = vadd.f32 %v1177, %v1212
  %v1217 = vadd.f32 %v1178, %v1213
  %v1218 = vadd.f32 %v1179, %v1214
  %v1219 = vadd.f32 %v1180, %v1215
  %s1220 = scalar_lea.vmem %s5, 1216
  %v1221 = vld [vmem:[%s1220] sm:$0xff]
  %v1222 = vld [vmem:[%s1220 + $0x8] sm:$0xff]
  %v1223 = vld [vmem:[%s1220 + $0x10] sm:$0xff]
  %v1224 = vld [vmem:[%s1220 + $0x18] sm:$0xff]
  %v1225 = vmul.f32 %v1206, %v1221
  %v1226 = vmul.f32 %v1205, %v1222
  %v1227 = vmul.f32 %v1204, %v1223
  %v1228 = vmul.f32 %v1203, %v1224
  %v1229 = vadd.f32 %v1190, %v1225
  %v1230 = vadd.f32 %v1191, %v1226
  %v1231 = vadd.f32 %v1192, %v1227
  %v1232 = vadd.f32 %v1193, %v1228
  %1233 = vrot.lane.b32.xlu0 %v150, 62
  %v1234 = vpop.permute.xlu0 %1233
  %1235 = vrot.lane.b32.xlu0 %v151, 62
  %v1236 = vpop.permute.xlu0 %1235
  %1237 = vrot.lane.b32.xlu0 %v152, 62
  %v1238 = vpop.permute.xlu0 %1237
  %1239 = vrot.lane.b32.xlu0 %v153, 62
  %v1240 = vpop.permute.xlu0 %1239
  %vm1241 = vcmp.lt.s32.totalorder %v163, 62
  %v1242 = vsel %vm1241, %v1238, %v1240
  %v1243 = vsel %vm1241, %v1236, %v1238
  %v1244 = vsel %vm1241, %v1234, %v1236
  %v1245 = vsel %vm1241, %v1240, %v1234
  %s1246 = scalar_lea.vmem %s5, 1248
  %v1247 = vld [vmem:[%s1246] sm:$0xff]
  %v1248 = vld [vmem:[%s1246 + $0x8] sm:$0xff]
  %v1249 = vld [vmem:[%s1246 + $0x10] sm:$0xff]
  %v1250 = vld [vmem:[%s1246 + $0x18] sm:$0xff]
  %v1251 = vmul.f32 %v1245, %v1247
  %v1252 = vmul.f32 %v1244, %v1248
  %v1253 = vmul.f32 %v1243, %v1249
  %v1254 = vmul.f32 %v1242, %v1250
  %v1255 = vadd.f32 %v1229, %v1251
  %v1256 = vadd.f32 %v1230, %v1252
  %v1257 = vadd.f32 %v1231, %v1253
  %v1258 = vadd.f32 %v1232, %v1254
  %1259 = vrot.lane.b32.xlu0 %v150, 58
  %v1260 = vpop.permute.xlu0 %1259
  %1261 = vrot.lane.b32.xlu0 %v151, 58
  %v1262 = vpop.permute.xlu0 %1261
  %1263 = vrot.lane.b32.xlu0 %v152, 58
  %v1264 = vpop.permute.xlu0 %1263
  %1265 = vrot.lane.b32.xlu0 %v153, 58
  %v1266 = vpop.permute.xlu0 %1265
  %vm1267 = vcmp.lt.s32.totalorder %v163, 58
  %v1268 = vsel %vm1267, %v1264, %v1266
  %v1269 = vsel %vm1267, %v1262, %v1264
  %v1270 = vsel %vm1267, %v1260, %v1262
  %v1271 = vsel %vm1267, %v1266, %v1260
  %s1272 = scalar_lea.vmem %s5, 1280
  %v1273 = vld [vmem:[%s1272] sm:$0xff]
  %v1274 = vld [vmem:[%s1272 + $0x8] sm:$0xff]
  %v1275 = vld [vmem:[%s1272 + $0x10] sm:$0xff]
  %v1276 = vld [vmem:[%s1272 + $0x18] sm:$0xff]
  %v1277 = vmul.f32 %v1271, %v1273
  %v1278 = vmul.f32 %v1270, %v1274
  %v1279 = vmul.f32 %v1269, %v1275
  %v1280 = vmul.f32 %v1268, %v1276
  %v1281 = vadd.f32 %v1255, %v1277
  %v1282 = vadd.f32 %v1256, %v1278
  %v1283 = vadd.f32 %v1257, %v1279
  %v1284 = vadd.f32 %v1258, %v1280
  %1285 = vrot.lane.b32.xlu0 %v150, 57
  %v1286 = vpop.permute.xlu0 %1285
  %1287 = vrot.lane.b32.xlu0 %v151, 57
  %v1288 = vpop.permute.xlu0 %1287
  %1289 = vrot.lane.b32.xlu0 %v152, 57
  %v1290 = vpop.permute.xlu0 %1289
  %1291 = vrot.lane.b32.xlu0 %v153, 57
  %v1292 = vpop.permute.xlu0 %1291
  %vm1293 = vcmp.lt.s32.totalorder %v163, 57
  %v1294 = vsel %vm1293, %v1290, %v1292
  %v1295 = vsel %vm1293, %v1288, %v1290
  %v1296 = vsel %vm1293, %v1286, %v1288
  %v1297 = vsel %vm1293, %v1292, %v1286
  %s1298 = scalar_lea.vmem %s4, 192
  %v1299 = vld [vmem:[%s1298] sm:$0xff]
  %v1300 = vld [vmem:[%s1298 + $0x8] sm:$0xff]
  %v1301 = vld [vmem:[%s1298 + $0x10] sm:$0xff]
  %v1302 = vld [vmem:[%s1298 + $0x18] sm:$0xff]
  %v1303 = vmul.f32 %v1297, %v1299
  %v1304 = vmul.f32 %v1296, %v1300
  %v1305 = vmul.f32 %v1295, %v1301
  %v1306 = vmul.f32 %v1294, %v1302
  %v1307 = vadd.f32 %v1216, %v1303
  %v1308 = vadd.f32 %v1217, %v1304
  %v1309 = vadd.f32 %v1218, %v1305
  %v1310 = vadd.f32 %v1219, %v1306
  %s1311 = scalar_lea.vmem %s5, 1312
  %v1312 = vld [vmem:[%s1311] sm:$0xff]
  %v1313 = vld [vmem:[%s1311 + $0x8] sm:$0xff]
  %v1314 = vld [vmem:[%s1311 + $0x10] sm:$0xff]
  %v1315 = vld [vmem:[%s1311 + $0x18] sm:$0xff]
  %v1316 = vmul.f32 %v1297, %v1312
  %v1317 = vmul.f32 %v1296, %v1313
  %v1318 = vmul.f32 %v1295, %v1314
  %v1319 = vmul.f32 %v1294, %v1315
  %v1320 = vadd.f32 %v1281, %v1316
  %v1321 = vadd.f32 %v1282, %v1317
  %v1322 = vadd.f32 %v1283, %v1318
  %v1323 = vadd.f32 %v1284, %v1319
  %1324 = vrot.lane.b32.xlu0 %v150, 56
  %v1325 = vpop.permute.xlu0 %1324
  %1326 = vrot.lane.b32.xlu0 %v151, 56
  %v1327 = vpop.permute.xlu0 %1326
  %1328 = vrot.lane.b32.xlu0 %v152, 56
  %v1329 = vpop.permute.xlu0 %1328
  %1330 = vrot.lane.b32.xlu0 %v153, 56
  %v1331 = vpop.permute.xlu0 %1330
  %vm1332 = vcmp.lt.s32.totalorder %v163, 56
  %v1333 = vsel %vm1332, %v1329, %v1331
  %v1334 = vsel %vm1332, %v1327, %v1329
  %v1335 = vsel %vm1332, %v1325, %v1327
  %v1336 = vsel %vm1332, %v1331, %v1325
  %s1337 = scalar_lea.vmem %s4, 224
  %v1338 = vld [vmem:[%s1337] sm:$0xff]
  %v1339 = vld [vmem:[%s1337 + $0x8] sm:$0xff]
  %v1340 = vld [vmem:[%s1337 + $0x10] sm:$0xff]
  %v1341 = vld [vmem:[%s1337 + $0x18] sm:$0xff]
  %v1342 = vmul.f32 %v1336, %v1338
  %v1343 = vmul.f32 %v1335, %v1339
  %v1344 = vmul.f32 %v1334, %v1340
  %v1345 = vmul.f32 %v1333, %v1341
  %v1346 = vadd.f32 %v1307, %v1342
  %v1347 = vadd.f32 %v1308, %v1343
  %v1348 = vadd.f32 %v1309, %v1344
  %v1349 = vadd.f32 %v1310, %v1345
  %s1350 = scalar_lea.vmem %s5, 1344
  %v1351 = vld [vmem:[%s1350] sm:$0xff]
  %v1352 = vld [vmem:[%s1350 + $0x8] sm:$0xff]
  %v1353 = vld [vmem:[%s1350 + $0x10] sm:$0xff]
  %v1354 = vld [vmem:[%s1350 + $0x18] sm:$0xff]
  %v1355 = vmul.f32 %v1336, %v1351
  %v1356 = vmul.f32 %v1335, %v1352
  %v1357 = vmul.f32 %v1334, %v1353
  %v1358 = vmul.f32 %v1333, %v1354
  %v1359 = vadd.f32 %v1320, %v1355
  %v1360 = vadd.f32 %v1321, %v1356
  %v1361 = vadd.f32 %v1322, %v1357
  %v1362 = vadd.f32 %v1323, %v1358
  %1363 = vrot.lane.b32.xlu0 %v150, 55
  %v1364 = vpop.permute.xlu0 %1363
  %1365 = vrot.lane.b32.xlu0 %v151, 55
  %v1366 = vpop.permute.xlu0 %1365
  %1367 = vrot.lane.b32.xlu0 %v152, 55
  %v1368 = vpop.permute.xlu0 %1367
  %1369 = vrot.lane.b32.xlu0 %v153, 55
  %v1370 = vpop.permute.xlu0 %1369
  %vm1371 = vcmp.lt.s32.totalorder %v163, 55
  %v1372 = vsel %vm1371, %v1368, %v1370
  %v1373 = vsel %vm1371, %v1366, %v1368
  %v1374 = vsel %vm1371, %v1364, %v1366
  %v1375 = vsel %vm1371, %v1370, %v1364
  %s1376 = scalar_lea.vmem %s4, 256
  %v1377 = vld [vmem:[%s1376] sm:$0xff]
  %v1378 = vld [vmem:[%s1376 + $0x8] sm:$0xff]
  %v1379 = vld [vmem:[%s1376 + $0x10] sm:$0xff]
  %v1380 = vld [vmem:[%s1376 + $0x18] sm:$0xff]
  %v1381 = vmul.f32 %v1375, %v1377
  %v1382 = vmul.f32 %v1374, %v1378
  %v1383 = vmul.f32 %v1373, %v1379
  %v1384 = vmul.f32 %v1372, %v1380
  %v1385 = vadd.f32 %v1346, %v1381
  %v1386 = vadd.f32 %v1347, %v1382
  %v1387 = vadd.f32 %v1348, %v1383
  %v1388 = vadd.f32 %v1349, %v1384
  %s1389 = scalar_lea.vmem %s5, 1376
  %v1390 = vld [vmem:[%s1389] sm:$0xff]
  %v1391 = vld [vmem:[%s1389 + $0x8] sm:$0xff]
  %v1392 = vld [vmem:[%s1389 + $0x10] sm:$0xff]
  %v1393 = vld [vmem:[%s1389 + $0x18] sm:$0xff]
  %v1394 = vmul.f32 %v1375, %v1390
  %v1395 = vmul.f32 %v1374, %v1391
  %v1396 = vmul.f32 %v1373, %v1392
  %v1397 = vmul.f32 %v1372, %v1393
  %v1398 = vadd.f32 %v1359, %v1394
  %v1399 = vadd.f32 %v1360, %v1395
  %v1400 = vadd.f32 %v1361, %v1396
  %v1401 = vadd.f32 %v1362, %v1397
  %1402 = vrot.lane.b32.xlu0 %v150, 54
  %v1403 = vpop.permute.xlu0 %1402
  %1404 = vrot.lane.b32.xlu0 %v151, 54
  %v1405 = vpop.permute.xlu0 %1404
  %1406 = vrot.lane.b32.xlu0 %v152, 54
  %v1407 = vpop.permute.xlu0 %1406
  %1408 = vrot.lane.b32.xlu0 %v153, 54
  %v1409 = vpop.permute.xlu0 %1408
  %vm1410 = vcmp.lt.s32.totalorder %v163, 54
  %v1411 = vsel %vm1410, %v1407, %v1409
  %v1412 = vsel %vm1410, %v1405, %v1407
  %v1413 = vsel %vm1410, %v1403, %v1405
  %v1414 = vsel %vm1410, %v1409, %v1403
  %s1415 = scalar_lea.vmem %s5, 1408
  %v1416 = vld [vmem:[%s1415] sm:$0xff]
  %v1417 = vld [vmem:[%s1415 + $0x8] sm:$0xff]
  %v1418 = vld [vmem:[%s1415 + $0x10] sm:$0xff]
  %v1419 = vld [vmem:[%s1415 + $0x18] sm:$0xff]
  %v1420 = vmul.f32 %v1414, %v1416
  %v1421 = vmul.f32 %v1413, %v1417
  %v1422 = vmul.f32 %v1412, %v1418
  %v1423 = vmul.f32 %v1411, %v1419
  %v1424 = vadd.f32 %v1398, %v1420
  %v1425 = vadd.f32 %v1399, %v1421
  %v1426 = vadd.f32 %v1400, %v1422
  %v1427 = vadd.f32 %v1401, %v1423
  %1428 = vrot.lane.b32.xlu0 %v150, 50
  %v1429 = vpop.permute.xlu0 %1428
  %1430 = vrot.lane.b32.xlu0 %v151, 50
  %v1431 = vpop.permute.xlu0 %1430
  %1432 = vrot.lane.b32.xlu0 %v152, 50
  %v1433 = vpop.permute.xlu0 %1432
  %1434 = vrot.lane.b32.xlu0 %v153, 50
  %v1435 = vpop.permute.xlu0 %1434
  %vm1436 = vcmp.lt.s32.totalorder %v163, 50
  %v1437 = vsel %vm1436, %v1433, %v1435
  %v1438 = vsel %vm1436, %v1431, %v1433
  %v1439 = vsel %vm1436, %v1429, %v1431
  %v1440 = vsel %vm1436, %v1435, %v1429
  %s1441 = scalar_lea.vmem %s5, 1440
  %v1442 = vld [vmem:[%s1441] sm:$0xff]
  %v1443 = vld [vmem:[%s1441 + $0x8] sm:$0xff]
  %v1444 = vld [vmem:[%s1441 + $0x10] sm:$0xff]
  %v1445 = vld [vmem:[%s1441 + $0x18] sm:$0xff]
  %v1446 = vmul.f32 %v1440, %v1442
  %v1447 = vmul.f32 %v1439, %v1443
  %v1448 = vmul.f32 %v1438, %v1444
  %v1449 = vmul.f32 %v1437, %v1445
  %v1450 = vadd.f32 %v1424, %v1446
  %v1451 = vadd.f32 %v1425, %v1447
  %v1452 = vadd.f32 %v1426, %v1448
  %v1453 = vadd.f32 %v1427, %v1449
  %1454 = vrot.lane.b32.xlu0 %v150, 49
  %v1455 = vpop.permute.xlu0 %1454
  %1456 = vrot.lane.b32.xlu0 %v151, 49
  %v1457 = vpop.permute.xlu0 %1456
  %1458 = vrot.lane.b32.xlu0 %v152, 49
  %v1459 = vpop.permute.xlu0 %1458
  %1460 = vrot.lane.b32.xlu0 %v153, 49
  %v1461 = vpop.permute.xlu0 %1460
  %vm1462 = vcmp.lt.s32.totalorder %v163, 49
  %v1463 = vsel %vm1462, %v1459, %v1461
  %v1464 = vsel %vm1462, %v1457, %v1459
  %v1465 = vsel %vm1462, %v1455, %v1457
  %v1466 = vsel %vm1462, %v1461, %v1455
  %s1467 = scalar_lea.vmem %s5, 1472
  %v1468 = vld [vmem:[%s1467] sm:$0xff]
  %v1469 = vld [vmem:[%s1467 + $0x8] sm:$0xff]
  %v1470 = vld [vmem:[%s1467 + $0x10] sm:$0xff]
  %v1471 = vld [vmem:[%s1467 + $0x18] sm:$0xff]
  %v1472 = vmul.f32 %v1466, %v1468
  %v1473 = vmul.f32 %v1465, %v1469
  %v1474 = vmul.f32 %v1464, %v1470
  %v1475 = vmul.f32 %v1463, %v1471
  %v1476 = vadd.f32 %v1450, %v1472
  %v1477 = vadd.f32 %v1451, %v1473
  %v1478 = vadd.f32 %v1452, %v1474
  %v1479 = vadd.f32 %v1453, %v1475
  %1480 = vrot.lane.b32.xlu0 %v150, 48
  %v1481 = vpop.permute.xlu0 %1480
  %1482 = vrot.lane.b32.xlu0 %v151, 48
  %v1483 = vpop.permute.xlu0 %1482
  %1484 = vrot.lane.b32.xlu0 %v152, 48
  %v1485 = vpop.permute.xlu0 %1484
  %1486 = vrot.lane.b32.xlu0 %v153, 48
  %v1487 = vpop.permute.xlu0 %1486
  %vm1488 = vcmp.lt.s32.totalorder %v163, 48
  %v1489 = vsel %vm1488, %v1485, %v1487
  %v1490 = vsel %vm1488, %v1483, %v1485
  %v1491 = vsel %vm1488, %v1481, %v1483
  %v1492 = vsel %vm1488, %v1487, %v1481
  %s1493 = scalar_lea.vmem %s5, 1504
  %v1494 = vld [vmem:[%s1493] sm:$0xff]
  %v1495 = vld [vmem:[%s1493 + $0x8] sm:$0xff]
  %v1496 = vld [vmem:[%s1493 + $0x10] sm:$0xff]
  %v1497 = vld [vmem:[%s1493 + $0x18] sm:$0xff]
  %v1498 = vmul.f32 %v1492, %v1494
  %v1499 = vmul.f32 %v1491, %v1495
  %v1500 = vmul.f32 %v1490, %v1496
  %v1501 = vmul.f32 %v1489, %v1497
  %v1502 = vadd.f32 %v1476, %v1498
  %v1503 = vadd.f32 %v1477, %v1499
  %v1504 = vadd.f32 %v1478, %v1500
  %v1505 = vadd.f32 %v1479, %v1501
  %1506 = vrot.lane.b32.xlu0 %v150, 47
  %v1507 = vpop.permute.xlu0 %1506
  %1508 = vrot.lane.b32.xlu0 %v151, 47
  %v1509 = vpop.permute.xlu0 %1508
  %1510 = vrot.lane.b32.xlu0 %v152, 47
  %v1511 = vpop.permute.xlu0 %1510
  %1512 = vrot.lane.b32.xlu0 %v153, 47
  %v1513 = vpop.permute.xlu0 %1512
  %vm1514 = vcmp.lt.s32.totalorder %v163, 47
  %v1515 = vsel %vm1514, %v1511, %v1513
  %v1516 = vsel %vm1514, %v1509, %v1511
  %v1517 = vsel %vm1514, %v1507, %v1509
  %v1518 = vsel %vm1514, %v1513, %v1507
  %s1519 = scalar_lea.vmem %s5, 1536
  %v1520 = vld [vmem:[%s1519] sm:$0xff]
  %v1521 = vld [vmem:[%s1519 + $0x8] sm:$0xff]
  %v1522 = vld [vmem:[%s1519 + $0x10] sm:$0xff]
  %v1523 = vld [vmem:[%s1519 + $0x18] sm:$0xff]
  %v1524 = vmul.f32 %v1518, %v1520
  %v1525 = vmul.f32 %v1517, %v1521
  %v1526 = vmul.f32 %v1516, %v1522
  %v1527 = vmul.f32 %v1515, %v1523
  %v1528 = vadd.f32 %v1502, %v1524
  %v1529 = vadd.f32 %v1503, %v1525
  %v1530 = vadd.f32 %v1504, %v1526
  %v1531 = vadd.f32 %v1505, %v1527
  %1532 = vrot.lane.b32.xlu0 %v150, 46
  %v1533 = vpop.permute.xlu0 %1532
  %1534 = vrot.lane.b32.xlu0 %v151, 46
  %v1535 = vpop.permute.xlu0 %1534
  %1536 = vrot.lane.b32.xlu0 %v152, 46
  %v1537 = vpop.permute.xlu0 %1536
  %1538 = vrot.lane.b32.xlu0 %v153, 46
  %v1539 = vpop.permute.xlu0 %1538
  %vm1540 = vcmp.lt.s32.totalorder %v163, 46
  %v1541 = vsel %vm1540, %v1537, %v1539
  %v1542 = vsel %vm1540, %v1535, %v1537
  %v1543 = vsel %vm1540, %v1533, %v1535
  %v1544 = vsel %vm1540, %v1539, %v1533
  %s1545 = scalar_lea.vmem %s5, 1568
  %v1546 = vld [vmem:[%s1545] sm:$0xff]
  %v1547 = vld [vmem:[%s1545 + $0x8] sm:$0xff]
  %v1548 = vld [vmem:[%s1545 + $0x10] sm:$0xff]
  %v1549 = vld [vmem:[%s1545 + $0x18] sm:$0xff]
  %v1550 = vmul.f32 %v1544, %v1546
  %v1551 = vmul.f32 %v1543, %v1547
  %v1552 = vmul.f32 %v1542, %v1548
  %v1553 = vmul.f32 %v1541, %v1549
  %v1554 = vadd.f32 %v1528, %v1550
  %v1555 = vadd.f32 %v1529, %v1551
  %v1556 = vadd.f32 %v1530, %v1552
  %v1557 = vadd.f32 %v1531, %v1553
  %s1558 = scalar_lea.vmem %s5, 1600
  %v1559 = vld [vmem:[%s1558] sm:$0xff]
  %v1560 = vld [vmem:[%s1558 + $0x8] sm:$0xff]
  %v1561 = vld [vmem:[%s1558 + $0x10] sm:$0xff]
  %v1562 = vld [vmem:[%s1558 + $0x18] sm:$0xff]
  %v1563 = vmul.f32 %v168, %v1559
  %v1564 = vmul.f32 %v167, %v1560
  %v1565 = vmul.f32 %v166, %v1561
  %v1566 = vmul.f32 %v165, %v1562
  %v1567 = vadd.f32 %v1554, %v1563
  %v1568 = vadd.f32 %v1555, %v1564
  %v1569 = vadd.f32 %v1556, %v1565
  %v1570 = vadd.f32 %v1557, %v1566
  %s1571 = scalar_lea.vmem %s5, 1632
  %v1572 = vld [vmem:[%s1571] sm:$0xff]
  %v1573 = vld [vmem:[%s1571 + $0x8] sm:$0xff]
  %v1574 = vld [vmem:[%s1571 + $0x10] sm:$0xff]
  %v1575 = vld [vmem:[%s1571 + $0x18] sm:$0xff]
  %v1576 = vmul.f32 %v193, %v1572
  %v1577 = vmul.f32 %v192, %v1573
  %v1578 = vmul.f32 %v191, %v1574
  %v1579 = vmul.f32 %v190, %v1575
  %v1580 = vadd.f32 %v1567, %v1576
  %v1581 = vadd.f32 %v1568, %v1577
  %v1582 = vadd.f32 %v1569, %v1578
  %v1583 = vadd.f32 %v1570, %v1579
  %s1584 = scalar_lea.vmem %s5, 1664
  %v1585 = vld [vmem:[%s1584] sm:$0xff]
  %v1586 = vld [vmem:[%s1584 + $0x8] sm:$0xff]
  %v1587 = vld [vmem:[%s1584 + $0x10] sm:$0xff]
  %v1588 = vld [vmem:[%s1584 + $0x18] sm:$0xff]
  %v1589 = vmul.f32 %v219, %v1585
  %v1590 = vmul.f32 %v218, %v1586
  %v1591 = vmul.f32 %v217, %v1587
  %v1592 = vmul.f32 %v216, %v1588
  %v1593 = vadd.f32 %v1580, %v1589
  %v1594 = vadd.f32 %v1581, %v1590
  %v1595 = vadd.f32 %v1582, %v1591
  %v1596 = vadd.f32 %v1583, %v1592
  %s1597 = scalar_lea.vmem %s5, 1696
  %v1598 = vld [vmem:[%s1597] sm:$0xff]
  %v1599 = vld [vmem:[%s1597 + $0x8] sm:$0xff]
  %v1600 = vld [vmem:[%s1597 + $0x10] sm:$0xff]
  %v1601 = vld [vmem:[%s1597 + $0x18] sm:$0xff]
  %v1602 = vmul.f32 %v245, %v1598
  %v1603 = vmul.f32 %v244, %v1599
  %v1604 = vmul.f32 %v243, %v1600
  %v1605 = vmul.f32 %v242, %v1601
  %v1606 = vadd.f32 %v1593, %v1602
  %v1607 = vadd.f32 %v1594, %v1603
  %v1608 = vadd.f32 %v1595, %v1604
  %v1609 = vadd.f32 %v1596, %v1605
  %s1610 = scalar_lea.vmem %s5, 1728
  %v1611 = vld [vmem:[%s1610] sm:$0xff]
  %v1612 = vld [vmem:[%s1610 + $0x8] sm:$0xff]
  %v1613 = vld [vmem:[%s1610 + $0x10] sm:$0xff]
  %v1614 = vld [vmem:[%s1610 + $0x18] sm:$0xff]
  %v1615 = vmul.f32 %v271, %v1611
  %v1616 = vmul.f32 %v270, %v1612
  %v1617 = vmul.f32 %v269, %v1613
  %v1618 = vmul.f32 %v268, %v1614
  %v1619 = vadd.f32 %v1606, %v1615
  %v1620 = vadd.f32 %v1607, %v1616
  %v1621 = vadd.f32 %v1608, %v1617
  %v1622 = vadd.f32 %v1609, %v1618
  %s1623 = scalar_lea.vmem %s5, 1760
  %v1624 = vld [vmem:[%s1623] sm:$0xff]
  %v1625 = vld [vmem:[%s1623 + $0x8] sm:$0xff]
  %v1626 = vld [vmem:[%s1623 + $0x10] sm:$0xff]
  %v1627 = vld [vmem:[%s1623 + $0x18] sm:$0xff]
  %v1628 = vmul.f32 %v297, %v1624
  %v1629 = vmul.f32 %v296, %v1625
  %v1630 = vmul.f32 %v295, %v1626
  %v1631 = vmul.f32 %v294, %v1627
  %v1632 = vadd.f32 %v1619, %v1628
  %v1633 = vadd.f32 %v1620, %v1629
  %v1634 = vadd.f32 %v1621, %v1630
  %v1635 = vadd.f32 %v1622, %v1631
  %s1636 = scalar_lea.vmem %s4, 288
  %v1637 = vld [vmem:[%s1636] sm:$0xff]
  %v1638 = vld [vmem:[%s1636 + $0x8] sm:$0xff]
  %v1639 = vld [vmem:[%s1636 + $0x10] sm:$0xff]
  %v1640 = vld [vmem:[%s1636 + $0x18] sm:$0xff]
  %v1641 = vmul.f32 %v323, %v1637
  %v1642 = vmul.f32 %v322, %v1638
  %v1643 = vmul.f32 %v321, %v1639
  %v1644 = vmul.f32 %v320, %v1640
  %v1645 = vadd.f32 %v1385, %v1641
  %v1646 = vadd.f32 %v1386, %v1642
  %v1647 = vadd.f32 %v1387, %v1643
  %v1648 = vadd.f32 %v1388, %v1644
  %s1649 = scalar_lea.vmem %s5, 1792
  %v1650 = vld [vmem:[%s1649] sm:$0xff]
  %v1651 = vld [vmem:[%s1649 + $0x8] sm:$0xff]
  %v1652 = vld [vmem:[%s1649 + $0x10] sm:$0xff]
  %v1653 = vld [vmem:[%s1649 + $0x18] sm:$0xff]
  %v1654 = vmul.f32 %v323, %v1650
  %v1655 = vmul.f32 %v322, %v1651
  %v1656 = vmul.f32 %v321, %v1652
  %v1657 = vmul.f32 %v320, %v1653
  %v1658 = vadd.f32 %v1632, %v1654
  %v1659 = vadd.f32 %v1633, %v1655
  %v1660 = vadd.f32 %v1634, %v1656
  %v1661 = vadd.f32 %v1635, %v1657
  %s1662 = scalar_lea.vmem %s4, 320
  %v1663 = vld [vmem:[%s1662] sm:$0xff]
  %v1664 = vld [vmem:[%s1662 + $0x8] sm:$0xff]
  %v1665 = vld [vmem:[%s1662 + $0x10] sm:$0xff]
  %v1666 = vld [vmem:[%s1662 + $0x18] sm:$0xff]
  %v1667 = vmul.f32 %v349, %v1663
  %v1668 = vmul.f32 %v348, %v1664
  %v1669 = vmul.f32 %v347, %v1665
  %v1670 = vmul.f32 %v346, %v1666
  %v1671 = vadd.f32 %v1645, %v1667
  %v1672 = vadd.f32 %v1646, %v1668
  %v1673 = vadd.f32 %v1647, %v1669
  %v1674 = vadd.f32 %v1648, %v1670
  %s1675 = scalar_lea.vmem %s5, 1824
  %v1676 = vld [vmem:[%s1675] sm:$0xff]
  %v1677 = vld [vmem:[%s1675 + $0x8] sm:$0xff]
  %v1678 = vld [vmem:[%s1675 + $0x10] sm:$0xff]
  %v1679 = vld [vmem:[%s1675 + $0x18] sm:$0xff]
  %v1680 = vmul.f32 %v349, %v1676
  %v1681 = vmul.f32 %v348, %v1677
  %v1682 = vmul.f32 %v347, %v1678
  %v1683 = vmul.f32 %v346, %v1679
  %v1684 = vadd.f32 %v1658, %v1680
  %v1685 = vadd.f32 %v1659, %v1681
  %v1686 = vadd.f32 %v1660, %v1682
  %v1687 = vadd.f32 %v1661, %v1683
  %s1688 = scalar_lea.vmem %s4, 352
  %v1689 = vld [vmem:[%s1688] sm:$0xff]
  %v1690 = vld [vmem:[%s1688 + $0x8] sm:$0xff]
  %v1691 = vld [vmem:[%s1688 + $0x10] sm:$0xff]
  %v1692 = vld [vmem:[%s1688 + $0x18] sm:$0xff]
  %v1693 = vmul.f32 %v375, %v1689
  %v1694 = vmul.f32 %v374, %v1690
  %v1695 = vmul.f32 %v373, %v1691
  %v1696 = vmul.f32 %v372, %v1692
  %v1697 = vadd.f32 %v1671, %v1693
  %v1698 = vadd.f32 %v1672, %v1694
  %v1699 = vadd.f32 %v1673, %v1695
  %v1700 = vadd.f32 %v1674, %v1696
  %s1701 = scalar_lea.vmem %s5, 1856
  %v1702 = vld [vmem:[%s1701] sm:$0xff]
  %v1703 = vld [vmem:[%s1701 + $0x8] sm:$0xff]
  %v1704 = vld [vmem:[%s1701 + $0x10] sm:$0xff]
  %v1705 = vld [vmem:[%s1701 + $0x18] sm:$0xff]
  %v1706 = vmul.f32 %v375, %v1702
  %v1707 = vmul.f32 %v374, %v1703
  %v1708 = vmul.f32 %v373, %v1704
  %v1709 = vmul.f32 %v372, %v1705
  %v1710 = vadd.f32 %v1684, %v1706
  %v1711 = vadd.f32 %v1685, %v1707
  %v1712 = vadd.f32 %v1686, %v1708
  %v1713 = vadd.f32 %v1687, %v1709
  %s1714 = scalar_lea.vmem %s5, 1888
  %v1715 = vld [vmem:[%s1714] sm:$0xff]
  %v1716 = vld [vmem:[%s1714 + $0x8] sm:$0xff]
  %v1717 = vld [vmem:[%s1714 + $0x10] sm:$0xff]
  %v1718 = vld [vmem:[%s1714 + $0x18] sm:$0xff]
  %v1719 = vmul.f32 %v401, %v1715
  %v1720 = vmul.f32 %v400, %v1716
  %v1721 = vmul.f32 %v399, %v1717
  %v1722 = vmul.f32 %v398, %v1718
  %v1723 = vadd.f32 %v1710, %v1719
  %v1724 = vadd.f32 %v1711, %v1720
  %v1725 = vadd.f32 %v1712, %v1721
  %v1726 = vadd.f32 %v1713, %v1722
  %s1727 = scalar_lea.vmem %s5, 1920
  %v1728 = vld [vmem:[%s1727] sm:$0xff]
  %v1729 = vld [vmem:[%s1727 + $0x8] sm:$0xff]
  %v1730 = vld [vmem:[%s1727 + $0x10] sm:$0xff]
  %v1731 = vld [vmem:[%s1727 + $0x18] sm:$0xff]
  %v1732 = vmul.f32 %v427, %v1728
  %v1733 = vmul.f32 %v426, %v1729
  %v1734 = vmul.f32 %v425, %v1730
  %v1735 = vmul.f32 %v424, %v1731
  %v1736 = vadd.f32 %v1723, %v1732
  %v1737 = vadd.f32 %v1724, %v1733
  %v1738 = vadd.f32 %v1725, %v1734
  %v1739 = vadd.f32 %v1726, %v1735
  %s1740 = scalar_lea.vmem %s4, 384
  %v1741 = vld [vmem:[%s1740] sm:$0xff]
  %v1742 = vld [vmem:[%s1740 + $0x8] sm:$0xff]
  %v1743 = vld [vmem:[%s1740 + $0x10] sm:$0xff]
  %v1744 = vld [vmem:[%s1740 + $0x18] sm:$0xff]
  %v1745 = vmul.f32 %v453, %v1741
  %v1746 = vmul.f32 %v452, %v1742
  %v1747 = vmul.f32 %v451, %v1743
  %v1748 = vmul.f32 %v450, %v1744
  %v1749 = vadd.f32 %v1697, %v1745
  %v1750 = vadd.f32 %v1698, %v1746
  %v1751 = vadd.f32 %v1699, %v1747
  %v1752 = vadd.f32 %v1700, %v1748
  %s1753 = scalar_lea.vmem %s5, 1952
  %v1754 = vld [vmem:[%s1753] sm:$0xff]
  %v1755 = vld [vmem:[%s1753 + $0x8] sm:$0xff]
  %v1756 = vld [vmem:[%s1753 + $0x10] sm:$0xff]
  %v1757 = vld [vmem:[%s1753 + $0x18] sm:$0xff]
  %v1758 = vmul.f32 %v453, %v1754
  %v1759 = vmul.f32 %v452, %v1755
  %v1760 = vmul.f32 %v451, %v1756
  %v1761 = vmul.f32 %v450, %v1757
  %v1762 = vadd.f32 %v1736, %v1758
  %v1763 = vadd.f32 %v1737, %v1759
  %v1764 = vadd.f32 %v1738, %v1760
  %v1765 = vadd.f32 %v1739, %v1761
  %v1766 = vld [vmem:[%s3] sm:$0xff]
  %v1767 = vld [vmem:[%s3 + $0x8] sm:$0xff]
  %v1768 = vld [vmem:[%s3 + $0x10] sm:$0xff]
  %v1769 = vld [vmem:[%s3 + $0x18] sm:$0xff]
  %v1770 = vmul.f32 %v150, %v1766
  %v1771 = vmul.f32 %v151, %v1767
  %v1772 = vmul.f32 %v152, %v1768
  %v1773 = vmul.f32 %v153, %v1769
  %v1774 = vadd.f32 %v1770, 0.0
  %v1775 = vadd.f32 %v1771, 0.0
  %v1776 = vadd.f32 %v1772, 0.0
  %v1777 = vadd.f32 %v1773, 0.0
  %s1778 = scalar_lea.vmem %s4, 416
  %v1779 = vld [vmem:[%s1778] sm:$0xff]
  %v1780 = vld [vmem:[%s1778 + $0x8] sm:$0xff]
  %v1781 = vld [vmem:[%s1778 + $0x10] sm:$0xff]
  %v1782 = vld [vmem:[%s1778 + $0x18] sm:$0xff]
  %v1783 = vmul.f32 %v150, %v1779
  %v1784 = vmul.f32 %v151, %v1780
  %v1785 = vmul.f32 %v152, %v1781
  %v1786 = vmul.f32 %v153, %v1782
  %v1787 = vadd.f32 %v1749, %v1783
  %v1788 = vadd.f32 %v1750, %v1784
  %v1789 = vadd.f32 %v1751, %v1785
  %v1790 = vadd.f32 %v1752, %v1786
  %s1791 = scalar_lea.vmem %s5, 1984
  %v1792 = vld [vmem:[%s1791] sm:$0xff]
  %v1793 = vld [vmem:[%s1791 + $0x8] sm:$0xff]
  %v1794 = vld [vmem:[%s1791 + $0x10] sm:$0xff]
  %v1795 = vld [vmem:[%s1791 + $0x18] sm:$0xff]
  %v1796 = vmul.f32 %v150, %v1792
  %v1797 = vmul.f32 %v151, %v1793
  %v1798 = vmul.f32 %v152, %v1794
  %v1799 = vmul.f32 %v153, %v1795
  %v1800 = vadd.f32 %v1762, %v1796
  %v1801 = vadd.f32 %v1763, %v1797
  %v1802 = vadd.f32 %v1764, %v1798
  %v1803 = vadd.f32 %v1765, %v1799
  %s1804 = scalar_lea.vmem %s4, 448
  %v1805 = vld [vmem:[%s1804] sm:$0xff]
  %v1806 = vld [vmem:[%s1804 + $0x8] sm:$0xff]
  %v1807 = vld [vmem:[%s1804 + $0x10] sm:$0xff]
  %v1808 = vld [vmem:[%s1804 + $0x18] sm:$0xff]
  %v1809 = vmul.f32 %v491, %v1805
  %v1810 = vmul.f32 %v490, %v1806
  %v1811 = vmul.f32 %v489, %v1807
  %v1812 = vmul.f32 %v492, %v1808
  %v1813 = vadd.f32 %v1787, %v1809
  %v1814 = vadd.f32 %v1788, %v1810
  %v1815 = vadd.f32 %v1789, %v1811
  %v1816 = vadd.f32 %v1790, %v1812
  %s1817 = scalar_lea.vmem %s5, 2016
  %v1818 = vld [vmem:[%s1817] sm:$0xff]
  %v1819 = vld [vmem:[%s1817 + $0x8] sm:$0xff]
  %v1820 = vld [vmem:[%s1817 + $0x10] sm:$0xff]
  %v1821 = vld [vmem:[%s1817 + $0x18] sm:$0xff]
  %v1822 = vmul.f32 %v491, %v1818
  %v1823 = vmul.f32 %v490, %v1819
  %v1824 = vmul.f32 %v489, %v1820
  %v1825 = vmul.f32 %v492, %v1821
  %v1826 = vadd.f32 %v1800, %v1822
  %v1827 = vadd.f32 %v1801, %v1823
  %v1828 = vadd.f32 %v1802, %v1824
  %v1829 = vadd.f32 %v1803, %v1825
  %s1830 = scalar_lea.vmem %s5, 2048
  %v1831 = vld [vmem:[%s1830] sm:$0xff]
  %v1832 = vld [vmem:[%s1830 + $0x8] sm:$0xff]
  %v1833 = vld [vmem:[%s1830 + $0x10] sm:$0xff]
  %v1834 = vld [vmem:[%s1830 + $0x18] sm:$0xff]
  %v1835 = vmul.f32 %v517, %v1831
  %v1836 = vmul.f32 %v516, %v1832
  %v1837 = vmul.f32 %v515, %v1833
  %v1838 = vmul.f32 %v518, %v1834
  %v1839 = vadd.f32 %v1826, %v1835
  %v1840 = vadd.f32 %v1827, %v1836
  %v1841 = vadd.f32 %v1828, %v1837
  %v1842 = vadd.f32 %v1829, %v1838
  %s1843 = scalar_lea.vmem %s5, 2080
  %v1844 = vld [vmem:[%s1843] sm:$0xff]
  %v1845 = vld [vmem:[%s1843 + $0x8] sm:$0xff]
  %v1846 = vld [vmem:[%s1843 + $0x10] sm:$0xff]
  %v1847 = vld [vmem:[%s1843 + $0x18] sm:$0xff]
  %v1848 = vmul.f32 %v543, %v1844
  %v1849 = vmul.f32 %v542, %v1845
  %v1850 = vmul.f32 %v541, %v1846
  %v1851 = vmul.f32 %v544, %v1847
  %v1852 = vadd.f32 %v1839, %v1848
  %v1853 = vadd.f32 %v1840, %v1849
  %v1854 = vadd.f32 %v1841, %v1850
  %v1855 = vadd.f32 %v1842, %v1851
  %s1856 = scalar_lea.vmem %s4, 480
  %v1857 = vld [vmem:[%s1856] sm:$0xff]
  %v1858 = vld [vmem:[%s1856 + $0x8] sm:$0xff]
  %v1859 = vld [vmem:[%s1856 + $0x10] sm:$0xff]
  %v1860 = vld [vmem:[%s1856 + $0x18] sm:$0xff]
  %v1861 = vmul.f32 %v569, %v1857
  %v1862 = vmul.f32 %v568, %v1858
  %v1863 = vmul.f32 %v567, %v1859
  %v1864 = vmul.f32 %v570, %v1860
  %v1865 = vadd.f32 %v1813, %v1861
  %v1866 = vadd.f32 %v1814, %v1862
  %v1867 = vadd.f32 %v1815, %v1863
  %v1868 = vadd.f32 %v1816, %v1864
  %s1869 = scalar_lea.vmem %s5, 2112
  %v1870 = vld [vmem:[%s1869] sm:$0xff]
  %v1871 = vld [vmem:[%s1869 + $0x8] sm:$0xff]
  %v1872 = vld [vmem:[%s1869 + $0x10] sm:$0xff]
  %v1873 = vld [vmem:[%s1869 + $0x18] sm:$0xff]
  %v1874 = vmul.f32 %v569, %v1870
  %v1875 = vmul.f32 %v568, %v1871
  %v1876 = vmul.f32 %v567, %v1872
  %v1877 = vmul.f32 %v570, %v1873
  %v1878 = vadd.f32 %v1852, %v1874
  %v1879 = vadd.f32 %v1853, %v1875
  %v1880 = vadd.f32 %v1854, %v1876
  %v1881 = vadd.f32 %v1855, %v1877
  %s1882 = scalar_lea.vmem %s4, 512
  %v1883 = vld [vmem:[%s1882] sm:$0xff]
  %v1884 = vld [vmem:[%s1882 + $0x8] sm:$0xff]
  %v1885 = vld [vmem:[%s1882 + $0x10] sm:$0xff]
  %v1886 = vld [vmem:[%s1882 + $0x18] sm:$0xff]
  %v1887 = vmul.f32 %v595, %v1883
  %v1888 = vmul.f32 %v594, %v1884
  %v1889 = vmul.f32 %v593, %v1885
  %v1890 = vmul.f32 %v596, %v1886
  %v1891 = vadd.f32 %v1865, %v1887
  %v1892 = vadd.f32 %v1866, %v1888
  %v1893 = vadd.f32 %v1867, %v1889
  %v1894 = vadd.f32 %v1868, %v1890
  %s1895 = scalar_lea.vmem %s5, 2144
  %v1896 = vld [vmem:[%s1895] sm:$0xff]
  %v1897 = vld [vmem:[%s1895 + $0x8] sm:$0xff]
  %v1898 = vld [vmem:[%s1895 + $0x10] sm:$0xff]
  %v1899 = vld [vmem:[%s1895 + $0x18] sm:$0xff]
  %v1900 = vmul.f32 %v595, %v1896
  %v1901 = vmul.f32 %v594, %v1897
  %v1902 = vmul.f32 %v593, %v1898
  %v1903 = vmul.f32 %v596, %v1899
  %v1904 = vadd.f32 %v1878, %v1900
  %v1905 = vadd.f32 %v1879, %v1901
  %v1906 = vadd.f32 %v1880, %v1902
  %v1907 = vadd.f32 %v1881, %v1903
  %s1908 = scalar_lea.vmem %s4, 544
  %v1909 = vld [vmem:[%s1908] sm:$0xff]
  %v1910 = vld [vmem:[%s1908 + $0x8] sm:$0xff]
  %v1911 = vld [vmem:[%s1908 + $0x10] sm:$0xff]
  %v1912 = vld [vmem:[%s1908 + $0x18] sm:$0xff]
  %v1913 = vmul.f32 %v621, %v1909
  %v1914 = vmul.f32 %v620, %v1910
  %v1915 = vmul.f32 %v619, %v1911
  %v1916 = vmul.f32 %v622, %v1912
  %v1917 = vadd.f32 %v1891, %v1913
  %v1918 = vadd.f32 %v1892, %v1914
  %v1919 = vadd.f32 %v1893, %v1915
  %v1920 = vadd.f32 %v1894, %v1916
  %s1921 = scalar_lea.vmem %s5, 2176
  %v1922 = vld [vmem:[%s1921] sm:$0xff]
  %v1923 = vld [vmem:[%s1921 + $0x8] sm:$0xff]
  %v1924 = vld [vmem:[%s1921 + $0x10] sm:$0xff]
  %v1925 = vld [vmem:[%s1921 + $0x18] sm:$0xff]
  %v1926 = vmul.f32 %v621, %v1922
  %v1927 = vmul.f32 %v620, %v1923
  %v1928 = vmul.f32 %v619, %v1924
  %v1929 = vmul.f32 %v622, %v1925
  %v1930 = vadd.f32 %v1904, %v1926
  %v1931 = vadd.f32 %v1905, %v1927
  %v1932 = vadd.f32 %v1906, %v1928
  %v1933 = vadd.f32 %v1907, %v1929
  %s1934 = scalar_lea.vmem %s5, 2208
  %v1935 = vld [vmem:[%s1934] sm:$0xff]
  %v1936 = vld [vmem:[%s1934 + $0x8] sm:$0xff]
  %v1937 = vld [vmem:[%s1934 + $0x10] sm:$0xff]
  %v1938 = vld [vmem:[%s1934 + $0x18] sm:$0xff]
  %v1939 = vmul.f32 %v647, %v1935
  %v1940 = vmul.f32 %v646, %v1936
  %v1941 = vmul.f32 %v645, %v1937
  %v1942 = vmul.f32 %v648, %v1938
  %v1943 = vadd.f32 %v1930, %v1939
  %v1944 = vadd.f32 %v1931, %v1940
  %v1945 = vadd.f32 %v1932, %v1941
  %v1946 = vadd.f32 %v1933, %v1942
  %s1947 = scalar_lea.vmem %s5, 2240
  %v1948 = vld [vmem:[%s1947] sm:$0xff]
  %v1949 = vld [vmem:[%s1947 + $0x8] sm:$0xff]
  %v1950 = vld [vmem:[%s1947 + $0x10] sm:$0xff]
  %v1951 = vld [vmem:[%s1947 + $0x18] sm:$0xff]
  %v1952 = vmul.f32 %v673, %v1948
  %v1953 = vmul.f32 %v672, %v1949
  %v1954 = vmul.f32 %v671, %v1950
  %v1955 = vmul.f32 %v674, %v1951
  %v1956 = vadd.f32 %v1943, %v1952
  %v1957 = vadd.f32 %v1944, %v1953
  %v1958 = vadd.f32 %v1945, %v1954
  %v1959 = vadd.f32 %v1946, %v1955
  %s1960 = scalar_lea.vmem %s5, 2272
  %v1961 = vld [vmem:[%s1960] sm:$0xff]
  %v1962 = vld [vmem:[%s1960 + $0x8] sm:$0xff]
  %v1963 = vld [vmem:[%s1960 + $0x10] sm:$0xff]
  %v1964 = vld [vmem:[%s1960 + $0x18] sm:$0xff]
  %v1965 = vmul.f32 %v699, %v1961
  %v1966 = vmul.f32 %v698, %v1962
  %v1967 = vmul.f32 %v697, %v1963
  %v1968 = vmul.f32 %v700, %v1964
  %v1969 = vadd.f32 %v1956, %v1965
  %v1970 = vadd.f32 %v1957, %v1966
  %v1971 = vadd.f32 %v1958, %v1967
  %v1972 = vadd.f32 %v1959, %v1968
  %s1973 = scalar_lea.vmem %s5, 2304
  %v1974 = vld [vmem:[%s1973] sm:$0xff]
  %v1975 = vld [vmem:[%s1973 + $0x8] sm:$0xff]
  %v1976 = vld [vmem:[%s1973 + $0x10] sm:$0xff]
  %v1977 = vld [vmem:[%s1973 + $0x18] sm:$0xff]
  %v1978 = vmul.f32 %v725, %v1974
  %v1979 = vmul.f32 %v724, %v1975
  %v1980 = vmul.f32 %v723, %v1976
  %v1981 = vmul.f32 %v726, %v1977
  %v1982 = vadd.f32 %v1969, %v1978
  %v1983 = vadd.f32 %v1970, %v1979
  %v1984 = vadd.f32 %v1971, %v1980
  %v1985 = vadd.f32 %v1972, %v1981
  %s1986 = scalar_lea.vmem %s5, 2336
  %v1987 = vld [vmem:[%s1986] sm:$0xff]
  %v1988 = vld [vmem:[%s1986 + $0x8] sm:$0xff]
  %v1989 = vld [vmem:[%s1986 + $0x10] sm:$0xff]
  %v1990 = vld [vmem:[%s1986 + $0x18] sm:$0xff]
  %v1991 = vmul.f32 %v751, %v1987
  %v1992 = vmul.f32 %v750, %v1988
  %v1993 = vmul.f32 %v749, %v1989
  %v1994 = vmul.f32 %v752, %v1990
  %v1995 = vadd.f32 %v1982, %v1991
  %v1996 = vadd.f32 %v1983, %v1992
  %v1997 = vadd.f32 %v1984, %v1993
  %v1998 = vadd.f32 %v1985, %v1994
  %s1999 = scalar_lea.vmem %s5, 2368
  %v2000 = vld [vmem:[%s1999] sm:$0xff]
  %v2001 = vld [vmem:[%s1999 + $0x8] sm:$0xff]
  %v2002 = vld [vmem:[%s1999 + $0x10] sm:$0xff]
  %v2003 = vld [vmem:[%s1999 + $0x18] sm:$0xff]
  %v2004 = vmul.f32 %v777, %v2000
  %v2005 = vmul.f32 %v776, %v2001
  %v2006 = vmul.f32 %v775, %v2002
  %v2007 = vmul.f32 %v778, %v2003
  %v2008 = vadd.f32 %v1995, %v2004
  %v2009 = vadd.f32 %v1996, %v2005
  %v2010 = vadd.f32 %v1997, %v2006
  %v2011 = vadd.f32 %v1998, %v2007
  %s2012 = scalar_lea.vmem %s5, 2400
  %v2013 = vld [vmem:[%s2012] sm:$0xff]
  %v2014 = vld [vmem:[%s2012 + $0x8] sm:$0xff]
  %v2015 = vld [vmem:[%s2012 + $0x10] sm:$0xff]
  %v2016 = vld [vmem:[%s2012 + $0x18] sm:$0xff]
  %v2017 = vmul.f32 %v803, %v2013
  %v2018 = vmul.f32 %v802, %v2014
  %v2019 = vmul.f32 %v801, %v2015
  %v2020 = vmul.f32 %v804, %v2016
  %v2021 = vadd.f32 %v2008, %v2017
  %v2022 = vadd.f32 %v2009, %v2018
  %v2023 = vadd.f32 %v2010, %v2019
  %v2024 = vadd.f32 %v2011, %v2020
  %s2025 = scalar_lea.vmem %s5, 2432
  %v2026 = vld [vmem:[%s2025] sm:$0xff]
  %v2027 = vld [vmem:[%s2025 + $0x8] sm:$0xff]
  %v2028 = vld [vmem:[%s2025 + $0x10] sm:$0xff]
  %v2029 = vld [vmem:[%s2025 + $0x18] sm:$0xff]
  %v2030 = vmul.f32 %v829, %v2026
  %v2031 = vmul.f32 %v828, %v2027
  %v2032 = vmul.f32 %v827, %v2028
  %v2033 = vmul.f32 %v830, %v2029
  %v2034 = vadd.f32 %v2021, %v2030
  %v2035 = vadd.f32 %v2022, %v2031
  %v2036 = vadd.f32 %v2023, %v2032
  %v2037 = vadd.f32 %v2024, %v2033
  %s2038 = scalar_lea.vmem %s5, 2464
  %v2039 = vld [vmem:[%s2038] sm:$0xff]
  %v2040 = vld [vmem:[%s2038 + $0x8] sm:$0xff]
  %v2041 = vld [vmem:[%s2038 + $0x10] sm:$0xff]
  %v2042 = vld [vmem:[%s2038 + $0x18] sm:$0xff]
  %v2043 = vmul.f32 %v855, %v2039
  %v2044 = vmul.f32 %v854, %v2040
  %v2045 = vmul.f32 %v853, %v2041
  %v2046 = vmul.f32 %v856, %v2042
  %v2047 = vadd.f32 %v2034, %v2043
  %v2048 = vadd.f32 %v2035, %v2044
  %v2049 = vadd.f32 %v2036, %v2045
  %v2050 = vadd.f32 %v2037, %v2046
  %s2051 = scalar_lea.vmem %s5, 2496
  %v2052 = vld [vmem:[%s2051] sm:$0xff]
  %v2053 = vld [vmem:[%s2051 + $0x8] sm:$0xff]
  %v2054 = vld [vmem:[%s2051 + $0x10] sm:$0xff]
  %v2055 = vld [vmem:[%s2051 + $0x18] sm:$0xff]
  %v2056 = vmul.f32 %v881, %v2052
  %v2057 = vmul.f32 %v880, %v2053
  %v2058 = vmul.f32 %v879, %v2054
  %v2059 = vmul.f32 %v882, %v2055
  %v2060 = vadd.f32 %v2047, %v2056
  %v2061 = vadd.f32 %v2048, %v2057
  %v2062 = vadd.f32 %v2049, %v2058
  %v2063 = vadd.f32 %v2050, %v2059
  %s2064 = scalar_lea.vmem %s5, 2528
  %v2065 = vld [vmem:[%s2064] sm:$0xff]
  %v2066 = vld [vmem:[%s2064 + $0x8] sm:$0xff]
  %v2067 = vld [vmem:[%s2064 + $0x10] sm:$0xff]
  %v2068 = vld [vmem:[%s2064 + $0x18] sm:$0xff]
  %v2069 = vmul.f32 %v907, %v2065
  %v2070 = vmul.f32 %v906, %v2066
  %v2071 = vmul.f32 %v905, %v2067
  %v2072 = vmul.f32 %v908, %v2068
  %v2073 = vadd.f32 %v2060, %v2069
  %v2074 = vadd.f32 %v2061, %v2070
  %v2075 = vadd.f32 %v2062, %v2071
  %v2076 = vadd.f32 %v2063, %v2072
  %s2077 = scalar_lea.vmem %s5, 2560
  %v2078 = vld [vmem:[%s2077] sm:$0xff]
  %v2079 = vld [vmem:[%s2077 + $0x8] sm:$0xff]
  %v2080 = vld [vmem:[%s2077 + $0x10] sm:$0xff]
  %v2081 = vld [vmem:[%s2077 + $0x18] sm:$0xff]
  %v2082 = vmul.f32 %v933, %v2078
  %v2083 = vmul.f32 %v932, %v2079
  %v2084 = vmul.f32 %v931, %v2080
  %v2085 = vmul.f32 %v934, %v2081
  %v2086 = vadd.f32 %v2073, %v2082
  %v2087 = vadd.f32 %v2074, %v2083
  %v2088 = vadd.f32 %v2075, %v2084
  %v2089 = vadd.f32 %v2076, %v2085
  %s2090 = scalar_lea.vmem %s4, 576
  %v2091 = vld [vmem:[%s2090] sm:$0xff]
  %v2092 = vld [vmem:[%s2090 + $0x8] sm:$0xff]
  %v2093 = vld [vmem:[%s2090 + $0x10] sm:$0xff]
  %v2094 = vld [vmem:[%s2090 + $0x18] sm:$0xff]
  %v2095 = vmul.f32 %v959, %v2091
  %v2096 = vmul.f32 %v958, %v2092
  %v2097 = vmul.f32 %v957, %v2093
  %v2098 = vmul.f32 %v960, %v2094
  %v2099 = vadd.f32 %v1917, %v2095
  %v2100 = vadd.f32 %v1918, %v2096
  %v2101 = vadd.f32 %v1919, %v2097
  %v2102 = vadd.f32 %v1920, %v2098
  %s2103 = scalar_lea.vmem %s5, 2592
  %v2104 = vld [vmem:[%s2103] sm:$0xff]
  %v2105 = vld [vmem:[%s2103 + $0x8] sm:$0xff]
  %v2106 = vld [vmem:[%s2103 + $0x10] sm:$0xff]
  %v2107 = vld [vmem:[%s2103 + $0x18] sm:$0xff]
  %v2108 = vmul.f32 %v959, %v2104
  %v2109 = vmul.f32 %v958, %v2105
  %v2110 = vmul.f32 %v957, %v2106
  %v2111 = vmul.f32 %v960, %v2107
  %v2112 = vadd.f32 %v2086, %v2108
  %v2113 = vadd.f32 %v2087, %v2109
  %v2114 = vadd.f32 %v2088, %v2110
  %v2115 = vadd.f32 %v2089, %v2111
  %s2116 = scalar_lea.vmem %s4, 608
  %v2117 = vld [vmem:[%s2116] sm:$0xff]
  %v2118 = vld [vmem:[%s2116 + $0x8] sm:$0xff]
  %v2119 = vld [vmem:[%s2116 + $0x10] sm:$0xff]
  %v2120 = vld [vmem:[%s2116 + $0x18] sm:$0xff]
  %v2121 = vmul.f32 %v997, %v2117
  %v2122 = vmul.f32 %v996, %v2118
  %v2123 = vmul.f32 %v995, %v2119
  %v2124 = vmul.f32 %v998, %v2120
  %v2125 = vadd.f32 %v2099, %v2121
  %v2126 = vadd.f32 %v2100, %v2122
  %v2127 = vadd.f32 %v2101, %v2123
  %v2128 = vadd.f32 %v2102, %v2124
  %s2129 = scalar_lea.vmem %s5, 2624
  %v2130 = vld [vmem:[%s2129] sm:$0xff]
  %v2131 = vld [vmem:[%s2129 + $0x8] sm:$0xff]
  %v2132 = vld [vmem:[%s2129 + $0x10] sm:$0xff]
  %v2133 = vld [vmem:[%s2129 + $0x18] sm:$0xff]
  %v2134 = vmul.f32 %v997, %v2130
  %v2135 = vmul.f32 %v996, %v2131
  %v2136 = vmul.f32 %v995, %v2132
  %v2137 = vmul.f32 %v998, %v2133
  %v2138 = vadd.f32 %v2112, %v2134
  %v2139 = vadd.f32 %v2113, %v2135
  %v2140 = vadd.f32 %v2114, %v2136
  %v2141 = vadd.f32 %v2115, %v2137
  %s2142 = scalar_lea.vmem %s4, 640
  %v2143 = vld [vmem:[%s2142] sm:$0xff]
  %v2144 = vld [vmem:[%s2142 + $0x8] sm:$0xff]
  %v2145 = vld [vmem:[%s2142 + $0x10] sm:$0xff]
  %v2146 = vld [vmem:[%s2142 + $0x18] sm:$0xff]
  %v2147 = vmul.f32 %v1036, %v2143
  %v2148 = vmul.f32 %v1035, %v2144
  %v2149 = vmul.f32 %v1034, %v2145
  %v2150 = vmul.f32 %v1037, %v2146
  %v2151 = vadd.f32 %v2125, %v2147
  %v2152 = vadd.f32 %v2126, %v2148
  %v2153 = vadd.f32 %v2127, %v2149
  %v2154 = vadd.f32 %v2128, %v2150
  %s2155 = scalar_lea.vmem %s5, 2656
  %v2156 = vld [vmem:[%s2155] sm:$0xff]
  %v2157 = vld [vmem:[%s2155 + $0x8] sm:$0xff]
  %v2158 = vld [vmem:[%s2155 + $0x10] sm:$0xff]
  %v2159 = vld [vmem:[%s2155 + $0x18] sm:$0xff]
  %v2160 = vmul.f32 %v1036, %v2156
  %v2161 = vmul.f32 %v1035, %v2157
  %v2162 = vmul.f32 %v1034, %v2158
  %v2163 = vmul.f32 %v1037, %v2159
  %v2164 = vadd.f32 %v2138, %v2160
  %v2165 = vadd.f32 %v2139, %v2161
  %v2166 = vadd.f32 %v2140, %v2162
  %v2167 = vadd.f32 %v2141, %v2163
  %s2168 = scalar_lea.vmem %s5, 2688
  %v2169 = vld [vmem:[%s2168] sm:$0xff]
  %v2170 = vld [vmem:[%s2168 + $0x8] sm:$0xff]
  %v2171 = vld [vmem:[%s2168 + $0x10] sm:$0xff]
  %v2172 = vld [vmem:[%s2168 + $0x18] sm:$0xff]
  %v2173 = vmul.f32 %v1075, %v2169
  %v2174 = vmul.f32 %v1074, %v2170
  %v2175 = vmul.f32 %v1073, %v2171
  %v2176 = vmul.f32 %v1076, %v2172
  %v2177 = vadd.f32 %v2164, %v2173
  %v2178 = vadd.f32 %v2165, %v2174
  %v2179 = vadd.f32 %v2166, %v2175
  %v2180 = vadd.f32 %v2167, %v2176
  %s2181 = scalar_lea.vmem %s5, 2720
  %v2182 = vld [vmem:[%s2181] sm:$0xff]
  %v2183 = vld [vmem:[%s2181 + $0x8] sm:$0xff]
  %v2184 = vld [vmem:[%s2181 + $0x10] sm:$0xff]
  %v2185 = vld [vmem:[%s2181 + $0x18] sm:$0xff]
  %v2186 = vmul.f32 %v1101, %v2182
  %v2187 = vmul.f32 %v1100, %v2183
  %v2188 = vmul.f32 %v1099, %v2184
  %v2189 = vmul.f32 %v1102, %v2185
  %v2190 = vadd.f32 %v2177, %v2186
  %v2191 = vadd.f32 %v2178, %v2187
  %v2192 = vadd.f32 %v2179, %v2188
  %v2193 = vadd.f32 %v2180, %v2189
  %s2194 = scalar_lea.vmem %s4, 672
  %v2195 = vld [vmem:[%s2194] sm:$0xff]
  %v2196 = vld [vmem:[%s2194 + $0x8] sm:$0xff]
  %v2197 = vld [vmem:[%s2194 + $0x10] sm:$0xff]
  %v2198 = vld [vmem:[%s2194 + $0x18] sm:$0xff]
  %v2199 = vmul.f32 %v1127, %v2195
  %v2200 = vmul.f32 %v1126, %v2196
  %v2201 = vmul.f32 %v1125, %v2197
  %v2202 = vmul.f32 %v1128, %v2198
  %v2203 = vadd.f32 %v2151, %v2199
  %v2204 = vadd.f32 %v2152, %v2200
  %v2205 = vadd.f32 %v2153, %v2201
  %v2206 = vadd.f32 %v2154, %v2202
  %s2207 = scalar_lea.vmem %s5, 2752
  %v2208 = vld [vmem:[%s2207] sm:$0xff]
  %v2209 = vld [vmem:[%s2207 + $0x8] sm:$0xff]
  %v2210 = vld [vmem:[%s2207 + $0x10] sm:$0xff]
  %v2211 = vld [vmem:[%s2207 + $0x18] sm:$0xff]
  %v2212 = vmul.f32 %v1127, %v2208
  %v2213 = vmul.f32 %v1126, %v2209
  %v2214 = vmul.f32 %v1125, %v2210
  %v2215 = vmul.f32 %v1128, %v2211
  %v2216 = vadd.f32 %v2190, %v2212
  %v2217 = vadd.f32 %v2191, %v2213
  %v2218 = vadd.f32 %v2192, %v2214
  %v2219 = vadd.f32 %v2193, %v2215
  %s2220 = scalar_lea.vmem %s4, 704
  %v2221 = vld [vmem:[%s2220] sm:$0xff]
  %v2222 = vld [vmem:[%s2220 + $0x8] sm:$0xff]
  %v2223 = vld [vmem:[%s2220 + $0x10] sm:$0xff]
  %v2224 = vld [vmem:[%s2220 + $0x18] sm:$0xff]
  %v2225 = vmul.f32 %v1166, %v2221
  %v2226 = vmul.f32 %v1165, %v2222
  %v2227 = vmul.f32 %v1164, %v2223
  %v2228 = vmul.f32 %v1167, %v2224
  %v2229 = vadd.f32 %v2203, %v2225
  %v2230 = vadd.f32 %v2204, %v2226
  %v2231 = vadd.f32 %v2205, %v2227
  %v2232 = vadd.f32 %v2206, %v2228
  %s2233 = scalar_lea.vmem %s5, 2784
  %v2234 = vld [vmem:[%s2233] sm:$0xff]
  %v2235 = vld [vmem:[%s2233 + $0x8] sm:$0xff]
  %v2236 = vld [vmem:[%s2233 + $0x10] sm:$0xff]
  %v2237 = vld [vmem:[%s2233 + $0x18] sm:$0xff]
  %v2238 = vmul.f32 %v1166, %v2234
  %v2239 = vmul.f32 %v1165, %v2235
  %v2240 = vmul.f32 %v1164, %v2236
  %v2241 = vmul.f32 %v1167, %v2237
  %v2242 = vadd.f32 %v2216, %v2238
  %v2243 = vadd.f32 %v2217, %v2239
  %v2244 = vadd.f32 %v2218, %v2240
  %v2245 = vadd.f32 %v2219, %v2241
  %s2246 = scalar_lea.vmem %s4, 736
  %v2247 = vld [vmem:[%s2246] sm:$0xff]
  %v2248 = vld [vmem:[%s2246 + $0x8] sm:$0xff]
  %v2249 = vld [vmem:[%s2246 + $0x10] sm:$0xff]
  %v2250 = vld [vmem:[%s2246 + $0x18] sm:$0xff]
  %v2251 = vmul.f32 %v1205, %v2247
  %v2252 = vmul.f32 %v1204, %v2248
  %v2253 = vmul.f32 %v1203, %v2249
  %v2254 = vmul.f32 %v1206, %v2250
  %v2255 = vadd.f32 %v2229, %v2251
  %v2256 = vadd.f32 %v2230, %v2252
  %v2257 = vadd.f32 %v2231, %v2253
  %v2258 = vadd.f32 %v2232, %v2254
  %s2259 = scalar_lea.vmem %s5, 2816
  %v2260 = vld [vmem:[%s2259] sm:$0xff]
  %v2261 = vld [vmem:[%s2259 + $0x8] sm:$0xff]
  %v2262 = vld [vmem:[%s2259 + $0x10] sm:$0xff]
  %v2263 = vld [vmem:[%s2259 + $0x18] sm:$0xff]
  %v2264 = vmul.f32 %v1205, %v2260
  %v2265 = vmul.f32 %v1204, %v2261
  %v2266 = vmul.f32 %v1203, %v2262
  %v2267 = vmul.f32 %v1206, %v2263
  %v2268 = vadd.f32 %v2242, %v2264
  %v2269 = vadd.f32 %v2243, %v2265
  %v2270 = vadd.f32 %v2244, %v2266
  %v2271 = vadd.f32 %v2245, %v2267
  %s2272 = scalar_lea.vmem %s5, 2848
  %v2273 = vld [vmem:[%s2272] sm:$0xff]
  %v2274 = vld [vmem:[%s2272 + $0x8] sm:$0xff]
  %v2275 = vld [vmem:[%s2272 + $0x10] sm:$0xff]
  %v2276 = vld [vmem:[%s2272 + $0x18] sm:$0xff]
  %v2277 = vmul.f32 %v1244, %v2273
  %v2278 = vmul.f32 %v1243, %v2274
  %v2279 = vmul.f32 %v1242, %v2275
  %v2280 = vmul.f32 %v1245, %v2276
  %v2281 = vadd.f32 %v2268, %v2277
  %v2282 = vadd.f32 %v2269, %v2278
  %v2283 = vadd.f32 %v2270, %v2279
  %v2284 = vadd.f32 %v2271, %v2280
  %s2285 = scalar_lea.vmem %s5, 2880
  %v2286 = vld [vmem:[%s2285] sm:$0xff]
  %v2287 = vld [vmem:[%s2285 + $0x8] sm:$0xff]
  %v2288 = vld [vmem:[%s2285 + $0x10] sm:$0xff]
  %v2289 = vld [vmem:[%s2285 + $0x18] sm:$0xff]
  %v2290 = vmul.f32 %v1270, %v2286
  %v2291 = vmul.f32 %v1269, %v2287
  %v2292 = vmul.f32 %v1268, %v2288
  %v2293 = vmul.f32 %v1271, %v2289
  %v2294 = vadd.f32 %v2281, %v2290
  %v2295 = vadd.f32 %v2282, %v2291
  %v2296 = vadd.f32 %v2283, %v2292
  %v2297 = vadd.f32 %v2284, %v2293
  %s2298 = scalar_lea.vmem %s4, 768
  %v2299 = vld [vmem:[%s2298] sm:$0xff]
  %v2300 = vld [vmem:[%s2298 + $0x8] sm:$0xff]
  %v2301 = vld [vmem:[%s2298 + $0x10] sm:$0xff]
  %v2302 = vld [vmem:[%s2298 + $0x18] sm:$0xff]
  %v2303 = vmul.f32 %v1296, %v2299
  %v2304 = vmul.f32 %v1295, %v2300
  %v2305 = vmul.f32 %v1294, %v2301
  %v2306 = vmul.f32 %v1297, %v2302
  %v2307 = vadd.f32 %v2255, %v2303
  %v2308 = vadd.f32 %v2256, %v2304
  %v2309 = vadd.f32 %v2257, %v2305
  %v2310 = vadd.f32 %v2258, %v2306
  %s2311 = scalar_lea.vmem %s5, 2912
  %v2312 = vld [vmem:[%s2311] sm:$0xff]
  %v2313 = vld [vmem:[%s2311 + $0x8] sm:$0xff]
  %v2314 = vld [vmem:[%s2311 + $0x10] sm:$0xff]
  %v2315 = vld [vmem:[%s2311 + $0x18] sm:$0xff]
  %v2316 = vmul.f32 %v1296, %v2312
  %v2317 = vmul.f32 %v1295, %v2313
  %v2318 = vmul.f32 %v1294, %v2314
  %v2319 = vmul.f32 %v1297, %v2315
  %v2320 = vadd.f32 %v2294, %v2316
  %v2321 = vadd.f32 %v2295, %v2317
  %v2322 = vadd.f32 %v2296, %v2318
  %v2323 = vadd.f32 %v2297, %v2319
  %s2324 = scalar_lea.vmem %s4, 800
  %v2325 = vld [vmem:[%s2324] sm:$0xff]
  %v2326 = vld [vmem:[%s2324 + $0x8] sm:$0xff]
  %v2327 = vld [vmem:[%s2324 + $0x10] sm:$0xff]
  %v2328 = vld [vmem:[%s2324 + $0x18] sm:$0xff]
  %v2329 = vmul.f32 %v1335, %v2325
  %v2330 = vmul.f32 %v1334, %v2326
  %v2331 = vmul.f32 %v1333, %v2327
  %v2332 = vmul.f32 %v1336, %v2328
  %v2333 = vadd.f32 %v2307, %v2329
  %v2334 = vadd.f32 %v2308, %v2330
  %v2335 = vadd.f32 %v2309, %v2331
  %v2336 = vadd.f32 %v2310, %v2332
  %s2337 = scalar_lea.vmem %s5, 2944
  %v2338 = vld [vmem:[%s2337] sm:$0xff]
  %v2339 = vld [vmem:[%s2337 + $0x8] sm:$0xff]
  %v2340 = vld [vmem:[%s2337 + $0x10] sm:$0xff]
  %v2341 = vld [vmem:[%s2337 + $0x18] sm:$0xff]
  %v2342 = vmul.f32 %v1335, %v2338
  %v2343 = vmul.f32 %v1334, %v2339
  %v2344 = vmul.f32 %v1333, %v2340
  %v2345 = vmul.f32 %v1336, %v2341
  %v2346 = vadd.f32 %v2320, %v2342
  %v2347 = vadd.f32 %v2321, %v2343
  %v2348 = vadd.f32 %v2322, %v2344
  %v2349 = vadd.f32 %v2323, %v2345
  %s2350 = scalar_lea.vmem %s4, 832
  %v2351 = vld [vmem:[%s2350] sm:$0xff]
  %v2352 = vld [vmem:[%s2350 + $0x8] sm:$0xff]
  %v2353 = vld [vmem:[%s2350 + $0x10] sm:$0xff]
  %v2354 = vld [vmem:[%s2350 + $0x18] sm:$0xff]
  %v2355 = vmul.f32 %v1374, %v2351
  %v2356 = vmul.f32 %v1373, %v2352
  %v2357 = vmul.f32 %v1372, %v2353
  %v2358 = vmul.f32 %v1375, %v2354
  %v2359 = vadd.f32 %v2333, %v2355
  %v2360 = vadd.f32 %v2334, %v2356
  %v2361 = vadd.f32 %v2335, %v2357
  %v2362 = vadd.f32 %v2336, %v2358
  %s2363 = scalar_lea.vmem %s5, 2976
  %v2364 = vld [vmem:[%s2363] sm:$0xff]
  %v2365 = vld [vmem:[%s2363 + $0x8] sm:$0xff]
  %v2366 = vld [vmem:[%s2363 + $0x10] sm:$0xff]
  %v2367 = vld [vmem:[%s2363 + $0x18] sm:$0xff]
  %v2368 = vmul.f32 %v1374, %v2364
  %v2369 = vmul.f32 %v1373, %v2365
  %v2370 = vmul.f32 %v1372, %v2366
  %v2371 = vmul.f32 %v1375, %v2367
  %v2372 = vadd.f32 %v2346, %v2368
  %v2373 = vadd.f32 %v2347, %v2369
  %v2374 = vadd.f32 %v2348, %v2370
  %v2375 = vadd.f32 %v2349, %v2371
  %s2376 = scalar_lea.vmem %s5, 3008
  %v2377 = vld [vmem:[%s2376] sm:$0xff]
  %v2378 = vld [vmem:[%s2376 + $0x8] sm:$0xff]
  %v2379 = vld [vmem:[%s2376 + $0x10] sm:$0xff]
  %v2380 = vld [vmem:[%s2376 + $0x18] sm:$0xff]
  %v2381 = vmul.f32 %v1413, %v2377
  %v2382 = vmul.f32 %v1412, %v2378
  %v2383 = vmul.f32 %v1411, %v2379
  %v2384 = vmul.f32 %v1414, %v2380
  %v2385 = vadd.f32 %v2372, %v2381
  %v2386 = vadd.f32 %v2373, %v2382
  %v2387 = vadd.f32 %v2374, %v2383
  %v2388 = vadd.f32 %v2375, %v2384
  %s2389 = scalar_lea.vmem %s5, 3040
  %v2390 = vld [vmem:[%s2389] sm:$0xff]
  %v2391 = vld [vmem:[%s2389 + $0x8] sm:$0xff]
  %v2392 = vld [vmem:[%s2389 + $0x10] sm:$0xff]
  %v2393 = vld [vmem:[%s2389 + $0x18] sm:$0xff]
  %v2394 = vmul.f32 %v1439, %v2390
  %v2395 = vmul.f32 %v1438, %v2391
  %v2396 = vmul.f32 %v1437, %v2392
  %v2397 = vmul.f32 %v1440, %v2393
  %v2398 = vadd.f32 %v2385, %v2394
  %v2399 = vadd.f32 %v2386, %v2395
  %v2400 = vadd.f32 %v2387, %v2396
  %v2401 = vadd.f32 %v2388, %v2397
  %s2402 = scalar_lea.vmem %s5, 3072
  %v2403 = vld [vmem:[%s2402] sm:$0xff]
  %v2404 = vld [vmem:[%s2402 + $0x8] sm:$0xff]
  %v2405 = vld [vmem:[%s2402 + $0x10] sm:$0xff]
  %v2406 = vld [vmem:[%s2402 + $0x18] sm:$0xff]
  %v2407 = vmul.f32 %v1465, %v2403
  %v2408 = vmul.f32 %v1464, %v2404
  %v2409 = vmul.f32 %v1463, %v2405
  %v2410 = vmul.f32 %v1466, %v2406
  %v2411 = vadd.f32 %v2398, %v2407
  %v2412 = vadd.f32 %v2399, %v2408
  %v2413 = vadd.f32 %v2400, %v2409
  %v2414 = vadd.f32 %v2401, %v2410
  %s2415 = scalar_lea.vmem %s5, 3104
  %v2416 = vld [vmem:[%s2415] sm:$0xff]
  %v2417 = vld [vmem:[%s2415 + $0x8] sm:$0xff]
  %v2418 = vld [vmem:[%s2415 + $0x10] sm:$0xff]
  %v2419 = vld [vmem:[%s2415 + $0x18] sm:$0xff]
  %v2420 = vmul.f32 %v1491, %v2416
  %v2421 = vmul.f32 %v1490, %v2417
  %v2422 = vmul.f32 %v1489, %v2418
  %v2423 = vmul.f32 %v1492, %v2419
  %v2424 = vadd.f32 %v2411, %v2420
  %v2425 = vadd.f32 %v2412, %v2421
  %v2426 = vadd.f32 %v2413, %v2422
  %v2427 = vadd.f32 %v2414, %v2423
  %s2428 = scalar_lea.vmem %s5, 3136
  %v2429 = vld [vmem:[%s2428] sm:$0xff]
  %v2430 = vld [vmem:[%s2428 + $0x8] sm:$0xff]
  %v2431 = vld [vmem:[%s2428 + $0x10] sm:$0xff]
  %v2432 = vld [vmem:[%s2428 + $0x18] sm:$0xff]
  %v2433 = vmul.f32 %v1517, %v2429
  %v2434 = vmul.f32 %v1516, %v2430
  %v2435 = vmul.f32 %v1515, %v2431
  %v2436 = vmul.f32 %v1518, %v2432
  %v2437 = vadd.f32 %v2424, %v2433
  %v2438 = vadd.f32 %v2425, %v2434
  %v2439 = vadd.f32 %v2426, %v2435
  %v2440 = vadd.f32 %v2427, %v2436
  %s2441 = scalar_lea.vmem %s5, 3168
  %v2442 = vld [vmem:[%s2441] sm:$0xff]
  %v2443 = vld [vmem:[%s2441 + $0x8] sm:$0xff]
  %v2444 = vld [vmem:[%s2441 + $0x10] sm:$0xff]
  %v2445 = vld [vmem:[%s2441 + $0x18] sm:$0xff]
  %v2446 = vmul.f32 %v1543, %v2442
  %v2447 = vmul.f32 %v1542, %v2443
  %v2448 = vmul.f32 %v1541, %v2444
  %v2449 = vmul.f32 %v1544, %v2445
  %v2450 = vadd.f32 %v2437, %v2446
  %v2451 = vadd.f32 %v2438, %v2447
  %v2452 = vadd.f32 %v2439, %v2448
  %v2453 = vadd.f32 %v2440, %v2449
  %s2454 = scalar_lea.vmem %s5, 3200
  %v2455 = vld [vmem:[%s2454] sm:$0xff]
  %v2456 = vld [vmem:[%s2454 + $0x8] sm:$0xff]
  %v2457 = vld [vmem:[%s2454 + $0x10] sm:$0xff]
  %v2458 = vld [vmem:[%s2454 + $0x18] sm:$0xff]
  %v2459 = vmul.f32 %v167, %v2455
  %v2460 = vmul.f32 %v166, %v2456
  %v2461 = vmul.f32 %v165, %v2457
  %v2462 = vmul.f32 %v168, %v2458
  %v2463 = vadd.f32 %v2450, %v2459
  %v2464 = vadd.f32 %v2451, %v2460
  %v2465 = vadd.f32 %v2452, %v2461
  %v2466 = vadd.f32 %v2453, %v2462
  %s2467 = scalar_lea.vmem %s5, 3232
  %v2468 = vld [vmem:[%s2467] sm:$0xff]
  %v2469 = vld [vmem:[%s2467 + $0x8] sm:$0xff]
  %v2470 = vld [vmem:[%s2467 + $0x10] sm:$0xff]
  %v2471 = vld [vmem:[%s2467 + $0x18] sm:$0xff]
  %v2472 = vmul.f32 %v192, %v2468
  %v2473 = vmul.f32 %v191, %v2469
  %v2474 = vmul.f32 %v190, %v2470
  %v2475 = vmul.f32 %v193, %v2471
  %v2476 = vadd.f32 %v2463, %v2472
  %v2477 = vadd.f32 %v2464, %v2473
  %v2478 = vadd.f32 %v2465, %v2474
  %v2479 = vadd.f32 %v2466, %v2475
  %s2480 = scalar_lea.vmem %s5, 3264
  %v2481 = vld [vmem:[%s2480] sm:$0xff]
  %v2482 = vld [vmem:[%s2480 + $0x8] sm:$0xff]
  %v2483 = vld [vmem:[%s2480 + $0x10] sm:$0xff]
  %v2484 = vld [vmem:[%s2480 + $0x18] sm:$0xff]
  %v2485 = vmul.f32 %v218, %v2481
  %v2486 = vmul.f32 %v217, %v2482
  %v2487 = vmul.f32 %v216, %v2483
  %v2488 = vmul.f32 %v219, %v2484
  %v2489 = vadd.f32 %v2476, %v2485
  %v2490 = vadd.f32 %v2477, %v2486
  %v2491 = vadd.f32 %v2478, %v2487
  %v2492 = vadd.f32 %v2479, %v2488
  %s2493 = scalar_lea.vmem %s5, 3296
  %v2494 = vld [vmem:[%s2493] sm:$0xff]
  %v2495 = vld [vmem:[%s2493 + $0x8] sm:$0xff]
  %v2496 = vld [vmem:[%s2493 + $0x10] sm:$0xff]
  %v2497 = vld [vmem:[%s2493 + $0x18] sm:$0xff]
  %v2498 = vmul.f32 %v244, %v2494
  %v2499 = vmul.f32 %v243, %v2495
  %v2500 = vmul.f32 %v242, %v2496
  %v2501 = vmul.f32 %v245, %v2497
  %v2502 = vadd.f32 %v2489, %v2498
  %v2503 = vadd.f32 %v2490, %v2499
  %v2504 = vadd.f32 %v2491, %v2500
  %v2505 = vadd.f32 %v2492, %v2501
  %s2506 = scalar_lea.vmem %s5, 3328
  %v2507 = vld [vmem:[%s2506] sm:$0xff]
  %v2508 = vld [vmem:[%s2506 + $0x8] sm:$0xff]
  %v2509 = vld [vmem:[%s2506 + $0x10] sm:$0xff]
  %v2510 = vld [vmem:[%s2506 + $0x18] sm:$0xff]
  %v2511 = vmul.f32 %v270, %v2507
  %v2512 = vmul.f32 %v269, %v2508
  %v2513 = vmul.f32 %v268, %v2509
  %v2514 = vmul.f32 %v271, %v2510
  %v2515 = vadd.f32 %v2502, %v2511
  %v2516 = vadd.f32 %v2503, %v2512
  %v2517 = vadd.f32 %v2504, %v2513
  %v2518 = vadd.f32 %v2505, %v2514
  %s2519 = scalar_lea.vmem %s5, 3360
  %v2520 = vld [vmem:[%s2519] sm:$0xff]
  %v2521 = vld [vmem:[%s2519 + $0x8] sm:$0xff]
  %v2522 = vld [vmem:[%s2519 + $0x10] sm:$0xff]
  %v2523 = vld [vmem:[%s2519 + $0x18] sm:$0xff]
  %v2524 = vmul.f32 %v296, %v2520
  %v2525 = vmul.f32 %v295, %v2521
  %v2526 = vmul.f32 %v294, %v2522
  %v2527 = vmul.f32 %v297, %v2523
  %v2528 = vadd.f32 %v2515, %v2524
  %v2529 = vadd.f32 %v2516, %v2525
  %v2530 = vadd.f32 %v2517, %v2526
  %v2531 = vadd.f32 %v2518, %v2527
  %s2532 = scalar_lea.vmem %s5, 3392
  %v2533 = vld [vmem:[%s2532] sm:$0xff]
  %v2534 = vld [vmem:[%s2532 + $0x8] sm:$0xff]
  %v2535 = vld [vmem:[%s2532 + $0x10] sm:$0xff]
  %v2536 = vld [vmem:[%s2532 + $0x18] sm:$0xff]
  %v2537 = vmul.f32 %v322, %v2533
  %v2538 = vmul.f32 %v321, %v2534
  %v2539 = vmul.f32 %v320, %v2535
  %v2540 = vmul.f32 %v323, %v2536
  %v2541 = vadd.f32 %v2528, %v2537
  %v2542 = vadd.f32 %v2529, %v2538
  %v2543 = vadd.f32 %v2530, %v2539
  %v2544 = vadd.f32 %v2531, %v2540
  %s2545 = scalar_lea.vmem %s5, 3424
  %v2546 = vld [vmem:[%s2545] sm:$0xff]
  %v2547 = vld [vmem:[%s2545 + $0x8] sm:$0xff]
  %v2548 = vld [vmem:[%s2545 + $0x10] sm:$0xff]
  %v2549 = vld [vmem:[%s2545 + $0x18] sm:$0xff]
  %v2550 = vmul.f32 %v348, %v2546
  %v2551 = vmul.f32 %v347, %v2547
  %v2552 = vmul.f32 %v346, %v2548
  %v2553 = vmul.f32 %v349, %v2549
  %v2554 = vadd.f32 %v2541, %v2550
  %v2555 = vadd.f32 %v2542, %v2551
  %v2556 = vadd.f32 %v2543, %v2552
  %v2557 = vadd.f32 %v2544, %v2553
  %s2558 = scalar_lea.vmem %s5, 3456
  %v2559 = vld [vmem:[%s2558] sm:$0xff]
  %v2560 = vld [vmem:[%s2558 + $0x8] sm:$0xff]
  %v2561 = vld [vmem:[%s2558 + $0x10] sm:$0xff]
  %v2562 = vld [vmem:[%s2558 + $0x18] sm:$0xff]
  %v2563 = vmul.f32 %v374, %v2559
  %v2564 = vmul.f32 %v373, %v2560
  %v2565 = vmul.f32 %v372, %v2561
  %v2566 = vmul.f32 %v375, %v2562
  %v2567 = vadd.f32 %v2554, %v2563
  %v2568 = vadd.f32 %v2555, %v2564
  %v2569 = vadd.f32 %v2556, %v2565
  %v2570 = vadd.f32 %v2557, %v2566
  %s2571 = scalar_lea.vmem %s5, 3488
  %v2572 = vld [vmem:[%s2571] sm:$0xff]
  %v2573 = vld [vmem:[%s2571 + $0x8] sm:$0xff]
  %v2574 = vld [vmem:[%s2571 + $0x10] sm:$0xff]
  %v2575 = vld [vmem:[%s2571 + $0x18] sm:$0xff]
  %v2576 = vmul.f32 %v400, %v2572
  %v2577 = vmul.f32 %v399, %v2573
  %v2578 = vmul.f32 %v398, %v2574
  %v2579 = vmul.f32 %v401, %v2575
  %v2580 = vadd.f32 %v2567, %v2576
  %v2581 = vadd.f32 %v2568, %v2577
  %v2582 = vadd.f32 %v2569, %v2578
  %v2583 = vadd.f32 %v2570, %v2579
  %s2584 = scalar_lea.vmem %s5, 3520
  %v2585 = vld [vmem:[%s2584] sm:$0xff]
  %v2586 = vld [vmem:[%s2584 + $0x8] sm:$0xff]
  %v2587 = vld [vmem:[%s2584 + $0x10] sm:$0xff]
  %v2588 = vld [vmem:[%s2584 + $0x18] sm:$0xff]
  %v2589 = vmul.f32 %v426, %v2585
  %v2590 = vmul.f32 %v425, %v2586
  %v2591 = vmul.f32 %v424, %v2587
  %v2592 = vmul.f32 %v427, %v2588
  %v2593 = vadd.f32 %v2580, %v2589
  %v2594 = vadd.f32 %v2581, %v2590
  %v2595 = vadd.f32 %v2582, %v2591
  %v2596 = vadd.f32 %v2583, %v2592
  %s2597 = scalar_lea.vmem %s5, 3552
  %v2598 = vld [vmem:[%s2597] sm:$0xff]
  %v2599 = vld [vmem:[%s2597 + $0x8] sm:$0xff]
  %v2600 = vld [vmem:[%s2597 + $0x10] sm:$0xff]
  %v2601 = vld [vmem:[%s2597 + $0x18] sm:$0xff]
  %v2602 = vmul.f32 %v452, %v2598
  %v2603 = vmul.f32 %v451, %v2599
  %v2604 = vmul.f32 %v450, %v2600
  %v2605 = vmul.f32 %v453, %v2601
  %v2606 = vadd.f32 %v2593, %v2602
  %v2607 = vadd.f32 %v2594, %v2603
  %v2608 = vadd.f32 %v2595, %v2604
  %v2609 = vadd.f32 %v2596, %v2605
  %s2610 = scalar_lea.vmem %s5, 3584
  %v2611 = vld [vmem:[%s2610] sm:$0xff]
  %v2612 = vld [vmem:[%s2610 + $0x8] sm:$0xff]
  %v2613 = vld [vmem:[%s2610 + $0x10] sm:$0xff]
  %v2614 = vld [vmem:[%s2610 + $0x18] sm:$0xff]
  %v2615 = vmul.f32 %v151, %v2611
  %v2616 = vmul.f32 %v152, %v2612
  %v2617 = vmul.f32 %v153, %v2613
  %v2618 = vmul.f32 %v150, %v2614
  %v2619 = vadd.f32 %v2606, %v2615
  %v2620 = vadd.f32 %v2607, %v2616
  %v2621 = vadd.f32 %v2608, %v2617
  %v2622 = vadd.f32 %v2609, %v2618
  %s2623 = scalar_lea.vmem %s5, 3616
  %v2624 = vld [vmem:[%s2623] sm:$0xff]
  %v2625 = vld [vmem:[%s2623 + $0x8] sm:$0xff]
  %v2626 = vld [vmem:[%s2623 + $0x10] sm:$0xff]
  %v2627 = vld [vmem:[%s2623 + $0x18] sm:$0xff]
  %v2628 = vmul.f32 %v490, %v2624
  %v2629 = vmul.f32 %v489, %v2625
  %v2630 = vmul.f32 %v492, %v2626
  %v2631 = vmul.f32 %v491, %v2627
  %v2632 = vadd.f32 %v2619, %v2628
  %v2633 = vadd.f32 %v2620, %v2629
  %v2634 = vadd.f32 %v2621, %v2630
  %v2635 = vadd.f32 %v2622, %v2631
  %s2636 = scalar_lea.vmem %s5, 3648
  %v2637 = vld [vmem:[%s2636] sm:$0xff]
  %v2638 = vld [vmem:[%s2636 + $0x8] sm:$0xff]
  %v2639 = vld [vmem:[%s2636 + $0x10] sm:$0xff]
  %v2640 = vld [vmem:[%s2636 + $0x18] sm:$0xff]
  %v2641 = vmul.f32 %v516, %v2637
  %v2642 = vmul.f32 %v515, %v2638
  %v2643 = vmul.f32 %v518, %v2639
  %v2644 = vmul.f32 %v517, %v2640
  %v2645 = vadd.f32 %v2632, %v2641
  %v2646 = vadd.f32 %v2633, %v2642
  %v2647 = vadd.f32 %v2634, %v2643
  %v2648 = vadd.f32 %v2635, %v2644
  %s2649 = scalar_lea.vmem %s5, 3680
  %v2650 = vld [vmem:[%s2649] sm:$0xff]
  %v2651 = vld [vmem:[%s2649 + $0x8] sm:$0xff]
  %v2652 = vld [vmem:[%s2649 + $0x10] sm:$0xff]
  %v2653 = vld [vmem:[%s2649 + $0x18] sm:$0xff]
  %v2654 = vmul.f32 %v542, %v2650
  %v2655 = vmul.f32 %v541, %v2651
  %v2656 = vmul.f32 %v544, %v2652
  %v2657 = vmul.f32 %v543, %v2653
  %v2658 = vadd.f32 %v2645, %v2654
  %v2659 = vadd.f32 %v2646, %v2655
  %v2660 = vadd.f32 %v2647, %v2656
  %v2661 = vadd.f32 %v2648, %v2657
  %s2662 = scalar_lea.vmem %s5, 3712
  %v2663 = vld [vmem:[%s2662] sm:$0xff]
  %v2664 = vld [vmem:[%s2662 + $0x8] sm:$0xff]
  %v2665 = vld [vmem:[%s2662 + $0x10] sm:$0xff]
  %v2666 = vld [vmem:[%s2662 + $0x18] sm:$0xff]
  %v2667 = vmul.f32 %v568, %v2663
  %v2668 = vmul.f32 %v567, %v2664
  %v2669 = vmul.f32 %v570, %v2665
  %v2670 = vmul.f32 %v569, %v2666
  %v2671 = vadd.f32 %v2658, %v2667
  %v2672 = vadd.f32 %v2659, %v2668
  %v2673 = vadd.f32 %v2660, %v2669
  %v2674 = vadd.f32 %v2661, %v2670
  %s2675 = scalar_lea.vmem %s5, 3744
  %v2676 = vld [vmem:[%s2675] sm:$0xff]
  %v2677 = vld [vmem:[%s2675 + $0x8] sm:$0xff]
  %v2678 = vld [vmem:[%s2675 + $0x10] sm:$0xff]
  %v2679 = vld [vmem:[%s2675 + $0x18] sm:$0xff]
  %v2680 = vmul.f32 %v594, %v2676
  %v2681 = vmul.f32 %v593, %v2677
  %v2682 = vmul.f32 %v596, %v2678
  %v2683 = vmul.f32 %v595, %v2679
  %v2684 = vadd.f32 %v2671, %v2680
  %v2685 = vadd.f32 %v2672, %v2681
  %v2686 = vadd.f32 %v2673, %v2682
  %v2687 = vadd.f32 %v2674, %v2683
  %s2688 = scalar_lea.vmem %s5, 3776
  %v2689 = vld [vmem:[%s2688] sm:$0xff]
  %v2690 = vld [vmem:[%s2688 + $0x8] sm:$0xff]
  %v2691 = vld [vmem:[%s2688 + $0x10] sm:$0xff]
  %v2692 = vld [vmem:[%s2688 + $0x18] sm:$0xff]
  %v2693 = vmul.f32 %v620, %v2689
  %v2694 = vmul.f32 %v619, %v2690
  %v2695 = vmul.f32 %v622, %v2691
  %v2696 = vmul.f32 %v621, %v2692
  %v2697 = vadd.f32 %v2684, %v2693
  %v2698 = vadd.f32 %v2685, %v2694
  %v2699 = vadd.f32 %v2686, %v2695
  %v2700 = vadd.f32 %v2687, %v2696
  %s2701 = scalar_lea.vmem %s5, 3808
  %v2702 = vld [vmem:[%s2701] sm:$0xff]
  %v2703 = vld [vmem:[%s2701 + $0x8] sm:$0xff]
  %v2704 = vld [vmem:[%s2701 + $0x10] sm:$0xff]
  %v2705 = vld [vmem:[%s2701 + $0x18] sm:$0xff]
  %v2706 = vmul.f32 %v646, %v2702
  %v2707 = vmul.f32 %v645, %v2703
  %v2708 = vmul.f32 %v648, %v2704
  %v2709 = vmul.f32 %v647, %v2705
  %v2710 = vadd.f32 %v2697, %v2706
  %v2711 = vadd.f32 %v2698, %v2707
  %v2712 = vadd.f32 %v2699, %v2708
  %v2713 = vadd.f32 %v2700, %v2709
  %s2714 = scalar_lea.vmem %s5, 3840
  %v2715 = vld [vmem:[%s2714] sm:$0xff]
  %v2716 = vld [vmem:[%s2714 + $0x8] sm:$0xff]
  %v2717 = vld [vmem:[%s2714 + $0x10] sm:$0xff]
  %v2718 = vld [vmem:[%s2714 + $0x18] sm:$0xff]
  %v2719 = vmul.f32 %v672, %v2715
  %v2720 = vmul.f32 %v671, %v2716
  %v2721 = vmul.f32 %v674, %v2717
  %v2722 = vmul.f32 %v673, %v2718
  %v2723 = vadd.f32 %v2710, %v2719
  %v2724 = vadd.f32 %v2711, %v2720
  %v2725 = vadd.f32 %v2712, %v2721
  %v2726 = vadd.f32 %v2713, %v2722
  %s2727 = scalar_lea.vmem %s5, 3872
  %v2728 = vld [vmem:[%s2727] sm:$0xff]
  %v2729 = vld [vmem:[%s2727 + $0x8] sm:$0xff]
  %v2730 = vld [vmem:[%s2727 + $0x10] sm:$0xff]
  %v2731 = vld [vmem:[%s2727 + $0x18] sm:$0xff]
  %v2732 = vmul.f32 %v698, %v2728
  %v2733 = vmul.f32 %v697, %v2729
  %v2734 = vmul.f32 %v700, %v2730
  %v2735 = vmul.f32 %v699, %v2731
  %v2736 = vadd.f32 %v2723, %v2732
  %v2737 = vadd.f32 %v2724, %v2733
  %v2738 = vadd.f32 %v2725, %v2734
  %v2739 = vadd.f32 %v2726, %v2735
  %s2740 = scalar_lea.vmem %s5, 3904
  %v2741 = vld [vmem:[%s2740] sm:$0xff]
  %v2742 = vld [vmem:[%s2740 + $0x8] sm:$0xff]
  %v2743 = vld [vmem:[%s2740 + $0x10] sm:$0xff]
  %v2744 = vld [vmem:[%s2740 + $0x18] sm:$0xff]
  %v2745 = vmul.f32 %v724, %v2741
  %v2746 = vmul.f32 %v723, %v2742
  %v2747 = vmul.f32 %v726, %v2743
  %v2748 = vmul.f32 %v725, %v2744
  %v2749 = vadd.f32 %v2736, %v2745
  %v2750 = vadd.f32 %v2737, %v2746
  %v2751 = vadd.f32 %v2738, %v2747
  %v2752 = vadd.f32 %v2739, %v2748
  %s2753 = scalar_lea.vmem %s5, 3936
  %v2754 = vld [vmem:[%s2753] sm:$0xff]
  %v2755 = vld [vmem:[%s2753 + $0x8] sm:$0xff]
  %v2756 = vld [vmem:[%s2753 + $0x10] sm:$0xff]
  %v2757 = vld [vmem:[%s2753 + $0x18] sm:$0xff]
  %v2758 = vmul.f32 %v750, %v2754
  %v2759 = vmul.f32 %v749, %v2755
  %v2760 = vmul.f32 %v752, %v2756
  %v2761 = vmul.f32 %v751, %v2757
  %v2762 = vadd.f32 %v2749, %v2758
  %v2763 = vadd.f32 %v2750, %v2759
  %v2764 = vadd.f32 %v2751, %v2760
  %v2765 = vadd.f32 %v2752, %v2761
  %s2766 = scalar_lea.vmem %s5, 3968
  %v2767 = vld [vmem:[%s2766] sm:$0xff]
  %v2768 = vld [vmem:[%s2766 + $0x8] sm:$0xff]
  %v2769 = vld [vmem:[%s2766 + $0x10] sm:$0xff]
  %v2770 = vld [vmem:[%s2766 + $0x18] sm:$0xff]
  %v2771 = vmul.f32 %v776, %v2767
  %v2772 = vmul.f32 %v775, %v2768
  %v2773 = vmul.f32 %v778, %v2769
  %v2774 = vmul.f32 %v777, %v2770
  %v2775 = vadd.f32 %v2762, %v2771
  %v2776 = vadd.f32 %v2763, %v2772
  %v2777 = vadd.f32 %v2764, %v2773
  %v2778 = vadd.f32 %v2765, %v2774
  %v2779 = vld [vmem:[%s6] sm:$0xff]
  %2781 = vset.pattern.permute.xlu0 0
  %2782 = vperm.xlu0 %2781, %v2779
  %v2783 = vpop.permute.xlu0 %2782
  %v2785 = vadd.f32 %v1774, %v2783
  %v2786 = vadd.f32 %v1775, %v2783
  %v2787 = vadd.f32 %v1776, %v2783
  %v2788 = vadd.f32 %v1777, %v2783
  %v2789 = vmax.f32 %v2785, 0.0
  %v2790 = vmax.f32 %v2786, 0.0
  %v2791 = vmax.f32 %v2787, 0.0
  %v2792 = vmax.f32 %v2788, 0.0
  %v2793 = vmin.f32 %v2789, 6.0
  %v2794 = vmin.f32 %v2790, 6.0
  %v2795 = vmin.f32 %v2791, 6.0
  %v2796 = vmin.f32 %v2792, 6.0
  %v2797 = vadd.f32 %v2793, 0.0
  %v2798 = vadd.f32 %v2794, 0.0
  %v2799 = vadd.f32 %v2795, 0.0
  %v2800 = vadd.f32 %v2796, 0.0
  %2801 = vset.pattern.permute.xlu0 1
  %2802 = vperm.xlu0 %2801, %v2779
  %v2803 = vpop.permute.xlu0 %2802
  %v2805 = vadd.f32 %v2359, %v2803
  %v2806 = vadd.f32 %v2360, %v2803
  %v2807 = vadd.f32 %v2361, %v2803
  %v2808 = vadd.f32 %v2362, %v2803
  %v2809 = vmax.f32 %v2805, 0.0
  %v2810 = vmax.f32 %v2806, 0.0
  %v2811 = vmax.f32 %v2807, 0.0
  %v2812 = vmax.f32 %v2808, 0.0
  %v2813 = vmin.f32 %v2809, 6.0
  %v2814 = vmin.f32 %v2810, 6.0
  %v2815 = vmin.f32 %v2811, 6.0
  %v2816 = vmin.f32 %v2812, 6.0
  %v2817 = vadd.f32 %v2797, %v2813
  %v2818 = vadd.f32 %v2798, %v2814
  %v2819 = vadd.f32 %v2799, %v2815
  %v2820 = vadd.f32 %v2800, %v2816
  %2821 = vset.pattern.permute.xlu0 2
  %2822 = vperm.xlu0 %2821, %v2779
  %v2823 = vpop.permute.xlu0 %2822
  %v2825 = vadd.f32 %v2775, %v2823
  %v2826 = vadd.f32 %v2776, %v2823
  %v2827 = vadd.f32 %v2777, %v2823
  %v2828 = vadd.f32 %v2778, %v2823
  %v2829 = vmax.f32 %v2825, 0.0
  %v2830 = vmax.f32 %v2826, 0.0
  %v2831 = vmax.f32 %v2827, 0.0
  %v2832 = vmax.f32 %v2828, 0.0
  %v2833 = vmin.f32 %v2829, 6.0
  %v2834 = vmin.f32 %v2830, 6.0
  %v2835 = vmin.f32 %v2831, 6.0
  %v2836 = vmin.f32 %v2832, 6.0
  %v2837 = vadd.f32 %v2817, %v2833
  %v2838 = vadd.f32 %v2818, %v2834
  %v2839 = vadd.f32 %v2819, %v2835
  %v2840 = vadd.f32 %v2820, %v2836
  %v2841 = vld [vmem:[%s7] sm:$0xff]
  %v2842 = vld [vmem:[%s8] sm:$0xff]
  %2843 = vst [vmem:[#allocation1] ss:$2 sm:$0xff] %v35
  %s2844 = scalar_lea.vmem [#allocation1], 16
  %2845 = vst [vmem:[%s2844] ss:$2 sm:$0xff] %v36
  %v2846 = vld.sshfl [vmem:[#allocation1] sm:$0xff pattern:$0x75316420]
  %v2847 = vld.sshfl [vmem:[#allocation1 + $0x8] sm:$0xff pattern:$0x75316420]
  %v2848 = vld.sshfl [vmem:[#allocation1 + $0x10] sm:$0xff pattern:$0x75316420]
  %v2849 = vld.sshfl [vmem:[#allocation1 + $0x18] sm:$0xff pattern:$0x75316420]
  %v2851 = vsel %vm53, %v2842, 0
  %v2853 = vsel %vm57, %v2846, 0
  %v2855 = vsel %vm57, %v2847, 0
  %v2857 = vsel %vm57, %v2848, 0
  %v2859 = vsel %vm57, %v2849, 0
  %2861 = vmatpush.msra.mxu0 0.0
  %2862 = vmatpush.msra.mxu0 0.0
  %2863 = vmatpush.msra.mxu0 0.0
  %2864 = vmatpush.msra.mxu0 0.0
  %2865 = vmatpush.msra.mxu0 0.0
  %2866 = vmatpush.msra.mxu0 0.0
  %2867 = vmatpush.msra.mxu0 0.0
  %2868 = vmatpush.msra.mxu0 0.0
  %2869 = vmatpush.msra.mxu0 0.0
  %2870 = vmatpush.msra.mxu0 0.0
  %2871 = vmatpush.msra.mxu0 0.0
  %2872 = vmatpush.msra.mxu0 0.0
  %2873 = vmatpush.msra.mxu0 0.0
  %2874 = vmatpush.msra.mxu0 0.0
  %2875 = vmatpush.msra.mxu0 0.0
  %2876 = vmatpush.msra.mxu0 %v2853
  %2877 = vmatmul.f32.gmra.mxu0 %v2851
  %v2878 = vpop.f32.mrf.mxu0
  %v2879 = vadd.f32 0.0, %v2878
  %2880 = vdwg.mxu0
  %2881 = vmatpush.msra.mxu0 0.0
  %2882 = vmatpush.msra.mxu0 0.0
  %2883 = vmatpush.msra.mxu0 0.0
  %2884 = vmatpush.msra.mxu0 0.0
  %2885 = vmatpush.msra.mxu0 0.0
  %2886 = vmatpush.msra.mxu0 0.0
  %2887 = vmatpush.msra.mxu0 0.0
  %2888 = vmatpush.msra.mxu0 0.0
  %2889 = vmatpush.msra.mxu0 0.0
  %2890 = vmatpush.msra.mxu0 0.0
  %2891 = vmatpush.msra.mxu0 0.0
  %2892 = vmatpush.msra.mxu0 0.0
  %2893 = vmatpush.msra.mxu0 0.0
  %2894 = vmatpush.msra.mxu0 0.0
  %2895 = vmatpush.msra.mxu0 0.0
  %2896 = vmatpush.msra.mxu0 %v2855
  %2897 = vmatmul.f32.gmra.mxu0 %v2851
  %v2898 = vpop.f32.mrf.mxu0
  %v2899 = vadd.f32 0.0, %v2898
  %2900 = vdwg.mxu0
  %2901 = vmatpush.msra.mxu0 0.0
  %2902 = vmatpush.msra.mxu0 0.0
  %2903 = vmatpush.msra.mxu0 0.0
  %2904 = vmatpush.msra.mxu0 0.0
  %2905 = vmatpush.msra.mxu0 0.0
  %2906 = vmatpush.msra.mxu0 0.0
  %2907 = vmatpush.msra.mxu0 0.0
  %2908 = vmatpush.msra.mxu0 0.0
  %2909 = vmatpush.msra.mxu0 0.0
  %2910 = vmatpush.msra.mxu0 0.0
  %2911 = vmatpush.msra.mxu0 0.0
  %2912 = vmatpush.msra.mxu0 0.0
  %2913 = vmatpush.msra.mxu0 0.0
  %2914 = vmatpush.msra.mxu0 0.0
  %2915 = vmatpush.msra.mxu0 0.0
  %2916 = vmatpush.msra.mxu0 %v2857
  %2917 = vmatmul.f32.gmra.mxu0 %v2851
  %v2918 = vpop.f32.mrf.mxu0
  %v2919 = vadd.f32 0.0, %v2918
  %2920 = vdwg.mxu0
  %2921 = vmatpush.msra.mxu0 0.0
  %2922 = vmatpush.msra.mxu0 0.0
  %2923 = vmatpush.msra.mxu0 0.0
  %2924 = vmatpush.msra.mxu0 0.0
  %2925 = vmatpush.msra.mxu0 0.0
  %2926 = vmatpush.msra.mxu0 0.0
  %2927 = vmatpush.msra.mxu0 0.0
  %2928 = vmatpush.msra.mxu0 0.0
  %2929 = vmatpush.msra.mxu0 0.0
  %2930 = vmatpush.msra.mxu0 0.0
  %2931 = vmatpush.msra.mxu0 0.0
  %2932 = vmatpush.msra.mxu0 0.0
  %2933 = vmatpush.msra.mxu0 0.0
  %2934 = vmatpush.msra.mxu0 0.0
  %2935 = vmatpush.msra.mxu0 0.0
  %2936 = vmatpush.msra.mxu0 %v2859
  %2937 = vmatmul.f32.gmra.mxu0 %v2851
  %v2938 = vpop.f32.mrf.mxu0
  %v2939 = vadd.f32 0.0, %v2938
  %2940 = vdwg.mxu0
  %vm2941 = vcmask 64512
  %v2943 = vsel %vm2941, %v2841, 0
  %2945 = vmatpush.msra.mxu0 0.0
  %2946 = vmatpush.msra.mxu0 0.0
  %2947 = vmatpush.msra.mxu0 0.0
  %2948 = vmatpush.msra.mxu0 0.0
  %2949 = vmatpush.msra.mxu0 0.0
  %2950 = vmatpush.msra.mxu0 0.0
  %2951 = vmatpush.msra.mxu0 0.0
  %2952 = vmatpush.msra.mxu0 0.0
  %2953 = vmatpush.msra.mxu0 0.0
  %2954 = vmatpush.msra.mxu0 0.0
  %2955 = vmatpush.msra.mxu0 0.0
  %2956 = vmatpush.msra.mxu0 0.0
  %2957 = vmatpush.msra.mxu0 0.0
  %2958 = vmatpush.msra.mxu0 0.0
  %2959 = vmatpush.msra.mxu0 0.0
  %2960 = vmatpush.msra.mxu0 %v2837
  %2961 = vmatmul.f32.gmra.mxu0 %v2943
  %v2962 = vpop.f32.mrf.mxu0
  %v2963 = vadd.f32 %v2879, %v2962
  %2964 = vdwg.mxu0
  %2965 = vmatpush.msra.mxu0 0.0
  %2966 = vmatpush.msra.mxu0 0.0
  %2967 = vmatpush.msra.mxu0 0.0
  %2968 = vmatpush.msra.mxu0 0.0
  %2969 = vmatpush.msra.mxu0 0.0
  %2970 = vmatpush.msra.mxu0 0.0
  %2971 = vmatpush.msra.mxu0 0.0
  %2972 = vmatpush.msra.mxu0 0.0
  %2973 = vmatpush.msra.mxu0 0.0
  %2974 = vmatpush.msra.mxu0 0.0
  %2975 = vmatpush.msra.mxu0 0.0
  %2976 = vmatpush.msra.mxu0 0.0
  %2977 = vmatpush.msra.mxu0 0.0
  %2978 = vmatpush.msra.mxu0 0.0
  %2979 = vmatpush.msra.mxu0 0.0
  %2980 = vmatpush.msra.mxu0 %v2838
  %2981 = vmatmul.f32.gmra.mxu0 %v2943
  %v2982 = vpop.f32.mrf.mxu0
  %v2983 = vadd.f32 %v2899, %v2982
  %2984 = vdwg.mxu0
  %2985 = vmatpush.msra.mxu0 0.0
  %2986 = vmatpush.msra.mxu0 0.0
  %2987 = vmatpush.msra.mxu0 0.0
  %2988 = vmatpush.msra.mxu0 0.0
  %2989 = vmatpush.msra.mxu0 0.0
  %2990 = vmatpush.msra.mxu0 0.0
  %2991 = vmatpush.msra.mxu0 0.0
  %2992 = vmatpush.msra.mxu0 0.0
  %2993 = vmatpush.msra.mxu0 0.0
  %2994 = vmatpush.msra.mxu0 0.0
  %2995 = vmatpush.msra.mxu0 0.0
  %2996 = vmatpush.msra.mxu0 0.0
  %2997 = vmatpush.msra.mxu0 0.0
  %2998 = vmatpush.msra.mxu0 0.0
  %2999 = vmatpush.msra.mxu0 0.0
  %3000 = vmatpush.msra.mxu0 %v2839
  %3001 = vmatmul.f32.gmra.mxu0 %v2943
  %v3002 = vpop.f32.mrf.mxu0
  %v3003 = vadd.f32 %v2919, %v3002
  %3004 = vdwg.mxu0
  %3005 = vmatpush.msra.mxu0 0.0
  %3006 = vmatpush.msra.mxu0 0.0
  %3007 = vmatpush.msra.mxu0 0.0
  %3008 = vmatpush.msra.mxu0 0.0
  %3009 = vmatpush.msra.mxu0 0.0
  %3010 = vmatpush.msra.mxu0 0.0
  %3011 = vmatpush.msra.mxu0 0.0
  %3012 = vmatpush.msra.mxu0 0.0
  %3013 = vmatpush.msra.mxu0 0.0
  %3014 = vmatpush.msra.mxu0 0.0
  %3015 = vmatpush.msra.mxu0 0.0
  %3016 = vmatpush.msra.mxu0 0.0
  %3017 = vmatpush.msra.mxu0 0.0
  %3018 = vmatpush.msra.mxu0 0.0
  %3019 = vmatpush.msra.mxu0 0.0
  %3020 = vmatpush.msra.mxu0 %v2840
  %3021 = vmatmul.f32.gmra.mxu0 %v2943
  %v3022 = vpop.f32.mrf.mxu0
  %v3023 = vadd.f32 %v2939, %v3022
  %3024 = vdwg.mxu0
  %v3025 = vld [vmem:[%s9] sm:$0xff]
  %3027 = vset.pattern.permute.xlu0 0
  %3028 = vperm.xlu0 %3027, %v3025
  %v3029 = vpop.permute.xlu0 %3028
  %v3031 = vadd.f32 %v2963, %v3029
  %v3032 = vadd.f32 %v2983, %v3029
  %v3033 = vadd.f32 %v3003, %v3029
  %v3034 = vadd.f32 %v3023, %v3029
  %3035 = vst [vmem:[%s10] sm:$0xff] %v3031
  %3036 = vst [vmem:[%s10 + $0x8] sm:$0xff] %v3032
  %3037 = vst [vmem:[%s10 + $0x10] sm:$0xff] %v3033
  %3038 = vst [vmem:[%s10 + $0x18] sm:$0xff] %v3034
  // Predicated region
  $region42: #{mscb_forward.1} parent=0 // pred_check
    _
  $region43: #{mscb_forward.1} parent=0 // pred_check_branch
    %3040 = sbr.rel (0) target = $region45
  $region44: #{mscb_forward.1} parent=0 // pred_region
    _
  $region45: #{mscb_forward.1} parent=0 // pred_fallthru
    _
  // Predicated region
  $region46: #{mscb_forward.1} parent=0 // pred_check
    _
  $region47: #{mscb_forward.1} parent=0 // pred_check_branch
    %3042 = sbr.rel (0) target = $region49
  $region48: #{mscb_forward.1} parent=0 // pred_region
    _
  $region49: #{mscb_forward.1} parent=0 // pred_fallthru
    _

</llo_original>
